<compile_context>
chip_gen: v7x
topology: tpu7x:2x2x1
jax: 0.10.0
libtpu: 0.0.40
codegen_flags: <defaults>
</compile_context>

<pallas_src>
import functools

import jax
import jax.numpy as jnp
from jax.experimental import pallas as pl
from jax.experimental.pallas import tpu as pltpu

BN_EPS = 1e-5

_CPARAMS = pltpu.CompilerParams(dimension_semantics=("parallel",),
                                vmem_limit_bytes=48 * 1024 * 1024)


def _round_up(x, n):
    return ((x + n - 1) // n) * n


def _cdiv(a, b):
    return -(-a // b)


# ------------------------------- kernels -----------------------------------

def conv3x3_kernel(xp_ref, w_ref, y_ref, stats_ref, acc_ref, *, hout, wout):
    """3x3 stride-1 conv of one zero-padded image held in VMEM.

    xp_ref: (1, hout+2, wout+2, cin) bf16    w_ref: (3, 3, cin, cp) bf16
    y_ref : (1, hout*wout, cp) bf16          stats_ref: (8, cp) f32 (rows 0,1)
    Nine taps are static VMEM slices; each is one bf16 MXU matmul that
    accumulates into the f32 VMEM scratch acc_ref.
    """
    cin = xp_ref.shape[-1]
    m = hout * wout
    idx = 0
    for ky in range(3):
        for kx in range(3):
            tap = xp_ref[0, pl.ds(ky, hout), pl.ds(kx, wout), :]
            contrib = jnp.dot(tap.reshape(m, cin), w_ref[ky, kx],
                              preferred_element_type=jnp.float32)
            if idx == 0:
                acc_ref[...] = contrib
            else:
                acc_ref[...] += contrib
            idx += 1
    y = acc_ref[...]
    y_ref[0] = y.astype(y_ref.dtype)
    stats_ref[pl.ds(0, 1), :] = jnp.sum(y, axis=0, keepdims=True)
    stats_ref[pl.ds(1, 1), :] = jnp.sum(y * y, axis=0, keepdims=True)


def conv3x3_bnrelu_kernel(y1_ref, sc_ref, sh_ref, w_ref, y_ref, stats_ref,
                          apad_ref, acc_ref, *, hout, wout):
    """Fused [bn1(conv1) -> ReLU -> 3x3 stride-1 conv2] for one image.

    y1_ref: (1, hout, wout, cp) bf16 raw conv1 output; sc/sh: folded bn1.
    The activated tile is written into a zero-initialized f32 halo scratch
    so the nine taps are plain static slices; taps are cast to bf16 right
    before each MXU matmul.
    """
    cp_in = y1_ref.shape[-1]
    m = hout * wout
    a1 = jnp.maximum(
        y1_ref[0].astype(jnp.float32) * sc_ref[...] + sh_ref[...], 0.0)
    apad_ref[...] = jnp.zeros_like(apad_ref)
    apad_ref[pl.ds(1, hout), pl.ds(1, wout), :] = a1
    idx = 0
    for ky in range(3):
        for kx in range(3):
            tap = apad_ref[pl.ds(ky, hout), pl.ds(kx, wout), :]
            tap = tap.reshape(m, cp_in).astype(jnp.bfloat16)
            contrib = jnp.dot(tap, w_ref[ky, kx],
                              preferred_element_type=jnp.float32)
            if idx == 0:
                acc_ref[...] = contrib
            else:
                acc_ref[...] += contrib
            idx += 1
    y = acc_ref[...]
    y_ref[0] = y.astype(y_ref.dtype)
    stats_ref[pl.ds(0, 1), :] = jnp.sum(y, axis=0, keepdims=True)
    stats_ref[pl.ds(1, 1), :] = jnp.sum(y * y, axis=0, keepdims=True)


def matmul_stats_kernel(x_ref, w_ref, y_ref, stats_ref):
    """y = x @ w (bf16 in, f32 acc, bf16 out) + per-tile channel sum/sumsq."""
    y = jnp.dot(x_ref[...], w_ref[...], preferred_element_type=jnp.float32)
    y_ref[...] = y.astype(y_ref.dtype)
    stats_ref[pl.ds(0, 1), :] = jnp.sum(y, axis=0, keepdims=True)
    stats_ref[pl.ds(1, 1), :] = jnp.sum(y * y, axis=0, keepdims=True)


def tail_identity_kernel(y_ref, scale_ref, shift_ref, sc_ref, o_ref):
    """ReLU( ReLU(bn1(conv2)) + x )   (identity shortcut)."""
    a2 = jnp.maximum(
        y_ref[...].astype(jnp.float32) * scale_ref[...] + shift_ref[...], 0.0)
    o_ref[...] = jnp.maximum(a2 + sc_ref[...], 0.0)


def tail_downsample_kernel(y_ref, scale_ref, shift_ref,
                           ysc_ref, scale_sc_ref, shift_sc_ref, o_ref):
    """ReLU( ReLU(bn1(conv2)) + bn_sc(conv1x1_s2(x)) )."""
    a2 = jnp.maximum(
        y_ref[...].astype(jnp.float32) * scale_ref[...] + shift_ref[...], 0.0)
    sc = (ysc_ref[...].astype(jnp.float32) * scale_sc_ref[...]
          + shift_sc_ref[...])
    o_ref[...] = jnp.maximum(a2 + sc, 0.0)


# --------------------------- pallas_call wrappers ---------------------------

def _conv3x3_fused(xp, w, hout, wout):
    """xp: (N, hout+2, wout+2, cin) bf16, w: (3,3,cin,cp) bf16."""
    n, hp, wp, cin = xp.shape
    cp = w.shape[-1]
    m = hout * wout
    kernel = functools.partial(conv3x3_kernel, hout=hout, wout=wout)
    cost = pl.CostEstimate(
        flops=2 * n * m * 9 * cin * cp, transcendentals=0,
        bytes_accessed=2 * (xp.size + w.size + n * m * cp) + 4 * 8 * n * cp)
    return pl.pallas_call(
        kernel,
        out_shape=(jax.ShapeDtypeStruct((n, m, cp), jnp.bfloat16),
                   jax.ShapeDtypeStruct((8 * n, cp), jnp.float32)),
        grid=(n,),
        in_specs=[pl.BlockSpec((1, hp, wp, cin), lambda b: (b, 0, 0, 0)),
                  pl.BlockSpec((3, 3, cin, cp), lambda b: (0, 0, 0, 0))],
        out_specs=(pl.BlockSpec((1, m, cp), lambda b: (b, 0, 0)),
                   pl.BlockSpec((8, cp), lambda b: (b, 0))),
        scratch_shapes=[pltpu.VMEM((m, cp), jnp.float32)],
        compiler_params=_CPARAMS,
        cost_estimate=cost,
    )(xp, w)


def _conv3x3_bnrelu_fused(y1_img, scale, shift, w, hout, wout):
    """y1_img: (N, hout, wout, cp) bf16 raw conv1 output; bn1+ReLU applied
    in-kernel, then the 3x3 stride-1 conv2."""
    n = y1_img.shape[0]
    cp_in = y1_img.shape[-1]
    cp = w.shape[-1]
    m = hout * wout
    kernel = functools.partial(conv3x3_bnrelu_kernel, hout=hout, wout=wout)
    cost = pl.CostEstimate(
        flops=2 * n * m * 9 * cp_in * cp, transcendentals=0,
        bytes_accessed=2 * (y1_img.size + w.size + n * m * cp) + 4 * 8 * n * cp)
    return pl.pallas_call(
        kernel,
        out_shape=(jax.ShapeDtypeStruct((n, m, cp), jnp.bfloat16),
                   jax.ShapeDtypeStruct((8 * n, cp), jnp.float32)),
        grid=(n,),
        in_specs=[pl.BlockSpec((1, hout, wout, cp_in), lambda b: (b, 0, 0, 0)),
                  pl.BlockSpec((1, cp_in), lambda b: (0, 0)),
                  pl.BlockSpec((1, cp_in), lambda b: (0, 0)),
                  pl.BlockSpec((3, 3, cp_in, cp), lambda b: (0, 0, 0, 0))],
        out_specs=(pl.BlockSpec((1, m, cp), lambda b: (b, 0, 0)),
                   pl.BlockSpec((8, cp), lambda b: (b, 0))),
        scratch_shapes=[pltpu.VMEM((hout + 2, wout + 2, cp_in), jnp.float32),
                        pltpu.VMEM((m, cp), jnp.float32)],
        compiler_params=_CPARAMS,
        cost_estimate=cost,
    )(y1_img, scale, shift, w)


def _conv_matmul(taps, w, tm):
    """taps: (Mp, K) bf16, w: (K, Cp) bf16 -> (y (Mp,Cp) bf16, stats)."""
    mp, k = taps.shape
    cp = w.shape[1]
    nt = mp // tm
    cost = pl.CostEstimate(
        flops=2 * mp * k * cp, transcendentals=0,
        bytes_accessed=2 * (taps.size + w.size + mp * cp) + 4 * 8 * nt * cp)
    return pl.pallas_call(
        matmul_stats_kernel,
        out_shape=(jax.ShapeDtypeStruct((mp, cp), jnp.bfloat16),
                   jax.ShapeDtypeStruct((8 * nt, cp), jnp.float32)),
        grid=(nt,),
        in_specs=[pl.BlockSpec((tm, k), lambda i: (i, 0)),
                  pl.BlockSpec((k, cp), lambda i: (0, 0))],
        out_specs=(pl.BlockSpec((tm, cp), lambda i: (i, 0)),
                   pl.BlockSpec((8, cp), lambda i: (i, 0))),
        compiler_params=_CPARAMS,
        cost_estimate=cost,
    )(taps, w)


def _tail_identity(y, scale, shift, shortcut, tm):
    mp, cp = y.shape
    nt = mp // tm
    return pl.pallas_call(
        tail_identity_kernel,
        out_shape=jax.ShapeDtypeStruct((mp, cp), jnp.float32),
        grid=(nt,),
        in_specs=[pl.BlockSpec((tm, cp), lambda i: (i, 0)),
                  pl.BlockSpec((1, cp), lambda i: (0, 0)),
                  pl.BlockSpec((1, cp), lambda i: (0, 0)),
                  pl.BlockSpec((tm, cp), lambda i: (i, 0))],
        out_specs=pl.BlockSpec((tm, cp), lambda i: (i, 0)),
        compiler_params=_CPARAMS,
    )(y, scale, shift, shortcut)


def _tail_downsample(y, scale, shift, ysc, scale_sc, shift_sc, tm):
    mp, cp = y.shape
    nt = mp // tm
    return pl.pallas_call(
        tail_downsample_kernel,
        out_shape=jax.ShapeDtypeStruct((mp, cp), jnp.float32),
        grid=(nt,),
        in_specs=[pl.BlockSpec((tm, cp), lambda i: (i, 0)),
                  pl.BlockSpec((1, cp), lambda i: (0, 0)),
                  pl.BlockSpec((1, cp), lambda i: (0, 0)),
                  pl.BlockSpec((tm, cp), lambda i: (i, 0)),
                  pl.BlockSpec((1, cp), lambda i: (0, 0)),
                  pl.BlockSpec((1, cp), lambda i: (0, 0))],
        out_specs=pl.BlockSpec((tm, cp), lambda i: (i, 0)),
        compiler_params=_CPARAMS,
    )(y, scale, shift, ysc, scale_sc, shift_sc)


# ------------------------------ JAX-side glue -------------------------------

def _im2col(img_padded, stride, hout, wout):
    """(N, H+2, W+2, C) -> (N*hout*wout, 9*C); column order (ky, kx, ci)
    matches w.reshape(9*C, Cout) of an HWIO (3, 3, C, Cout) weight.
    Only used for the small stride-2 downsample conv1."""
    c = img_padded.shape[-1]
    cols = []
    for ky in range(3):
        for kx in range(3):
            t = img_padded[:, ky::stride, kx::stride, :][:, :hout, :wout, :]
            cols.append(t.reshape(-1, c))
    return jnp.concatenate(cols, axis=1)


def _bn_scale_shift(stats, m, gamma, beta, cp):
    """Fold training-mode BN into a per-channel (scale, shift) pair."""
    s = jnp.sum(stats[0::8], axis=0)                 # per-channel sum
    ss = jnp.sum(stats[1::8], axis=0)                # per-channel sum of sq.
    mean = s / m
    var = jnp.maximum(ss / m - mean * mean, 0.0)     # biased variance
    g = jnp.pad(gamma.astype(jnp.float32), (0, cp - gamma.shape[0]))
    b = jnp.pad(beta.astype(jnp.float32), (0, cp - beta.shape[0]))
    scale = g * jax.lax.rsqrt(var + BN_EPS)
    shift = b - mean * scale
    return scale.reshape(1, cp), shift.reshape(1, cp)


def _ew_tile(m, cap):
    """Even tiling: >=2 tiles (keeps both v7x TensorCores busy), tile <= cap
    rows, padded row count a multiple of 2*tile (so the grid stays even)."""
    tm = min(cap, _round_up(_cdiv(m, 2), 8))
    mp = _round_up(m, 2 * tm)
    return tm, mp


def res_block_forward(x_nchw, p, downsample):
    x = jnp.transpose(x_nchw, (0, 2, 3, 1)).astype(jnp.float32)  # NHWC
    n, h, w, cin = x.shape
    cout = p["w1"].shape[-1]
    cp = _round_up(cout, 128)          # lane-dense (padded) channel dim
    stride = 2 if downsample else 1
    hout = (h + 2 - 3) // stride + 1
    wout = (w + 2 - 3) // stride + 1
    m = n * hout * wout

    # Padded-output-channel weights (bf16 MXU operands).  Conv biases are
    # dropped: training-mode BN right after each conv absorbs them exactly.
    w1p = jnp.pad(p["w1"], ((0, 0), (0, 0), (0, 0), (0, cp - cout))
                  ).astype(jnp.bfloat16)                       # (3,3,cin,cp)
    w2p = jnp.pad(p["w2"], ((0, 0), (0, 0), (0, cp - cout), (0, cp - cout))
                  ).astype(jnp.bfloat16)                       # (3,3,cp,cp)

    xp = jnp.pad(x, ((0, 0), (1, 1), (1, 1), (0, 0)))

    # ---- conv1 + bn1 statistics ----
    if downsample:
        assert h % 2 == 0 and w % 2 == 0
        # stride-2 conv1: small glue im2col (~2x of the raw input) + flat
        # tiled matmul.  K=9*cin stays unpadded: padding 36->128 would
        # triple the streamed bytes of a memory-bound kernel.
        tm_mm, mp_mm = _ew_tile(m, cap=256)
        taps1 = jnp.pad(_im2col(xp, 2, hout, wout),
                        ((0, mp_mm - m), (0, 0))).astype(jnp.bfloat16)
        y1_flat, st1 = _conv_matmul(taps1, w1p.reshape(9 * cin, cp), tm_mm)
        y1_img = y1_flat[:m].reshape(n, hout, wout, cp)
    else:
        # stride-1 conv1: fused image-space kernel, no im2col at all.
        y1_flat, st1 = _conv3x3_fused(xp.astype(jnp.bfloat16), w1p, hout, wout)
        y1_img = y1_flat.reshape(n, hout, wout, cp)
    sc1, sh1 = _bn_scale_shift(st1, m, p["g1"], p["be1"], cp)

    # ---- conv2 with conv1's bn1 + ReLU fused into its load path ----
    y2_flat, st2 = _conv3x3_bnrelu_fused(y1_img, sc1, sh1, w2p, hout, wout)
    sc2, sh2 = _bn_scale_shift(st2, m, p["g1"], p["be1"], cp)   # bn1 again!

    # ---- tail: bn1(conv2)+ReLU, add shortcut, final ReLU ----
    tm_ew, mp_ew = _ew_tile(m, cap=1024)
    y2 = jnp.pad(y2_flat.reshape(m, cp), ((0, mp_ew - m), (0, 0)))
    if downsample:
        # 1x1 stride-2 shortcut conv + its own BN (flat tiled matmul).
        xs = x[:, ::2, ::2, :][:, :hout, :wout, :].reshape(m, cin)
        tm_mm, mp_mm = _ew_tile(m, cap=256)
        xs = jnp.pad(xs, ((0, mp_mm - m), (0, 0))).astype(jnp.bfloat16)
        wsp = jnp.pad(p["ws"], ((0, 0), (0, cp - cout))).astype(jnp.bfloat16)
        ysc, stsc = _conv_matmul(xs, wsp, tm_mm)
        scs, shs = _bn_scale_shift(stsc, m, p["gs"], p["bes"], cp)
        ysc = jnp.pad(ysc[:m], ((0, mp_ew - m), (0, 0)))
        out_flat = _tail_downsample(y2, sc2, sh2, ysc, scs, shs, tm_ew)
    else:
        # identity shortcut (cin == cout), zero-padded to lane-dense cp, f32.
        xs = jnp.pad(x.reshape(m, cin), ((0, mp_ew - m), (0, cp - cin)))
        out_flat = _tail_identity(y2, sc2, sh2, xs, tm_ew)

    out = out_flat[:m, :cout].reshape(n, hout, wout, cout)
    return jnp.transpose(out, (0, 3, 1, 2))                     # back to NCHW


# ----------------------- deterministic parameter init -----------------------

def init_params(key, cin, cout, downsample):
    ks = jax.random.split(key, 10)
    p = {
        "w1": 0.1 * jax.random.normal(ks[0], (3, 3, cin, cout), jnp.float32),
        "b1": 0.1 * jax.random.normal(ks[1], (cout,), jnp.float32),
        "w2": 0.1 * jax.random.normal(ks[2], (3, 3, cout, cout), jnp.float32),
        "b2": 0.1 * jax.random.normal(ks[3], (cout,), jnp.float32),
        "g1": 1.0 + 0.1 * jax.random.normal(ks[4], (cout,), jnp.float32),
        "be1": 0.1 * jax.random.normal(ks[5], (cout,), jnp.float32),
        # bn2 params exist in __init__ but are unused by forward (bn1 twice).
    }
    if downsample:
        p["ws"] = 0.1 * jax.random.normal(ks[6], (cin, cout), jnp.float32)
        p["bs"] = 0.1 * jax.random.normal(ks[7], (cout,), jnp.float32)
        p["gs"] = 1.0 + 0.1 * jax.random.normal(ks[8], (cout,), jnp.float32)
        p["bes"] = 0.1 * jax.random.normal(ks[9], (cout,), jnp.float32)
    return p


# ------------------------- pure-JAX reference check --------------------------

def ref_forward(x_nchw, p, downsample):
    stride = 2 if downsample else 1

    def conv(x, w, b, s, pad):
        y = jax.lax.conv_general_dilated(
            x, w, window_strides=(s, s), padding=[(pad, pad), (pad, pad)],
            dimension_numbers=("NCHW", "HWIO", "NCHW"),
            precision=jax.lax.Precision.HIGHEST)
        return y + b[None, :, None, None]

    def bn(y, g, be):
        mean = jnp.mean(y, axis=(0, 2, 3), keepdims=True)
        var = jnp.mean(jnp.square(y - mean), axis=(0, 2, 3), keepdims=True)
        return ((y - mean) * jax.lax.rsqrt(var + BN_EPS)
                * g[None, :, None, None] + be[None, :, None, None])

    a1 = jax.nn.relu(bn(conv(x_nchw, p["w1"], p["b1"], stride, 1),
                        p["g1"], p["be1"]))
    a2 = jax.nn.relu(bn(conv(a1, p["w2"], p["b2"], 1, 1), p["g1"], p["be1"]))
    if downsample:
        s = bn(conv(x_nchw, p["ws"][None, None], p["bs"], 2, 0),
               p["gs"], p["bes"])
    else:
        s = x_nchw
    return jax.nn.relu(a2 + s)


# ---------------------------------- main ------------------------------------

if __name__ == "__main__":
    key = jax.random.PRNGKey(0)
    kpa, kpb, kxa, kxb = jax.random.split(key, 4)

    # Tolerances: bf16 MXU operands AND bf16-stored intermediates (y1/y2/ysc).
    RTOL, ATOL = 2e-2, 4e-2

    # Case 1: downsample=False, in = out = 8 channels, 16x16 spatial.
    p_a = init_params(kpa, 8, 8, downsample=False)
    x_a = jax.random.normal(kxa, (2, 8, 16, 16), jnp.float32)
    y_a = jax.block_until_ready(res_block_forward(x_a, p_a, downsample=False))
    assert y_a.shape == (2, 8, 16, 16)
    assert jnp.allclose(y_a, ref_forward(x_a, p_a, False), rtol=RTOL, atol=ATOL)

    # Case 2: downsample=True, 4 -> 8 channels, 16x16 -> 8x8 spatial.
    p_b = init_params(kpb, 4, 8, downsample=True)
    x_b = jax.random.normal(kxb, (2, 4, 16, 16), jnp.float32)
    y_b = jax.block_until_ready(res_block_forward(x_b, p_b, downsample=True))
    assert y_b.shape == (2, 8, 8, 8)
    assert jnp.allclose(y_b, ref_forward(x_b, p_b, True), rtol=RTOL, atol=ATOL)

    print("KERNEL_OK")
</pallas_src>

<mosaic_0001>
module attributes {stable_mosaic.version = 11 : i64} {
  func.func @conv3x3_kernel(%arg0: i32, %arg1: memref<1x18x18x8xbf16, #tpu.memory_space<vmem>>, %arg2: memref<3x3x8x128xbf16, #tpu.memory_space<vmem>>, %arg3: memref<1x256x128xbf16, #tpu.memory_space<vmem>>, %arg4: memref<8x128xf32, #tpu.memory_space<vmem>>, %arg5: memref<256x128xf32, #tpu.memory_space<vmem>>) attributes {dimension_semantics = [#tpu.dimension_semantics<parallel>], iteration_bounds = array<i64: 2>, scalar_prefetch = 0 : i64, scratch_operands = 1 : i64, tpu.core_type = #tpu.core_type<tc>, window_params = [{transform_indices = @transform_0, window_bounds = array<i64: 1, 18, 18, 8>}, {pipeline_mode = #tpu.pipeline_mode<synchronous>, transform_indices = @transform_1, window_bounds = array<i64: 3, 3, 8, 128>}, {transform_indices = @transform_2, window_bounds = array<i64: 1, 256, 128>}, {transform_indices = @transform_3, window_bounds = array<i64: 8, 128>}]} {
    %c0 = arith.constant 0 : index
    %c0_0 = arith.constant 0 : index
    %c0_1 = arith.constant 0 : index
    %c0_2 = arith.constant 0 : index
    %0 = vector.load %arg1[%c0, %c0_0, %c0_1, %c0_2] : memref<1x18x18x8xbf16, #tpu.memory_space<vmem>>, vector<1x16x16x8xbf16>
    %1 = vector.shape_cast %0 : vector<1x16x16x8xbf16> to vector<16x16x8xbf16>
    %2 = vector.shape_cast %1 : vector<16x16x8xbf16> to vector<256x8xbf16>
    %c0_3 = arith.constant 0 : index
    %c0_4 = arith.constant 0 : index
    %c0_5 = arith.constant 0 : index
    %c0_6 = arith.constant 0 : index
    %3 = vector.load %arg2[%c0_3, %c0_4, %c0_5, %c0_6] : memref<3x3x8x128xbf16, #tpu.memory_space<vmem>>, vector<1x1x8x128xbf16>
    %4 = vector.shape_cast %3 : vector<1x1x8x128xbf16> to vector<8x128xbf16>
    %cst = arith.constant dense<0.000000e+00> : vector<256x128xf32>
    %5 = tpu.matmul %2, %4, %cst {dimension_numbers = #tpu.dot_dimension_numbers<[1], [0], [0], [1], [0, 0, 1, 1], [], []>} : vector<256x8xbf16>, vector<8x128xbf16>, vector<256x128xf32> -> vector<256x128xf32>
    %c0_7 = arith.constant 0 : index
    %c0_8 = arith.constant 0 : index
    %6 = vector.load %arg5[%c0_7, %c0_8] : memref<256x128xf32, #tpu.memory_space<vmem>>, vector<256x128xf32>
    tpu.vector_store %arg5[%c0_7, %c0_8], %5 {strides = array<i32>} : memref<256x128xf32, #tpu.memory_space<vmem>>, vector<256x128xf32>,
    %c0_9 = arith.constant 0 : index
    %c0_10 = arith.constant 0 : index
    %c1 = arith.constant 1 : index
    %c0_11 = arith.constant 0 : index
    %7 = vector.load %arg1[%c0_9, %c0_10, %c1, %c0_11] : memref<1x18x18x8xbf16, #tpu.memory_space<vmem>>, vector<1x16x16x8xbf16>
    %8 = vector.shape_cast %7 : vector<1x16x16x8xbf16> to vector<16x16x8xbf16>
    %9 = vector.shape_cast %8 : vector<16x16x8xbf16> to vector<256x8xbf16>
    %c0_12 = arith.constant 0 : index
    %c1_13 = arith.constant 1 : index
    %c0_14 = arith.constant 0 : index
    %c0_15 = arith.constant 0 : index
    %10 = vector.load %arg2[%c0_12, %c1_13, %c0_14, %c0_15] : memref<3x3x8x128xbf16, #tpu.memory_space<vmem>>, vector<1x1x8x128xbf16>
    %11 = vector.shape_cast %10 : vector<1x1x8x128xbf16> to vector<8x128xbf16>
    %cst_16 = arith.constant dense<0.000000e+00> : vector<256x128xf32>
    %12 = tpu.matmul %9, %11, %cst_16 {dimension_numbers = #tpu.dot_dimension_numbers<[1], [0], [0], [1], [0, 0, 1, 1], [], []>} : vector<256x8xbf16>, vector<8x128xbf16>, vector<256x128xf32> -> vector<256x128xf32>
    %c0_17 = arith.constant 0 : index
    %c0_18 = arith.constant 0 : index
    %13 = vector.load %arg5[%c0_17, %c0_18] : memref<256x128xf32, #tpu.memory_space<vmem>>, vector<256x128xf32>
    %14 = arith.addf %13, %12 : vector<256x128xf32>
    %c0_19 = arith.constant 0 : index
    %c0_20 = arith.constant 0 : index
    %15 = vector.load %arg5[%c0_19, %c0_20] : memref<256x128xf32, #tpu.memory_space<vmem>>, vector<256x128xf32>
    tpu.vector_store %arg5[%c0_19, %c0_20], %14 {strides = array<i32>} : memref<256x128xf32, #tpu.memory_space<vmem>>, vector<256x128xf32>,
    %c0_21 = arith.constant 0 : index
    %c0_22 = arith.constant 0 : index
    %c2 = arith.constant 2 : index
    %c0_23 = arith.constant 0 : index
    %16 = vector.load %arg1[%c0_21, %c0_22, %c2, %c0_23] : memref<1x18x18x8xbf16, #tpu.memory_space<vmem>>, vector<1x16x16x8xbf16>
    %17 = vector.shape_cast %16 : vector<1x16x16x8xbf16> to vector<16x16x8xbf16>
    %18 = vector.shape_cast %17 : vector<16x16x8xbf16> to vector<256x8xbf16>
    %c0_24 = arith.constant 0 : index
    %c2_25 = arith.constant 2 : index
    %c0_26 = arith.constant 0 : index
    %c0_27 = arith.constant 0 : index
    %19 = vector.load %arg2[%c0_24, %c2_25, %c0_26, %c0_27] : memref<3x3x8x128xbf16, #tpu.memory_space<vmem>>, vector<1x1x8x128xbf16>
    %20 = vector.shape_cast %19 : vector<1x1x8x128xbf16> to vector<8x128xbf16>
    %cst_28 = arith.constant dense<0.000000e+00> : vector<256x128xf32>
    %21 = tpu.matmul %18, %20, %cst_28 {dimension_numbers = #tpu.dot_dimension_numbers<[1], [0], [0], [1], [0, 0, 1, 1], [], []>} : vector<256x8xbf16>, vector<8x128xbf16>, vector<256x128xf32> -> vector<256x128xf32>
    %c0_29 = arith.constant 0 : index
    %c0_30 = arith.constant 0 : index
    %22 = vector.load %arg5[%c0_29, %c0_30] : memref<256x128xf32, #tpu.memory_space<vmem>>, vector<256x128xf32>
    %23 = arith.addf %22, %21 : vector<256x128xf32>
    %c0_31 = arith.constant 0 : index
    %c0_32 = arith.constant 0 : index
    %24 = vector.load %arg5[%c0_31, %c0_32] : memref<256x128xf32, #tpu.memory_space<vmem>>, vector<256x128xf32>
    tpu.vector_store %arg5[%c0_31, %c0_32], %23 {strides = array<i32>} : memref<256x128xf32, #tpu.memory_space<vmem>>, vector<256x128xf32>,
    %c0_33 = arith.constant 0 : index
    %c1_34 = arith.constant 1 : index
    %c0_35 = arith.constant 0 : index
    %c0_36 = arith.constant 0 : index
    %25 = vector.load %arg1[%c0_33, %c1_34, %c0_35, %c0_36] : memref<1x18x18x8xbf16, #tpu.memory_space<vmem>>, vector<1x16x16x8xbf16>
    %26 = vector.shape_cast %25 : vector<1x16x16x8xbf16> to vector<16x16x8xbf16>
    %27 = vector.shape_cast %26 : vector<16x16x8xbf16> to vector<256x8xbf16>
    %c1_37 = arith.constant 1 : index
    %c0_38 = arith.constant 0 : index
    %c0_39 = arith.constant 0 : index
    %c0_40 = arith.constant 0 : index
    %28 = vector.load %arg2[%c1_37, %c0_38, %c0_39, %c0_40] : memref<3x3x8x128xbf16, #tpu.memory_space<vmem>>, vector<1x1x8x128xbf16>
    %29 = vector.shape_cast %28 : vector<1x1x8x128xbf16> to vector<8x128xbf16>
    %cst_41 = arith.constant dense<0.000000e+00> : vector<256x128xf32>
    %30 = tpu.matmul %27, %29, %cst_41 {dimension_numbers = #tpu.dot_dimension_numbers<[1], [0], [0], [1], [0, 0, 1, 1], [], []>} : vector<256x8xbf16>, vector<8x128xbf16>, vector<256x128xf32> -> vector<256x128xf32>
    %c0_42 = arith.constant 0 : index
    %c0_43 = arith.constant 0 : index
    %31 = vector.load %arg5[%c0_42, %c0_43] : memref<256x128xf32, #tpu.memory_space<vmem>>, vector<256x128xf32>
    %32 = arith.addf %31, %30 : vector<256x128xf32>
    %c0_44 = arith.constant 0 : index
    %c0_45 = arith.constant 0 : index
    %33 = vector.load %arg5[%c0_44, %c0_45] : memref<256x128xf32, #tpu.memory_space<vmem>>, vector<256x128xf32>
    tpu.vector_store %arg5[%c0_44, %c0_45], %32 {strides = array<i32>} : memref<256x128xf32, #tpu.memory_space<vmem>>, vector<256x128xf32>,
    %c0_46 = arith.constant 0 : index
    %c1_47 = arith.constant 1 : index
    %c1_48 = arith.constant 1 : index
    %c0_49 = arith.constant 0 : index
    %34 = vector.load %arg1[%c0_46, %c1_47, %c1_48, %c0_49] : memref<1x18x18x8xbf16, #tpu.memory_space<vmem>>, vector<1x16x16x8xbf16>
    %35 = vector.shape_cast %34 : vector<1x16x16x8xbf16> to vector<16x16x8xbf16>
    %36 = vector.shape_cast %35 : vector<16x16x8xbf16> to vector<256x8xbf16>
    %c1_50 = arith.constant 1 : index
    %c1_51 = arith.constant 1 : index
    %c0_52 = arith.constant 0 : index
    %c0_53 = arith.constant 0 : index
    %37 = vector.load %arg2[%c1_50, %c1_51, %c0_52, %c0_53] : memref<3x3x8x128xbf16, #tpu.memory_space<vmem>>, vector<1x1x8x128xbf16>
    %38 = vector.shape_cast %37 : vector<1x1x8x128xbf16> to vector<8x128xbf16>
    %cst_54 = arith.constant dense<0.000000e+00> : vector<256x128xf32>
    %39 = tpu.matmul %36, %38, %cst_54 {dimension_numbers = #tpu.dot_dimension_numbers<[1], [0], [0], [1], [0, 0, 1, 1], [], []>} : vector<256x8xbf16>, vector<8x128xbf16>, vector<256x128xf32> -> vector<256x128xf32>
    %c0_55 = arith.constant 0 : index
    %c0_56 = arith.constant 0 : index
    %40 = vector.load %arg5[%c0_55, %c0_56] : memref<256x128xf32, #tpu.memory_space<vmem>>, vector<256x128xf32>
    %41 = arith.addf %40, %39 : vector<256x128xf32>
    %c0_57 = arith.constant 0 : index
    %c0_58 = arith.constant 0 : index
    %42 = vector.load %arg5[%c0_57, %c0_58] : memref<256x128xf32, #tpu.memory_space<vmem>>, vector<256x128xf32>
    tpu.vector_store %arg5[%c0_57, %c0_58], %41 {strides = array<i32>} : memref<256x128xf32, #tpu.memory_space<vmem>>, vector<256x128xf32>,
    %c0_59 = arith.constant 0 : index
    %c1_60 = arith.constant 1 : index
    %c2_61 = arith.constant 2 : index
    %c0_62 = arith.constant 0 : index
    %43 = vector.load %arg1[%c0_59, %c1_60, %c2_61, %c0_62] : memref<1x18x18x8xbf16, #tpu.memory_space<vmem>>, vector<1x16x16x8xbf16>
    %44 = vector.shape_cast %43 : vector<1x16x16x8xbf16> to vector<16x16x8xbf16>
    %45 = vector.shape_cast %44 : vector<16x16x8xbf16> to vector<256x8xbf16>
    %c1_63 = arith.constant 1 : index
    %c2_64 = arith.constant 2 : index
    %c0_65 = arith.constant 0 : index
    %c0_66 = arith.constant 0 : index
    %46 = vector.load %arg2[%c1_63, %c2_64, %c0_65, %c0_66] : memref<3x3x8x128xbf16, #tpu.memory_space<vmem>>, vector<1x1x8x128xbf16>
    %47 = vector.shape_cast %46 : vector<1x1x8x128xbf16> to vector<8x128xbf16>
    %cst_67 = arith.constant dense<0.000000e+00> : vector<256x128xf32>
    %48 = tpu.matmul %45, %47, %cst_67 {dimension_numbers = #tpu.dot_dimension_numbers<[1], [0], [0], [1], [0, 0, 1, 1], [], []>} : vector<256x8xbf16>, vector<8x128xbf16>, vector<256x128xf32> -> vector<256x128xf32>
    %c0_68 = arith.constant 0 : index
    %c0_69 = arith.constant 0 : index
    %49 = vector.load %arg5[%c0_68, %c0_69] : memref<256x128xf32, #tpu.memory_space<vmem>>, vector<256x128xf32>
    %50 = arith.addf %49, %48 : vector<256x128xf32>
    %c0_70 = arith.constant 0 : index
    %c0_71 = arith.constant 0 : index
    %51 = vector.load %arg5[%c0_70, %c0_71] : memref<256x128xf32, #tpu.memory_space<vmem>>, vector<256x128xf32>
    tpu.vector_store %arg5[%c0_70, %c0_71], %50 {strides = array<i32>} : memref<256x128xf32, #tpu.memory_space<vmem>>, vector<256x128xf32>,
    %c0_72 = arith.constant 0 : index
    %c2_73 = arith.constant 2 : index
    %c0_74 = arith.constant 0 : index
    %c0_75 = arith.constant 0 : index
    %52 = vector.load %arg1[%c0_72, %c2_73, %c0_74, %c0_75] : memref<1x18x18x8xbf16, #tpu.memory_space<vmem>>, vector<1x16x16x8xbf16>
    %53 = vector.shape_cast %52 : vector<1x16x16x8xbf16> to vector<16x16x8xbf16>
    %54 = vector.shape_cast %53 : vector<16x16x8xbf16> to vector<256x8xbf16>
    %c2_76 = arith.constant 2 : index
    %c0_77 = arith.constant 0 : index
    %c0_78 = arith.constant 0 : index
    %c0_79 = arith.constant 0 : index
    %55 = vector.load %arg2[%c2_76, %c0_77, %c0_78, %c0_79] : memref<3x3x8x128xbf16, #tpu.memory_space<vmem>>, vector<1x1x8x128xbf16>
    %56 = vector.shape_cast %55 : vector<1x1x8x128xbf16> to vector<8x128xbf16>
    %cst_80 = arith.constant dense<0.000000e+00> : vector<256x128xf32>
    %57 = tpu.matmul %54, %56, %cst_80 {dimension_numbers = #tpu.dot_dimension_numbers<[1], [0], [0], [1], [0, 0, 1, 1], [], []>} : vector<256x8xbf16>, vector<8x128xbf16>, vector<256x128xf32> -> vector<256x128xf32>
    %c0_81 = arith.constant 0 : index
    %c0_82 = arith.constant 0 : index
    %58 = vector.load %arg5[%c0_81, %c0_82] : memref<256x128xf32, #tpu.memory_space<vmem>>, vector<256x128xf32>
    %59 = arith.addf %58, %57 : vector<256x128xf32>
    %c0_83 = arith.constant 0 : index
    %c0_84 = arith.constant 0 : index
    %60 = vector.load %arg5[%c0_83, %c0_84] : memref<256x128xf32, #tpu.memory_space<vmem>>, vector<256x128xf32>
    tpu.vector_store %arg5[%c0_83, %c0_84], %59 {strides = array<i32>} : memref<256x128xf32, #tpu.memory_space<vmem>>, vector<256x128xf32>,
    %c0_85 = arith.constant 0 : index
    %c2_86 = arith.constant 2 : index
    %c1_87 = arith.constant 1 : index
    %c0_88 = arith.constant 0 : index
    %61 = vector.load %arg1[%c0_85, %c2_86, %c1_87, %c0_88] : memref<1x18x18x8xbf16, #tpu.memory_space<vmem>>, vector<1x16x16x8xbf16>
    %62 = vector.shape_cast %61 : vector<1x16x16x8xbf16> to vector<16x16x8xbf16>
    %63 = vector.shape_cast %62 : vector<16x16x8xbf16> to vector<256x8xbf16>
    %c2_89 = arith.constant 2 : index
    %c1_90 = arith.constant 1 : index
    %c0_91 = arith.constant 0 : index
    %c0_92 = arith.constant 0 : index
    %64 = vector.load %arg2[%c2_89, %c1_90, %c0_91, %c0_92] : memref<3x3x8x128xbf16, #tpu.memory_space<vmem>>, vector<1x1x8x128xbf16>
    %65 = vector.shape_cast %64 : vector<1x1x8x128xbf16> to vector<8x128xbf16>
    %cst_93 = arith.constant dense<0.000000e+00> : vector<256x128xf32>
    %66 = tpu.matmul %63, %65, %cst_93 {dimension_numbers = #tpu.dot_dimension_numbers<[1], [0], [0], [1], [0, 0, 1, 1], [], []>} : vector<256x8xbf16>, vector<8x128xbf16>, vector<256x128xf32> -> vector<256x128xf32>
    %c0_94 = arith.constant 0 : index
    %c0_95 = arith.constant 0 : index
    %67 = vector.load %arg5[%c0_94, %c0_95] : memref<256x128xf32, #tpu.memory_space<vmem>>, vector<256x128xf32>
    %68 = arith.addf %67, %66 : vector<256x128xf32>
    %c0_96 = arith.constant 0 : index
    %c0_97 = arith.constant 0 : index
    %69 = vector.load %arg5[%c0_96, %c0_97] : memref<256x128xf32, #tpu.memory_space<vmem>>, vector<256x128xf32>
    tpu.vector_store %arg5[%c0_96, %c0_97], %68 {strides = array<i32>} : memref<256x128xf32, #tpu.memory_space<vmem>>, vector<256x128xf32>,
    %c0_98 = arith.constant 0 : index
    %c2_99 = arith.constant 2 : index
    %c2_100 = arith.constant 2 : index
    %c0_101 = arith.constant 0 : index
    %70 = vector.load %arg1[%c0_98, %c2_99, %c2_100, %c0_101] : memref<1x18x18x8xbf16, #tpu.memory_space<vmem>>, vector<1x16x16x8xbf16>
    %71 = vector.shape_cast %70 : vector<1x16x16x8xbf16> to vector<16x16x8xbf16>
    %72 = vector.shape_cast %71 : vector<16x16x8xbf16> to vector<256x8xbf16>
    %c2_102 = arith.constant 2 : index
    %c2_103 = arith.constant 2 : index
    %c0_104 = arith.constant 0 : index
    %c0_105 = arith.constant 0 : index
    %73 = vector.load %arg2[%c2_102, %c2_103, %c0_104, %c0_105] : memref<3x3x8x128xbf16, #tpu.memory_space<vmem>>, vector<1x1x8x128xbf16>
    %74 = vector.shape_cast %73 : vector<1x1x8x128xbf16> to vector<8x128xbf16>
    %cst_106 = arith.constant dense<0.000000e+00> : vector<256x128xf32>
    %75 = tpu.matmul %72, %74, %cst_106 {dimension_numbers = #tpu.dot_dimension_numbers<[1], [0], [0], [1], [0, 0, 1, 1], [], []>} : vector<256x8xbf16>, vector<8x128xbf16>, vector<256x128xf32> -> vector<256x128xf32>
    %c0_107 = arith.constant 0 : index
    %c0_108 = arith.constant 0 : index
    %76 = vector.load %arg5[%c0_107, %c0_108] : memref<256x128xf32, #tpu.memory_space<vmem>>, vector<256x128xf32>
    %77 = arith.addf %76, %75 : vector<256x128xf32>
    %c0_109 = arith.constant 0 : index
    %c0_110 = arith.constant 0 : index
    %78 = vector.load %arg5[%c0_109, %c0_110] : memref<256x128xf32, #tpu.memory_space<vmem>>, vector<256x128xf32>
    tpu.vector_store %arg5[%c0_109, %c0_110], %77 {strides = array<i32>} : memref<256x128xf32, #tpu.memory_space<vmem>>, vector<256x128xf32>,
    %c0_111 = arith.constant 0 : index
    %c0_112 = arith.constant 0 : index
    %79 = vector.load %arg5[%c0_111, %c0_112] : memref<256x128xf32, #tpu.memory_space<vmem>>, vector<256x128xf32>
    %80 = arith.truncf %79 : vector<256x128xf32> to vector<256x128xbf16>
    %c0_113 = arith.constant 0 : index
    %c0_114 = arith.constant 0 : index
    %c0_115 = arith.constant 0 : index
    %81 = vector.load %arg3[%c0_113, %c0_114, %c0_115] : memref<1x256x128xbf16, #tpu.memory_space<vmem>>, vector<1x256x128xbf16>
    %82 = vector.shape_cast %81 : vector<1x256x128xbf16> to vector<256x128xbf16>
    %83 = vector.shape_cast %80 : vector<256x128xbf16> to vector<1x256x128xbf16>
    tpu.vector_store %arg3[%c0_113, %c0_114, %c0_115], %83 {strides = array<i32>} : memref<1x256x128xbf16, #tpu.memory_space<vmem>>, vector<1x256x128xbf16>,
    %cst_116 = arith.constant dense<0.000000e+00> : vector<128xf32>
    %84 = vector.multi_reduction <add>, %79, %cst_116 [0] : vector<256x128xf32> to vector<128xf32>
    %85 = vector.shape_cast %84 : vector<128xf32> to vector<1x128xf32>
    %c0_117 = arith.constant 0 : index
    %c0_118 = arith.constant 0 : index
    %86 = vector.load %arg4[%c0_117, %c0_118] : memref<8x128xf32, #tpu.memory_space<vmem>>, vector<1x128xf32>
    tpu.vector_store %arg4[%c0_117, %c0_118], %85 {strides = array<i32>} : memref<8x128xf32, #tpu.memory_space<vmem>>, vector<1x128xf32>,
    %87 = arith.mulf %79, %79 : vector<256x128xf32>
    %cst_119 = arith.constant dense<0.000000e+00> : vector<128xf32>
    %88 = vector.multi_reduction <add>, %87, %cst_119 [0] : vector<256x128xf32> to vector<128xf32>
    %89 = vector.shape_cast %88 : vector<128xf32> to vector<1x128xf32>
    %c1_120 = arith.constant 1 : index
    %c0_121 = arith.constant 0 : index
    %90 = vector.load %arg4[%c1_120, %c0_121] : memref<8x128xf32, #tpu.memory_space<vmem>>, vector<1x128xf32>
    tpu.vector_store %arg4[%c1_120, %c0_121], %89 {strides = array<i32>} : memref<8x128xf32, #tpu.memory_space<vmem>>, vector<1x128xf32>,
    return
  }
  func.func @transform_0(%arg0: i32) -> (i32, i32, i32, i32) {
    %c0_i32 = arith.constant 0 : i32
    %c0_i32_0 = arith.constant 0 : i32
    %c0_i32_1 = arith.constant 0 : i32
    %c0_i32_2 = arith.constant 0 : i32
    return %arg0, %c0_i32, %c0_i32_0, %c0_i32_1 : i32, i32, i32, i32
  }
  func.func @transform_1(%arg0: i32) -> (i32, i32, i32, i32) {
    %c0_i32 = arith.constant 0 : i32
    %c0_i32_0 = arith.constant 0 : i32
    %c0_i32_1 = arith.constant 0 : i32
    %c0_i32_2 = arith.constant 0 : i32
    %c0_i32_3 = arith.constant 0 : i32
    return %c0_i32, %c0_i32_0, %c0_i32_1, %c0_i32_2 : i32, i32, i32, i32
  }
  func.func @transform_2(%arg0: i32) -> (i32, i32, i32) {
    %c0_i32 = arith.constant 0 : i32
    %c0_i32_0 = arith.constant 0 : i32
    %c0_i32_1 = arith.constant 0 : i32
    return %arg0, %c0_i32, %c0_i32_0 : i32, i32, i32
  }
  func.func @transform_3(%arg0: i32) -> (i32, i32) {
    %c0_i32 = arith.constant 0 : i32
    %c0_i32_0 = arith.constant 0 : i32
    return %arg0, %c0_i32 : i32, i32
  }
}

</mosaic_0001>

<llo_original>
// kernel: tpu_custom_call.1
$region0: #{tpu_custom_call.1}
  #allocation0 [shape = 'u32[]', space=smem, size = 0x4, offset = 0x4, fixed_abs, tag = 'smem constant byte address 0x4 - core index']
  #allocation1 [shape = 'u32[144,128]{1,0:T(1,128)}', space=vmem, size = 0x12000, scoped, tag = 'internal scratch']
  #allocation2 [shape = 'f32[256,128]{1,0:T(8,128)}', space=vmem, size = 0x20000, scoped, tag = 'scratch operand']
  %s0 = inlined_call_operand.vmem [shape: bf16[2,18,18,8], index: 0, kind: input, shape index: {}]
  %s1 = inlined_call_operand.vmem [shape: bf16[3,3,8,128], index: 1, kind: input, shape index: {}]
  %s2 = inlined_call_operand.hbm [shape: bf16[2,256,128], index: 2, kind: output, shape index: {0}]
  %s3 = inlined_call_operand.hbm [shape: f32[16,128], index: 3, kind: output, shape index: {1}]
  %4 = xla_tuple %s2, %s3
  %s5 = sld [smem:[#allocation0]]
  $region49: #{tpu_custom_call.1} parent=0
    _
  %s7 = ssub.s32 1, %s5
  %s8 = scalar_select 0, %s7, %s5
  $region1: #{tpu_custom_call.1} parent=0
    #allocation3 [shape = 'u8[131072]{0}', space=vmem, size = 0x20000, scoped, tag = 'output window, operand 0']
    #allocation4 [shape = 's32[2]{0}', space=sflag, size = 0x8, scoped, tag = 'scoped memory for tpu_custom_call.1']
    #allocation5 [shape = 'u8[8192]{0}', space=vmem, size = 0x2000, scoped, tag = 'output window, operand 1']
    #allocation6 [shape = 's32[2]{0}', space=sflag, size = 0x8, scoped, tag = 'scoped memory for tpu_custom_call.1']
    %9 = vsyncpa [#allocation4], 0
    %s10 = scalar_lea.sflag [#allocation4], 1
    %11 = vsyncpa %s10, 0
    %12 = vsyncpa [#allocation6], 0
    %s13 = scalar_lea.sflag [#allocation6], 1
    %14 = vsyncpa %s13, 0
    loop: start=0, step=1, limit=4
    $region2: #{tpu_custom_call.1} parent=1 // loop_pre_header
      _
    $region3: #{tpu_custom_call.1} parent=1 // loop_header
      %s16 = sphi 0, %s20
      %p17 = scmp.ge.s32.totalorder %s16, 4
      %s26 = sphi 0, %s28
      %s29 = sphi 0, %s26
      %s30 = sphi 0, %s29
      %s46 = sphi 0, %s30
      %s50 = sphi 0, %s50
      %s52 = sphi 0, %s50
      %s53 = sphi 0, %s52
      %s67 = sphi 0, %s53
      %s73 = sphi 0, %s75
      %s76 = sphi 0, %s73
      %s77 = sphi 0, %s76
      %s93 = sphi 0, %s77
      %s99 = sphi 0, %s101
      %s102 = sphi 0, %s99
      %s103 = sphi 0, %s102
      %s119 = sphi 0, %s103
    $region4: #{tpu_custom_call.1} parent=1 // loop_header_branch
      %19 = sbr.rel (%p17) target = $region8
    $region5: #{tpu_custom_call.1} parent=1 // loop_body
      %s21 = ssub.s32 %s16, 1
      %s22 = ssub.s32 %s16, 2
      %s23 = sadd.s32 %s16, 1
      %s24 = ssub.s32 %s16, %s23
      %p25 = scmp.eq.s32.totalorder %s24, 0
      %s27 = sadd.s32 %s26, 1
      %s28 = scalar_select %p25, %s26, %s27
      %p31 = pneg %p25
      %p32 = scmp.eq.s32.totalorder %s16, 1
      %p33 = por %p31, %p32
      %p34 = scmp.ne.s32.totalorder %s26, %s29
      %p35 = scmp.eq.s32.totalorder %s16, 0
      %p36 = por %p34, %p35
      %p37 = scmp.ne.s32.totalorder %s26, %s29
      %p38 = scmp.eq.s32.totalorder %s21, 1
      %p39 = por %p37, %p38
      %p40 = scmp.ne.s32.totalorder %s29, %s30
      %p41 = scmp.eq.s32.totalorder %s21, 0
      %p42 = por %p40, %p41
      %p43 = scmp.ne.s32.totalorder %s29, %s30
      %p44 = scmp.eq.s32.totalorder %s22, 1
      %p45 = por %p43, %p44
      %p47 = scmp.ne.s32.totalorder %s30, %s46
      %p48 = scmp.eq.s32.totalorder %s22, 0
      %p49 = por %p47, %p48
      %s51 = sadd.s32 %s50, 1
      %p54 = scmp.eq.s32.totalorder %s16, 1
      %p55 = scmp.ne.s32.totalorder %s50, %s52
      %p56 = scmp.eq.s32.totalorder %s16, 0
      %p57 = por %p55, %p56
      %p58 = scmp.ne.s32.totalorder %s50, %s52
      %p59 = scmp.eq.s32.totalorder %s21, 1
      %p60 = por %p58, %p59
      %p61 = scmp.ne.s32.totalorder %s52, %s53
      %p62 = scmp.eq.s32.totalorder %s21, 0
      %p63 = por %p61, %p62
      %p64 = scmp.ne.s32.totalorder %s52, %s53
      %p65 = scmp.eq.s32.totalorder %s22, 1
      %p66 = por %p64, %p65
      %p68 = scmp.ne.s32.totalorder %s53, %s67
      %p69 = scmp.eq.s32.totalorder %s22, 0
      %p70 = por %p68, %p69
      %s71 = ssub.s32 %s16, %s23
      %p72 = scmp.eq.s32.totalorder %s71, 0
      %s74 = sadd.s32 %s73, 1
      %s75 = scalar_select %p72, %s73, %s74
      %p78 = pneg %p72
      %p79 = scmp.eq.s32.totalorder %s16, 1
      %p80 = por %p78, %p79
      %p81 = scmp.ne.s32.totalorder %s73, %s76
      %p82 = scmp.eq.s32.totalorder %s16, 0
      %p83 = por %p81, %p82
      %p84 = scmp.ne.s32.totalorder %s73, %s76
      %p85 = scmp.eq.s32.totalorder %s21, 1
      %p86 = por %p84, %p85
      %p87 = scmp.ne.s32.totalorder %s76, %s77
      %p88 = scmp.eq.s32.totalorder %s21, 0
      %p89 = por %p87, %p88
      %p90 = scmp.ne.s32.totalorder %s76, %s77
      %p91 = scmp.eq.s32.totalorder %s22, 1
      %p92 = por %p90, %p91
      %p94 = scmp.ne.s32.totalorder %s77, %s93
      %p95 = scmp.eq.s32.totalorder %s22, 0
      %p96 = por %p94, %p95
      %s97 = ssub.s32 %s16, %s23
      %p98 = scmp.eq.s32.totalorder %s97, 0
      %s100 = sadd.s32 %s99, 1
      %s101 = scalar_select %p98, %s99, %s100
      %p104 = pneg %p98
      %p105 = scmp.eq.s32.totalorder %s16, 1
      %p106 = por %p104, %p105
      %p107 = scmp.ne.s32.totalorder %s99, %s102
      %p108 = scmp.eq.s32.totalorder %s16, 0
      %p109 = por %p107, %p108
      %p110 = scmp.ne.s32.totalorder %s99, %s102
      %p111 = scmp.eq.s32.totalorder %s21, 1
      %p112 = por %p110, %p111
      %p113 = scmp.ne.s32.totalorder %s102, %s103
      %p114 = scmp.eq.s32.totalorder %s21, 0
      %p115 = por %p113, %p114
      %p116 = scmp.ne.s32.totalorder %s102, %s103
      %p117 = scmp.eq.s32.totalorder %s22, 1
      %p118 = por %p116, %p117
      %p120 = scmp.ne.s32.totalorder %s103, %s119
      %p121 = scmp.eq.s32.totalorder %s22, 0
      %p122 = por %p120, %p121
      %p123 = scmp.le.s32.totalorder 1, %s16
      %p124 = scmp.lt.s32.totalorder %s16, 3
      %p125 = pnand %p123, %p124
      %p126 = pneg %p125
      // Predicated region
      $region9: #{tpu_custom_call.1} parent=5 // pred_check
        _
      $region10: #{tpu_custom_call.1} parent=5 // pred_check_branch
        %128 = sbr.rel (%p125) target = $region12
      $region11: #{tpu_custom_call.1} parent=5 // pred_region
        %s129 = ssub.s32 %s16, 1
        // Predicated region
        $region13: #{tpu_custom_call.1} parent=11 // pred_check
          %p130 = pneg %p63
        $region14: #{tpu_custom_call.1} parent=11 // pred_check_branch
          %132 = sbr.rel (%p130) target = $region16
        $region15: #{tpu_custom_call.1} parent=11 // pred_region
          _
        $region16: #{tpu_custom_call.1} parent=11 // pred_fallthru
          _
      $region12: #{tpu_custom_call.1} parent=5 // pred_fallthru
        _
      %p133 = scmp.lt.s32.totalorder %s16, 2
      // Predicated region
      $region17: #{tpu_custom_call.1} parent=5 // pred_check
        %p134 = pneg %p133
      $region18: #{tpu_custom_call.1} parent=5 // pred_check_branch
        %136 = sbr.rel (%p134) target = $region20
      $region19: #{tpu_custom_call.1} parent=5 // pred_region
        // Predicated region
        $region21: #{tpu_custom_call.1} parent=19 // pred_check
          %p137 = pneg %p36
        $region22: #{tpu_custom_call.1} parent=19 // pred_check_branch
          %139 = sbr.rel (%p137) target = $region24
        $region23: #{tpu_custom_call.1} parent=19 // pred_region
          %p140 = scmp.lt.s32.totalorder %s16, 1
          %s141 = scalar_select %p140, %s16, 1
          %s142 = smul.addr %s141, 54
          %s143 = smul.addr %s142, 4
          %s144 = scalar_lea.vmem %s0, %s143
        $region24: #{tpu_custom_call.1} parent=19 // pred_fallthru
          _
      $region20: #{tpu_custom_call.1} parent=5 // pred_fallthru
        _
      %p145 = scmp.le.s32.totalorder 1, %s16
      %p146 = scmp.lt.s32.totalorder %s16, 3
      %p147 = pnand %p145, %p146
      %p148 = pneg %p147
      // Predicated region
      $region25: #{tpu_custom_call.1} parent=5 // pred_check
        _
      $region26: #{tpu_custom_call.1} parent=5 // pred_check_branch
        %150 = sbr.rel (%p147) target = $region28
      $region27: #{tpu_custom_call.1} parent=5 // pred_region
        %s151 = ssub.s32 %s16, 1
        %p152 = scmp.lt.s32.totalorder %s21, 1
        %s153 = scalar_select %p152, %s21, 1
        %s154 = smul.addr %s153, 54
        %s155 = smul.addr %s154, 4
        %s156 = scalar_lea.vmem %s0, %s155
        %p157 = pneg %p42
        %p158 = pneg %p39
        %p159 = pneg %p63
        %p160 = pneg %p60
        %p161 = pneg %p89
        %p162 = pneg %p86
        %s163 = sand.u32 %s76, 1
        %s164 = scalar_lea.sflag [#allocation4], %s163
        %s165 = sand.u32 %s76, 1
        %s166 = smul.addr %s165, 128
        %s167 = scalar_lea.vmem [#allocation3], %s166
        %p168 = pneg %p115
        %p169 = pneg %p112
        %s170 = sand.u32 %s102, 1
        %s171 = scalar_lea.sflag [#allocation6], %s170
        %s172 = sand.u32 %s102, 1
        %s173 = smul.addr %s172, 8
        %s174 = scalar_lea.vmem [#allocation5], %s173
        %p175 = scmp.lt.s32.totalorder %s21, 1
        %s176 = scalar_select %p175, %s21, 1
        %s177 = smul.addr %s176, 54
        %s178 = smul.addr %s177, 4
        %s179 = scalar_lea.vmem %s0, %s178
        %v181 = vld [vmem:[%s179] sm:$0xf]
        %v182 = vld [vmem:[%s179 + $0x4] sm:$0xf]
        %v183 = vld [vmem:[%s179 + $0xc] sm:$0xf]
        %v184 = vld [vmem:[%s179 + $0x10] sm:$0xf]
        %v185 = vld [vmem:[%s179 + $0x18] sm:$0xf]
        %v186 = vld [vmem:[%s179 + $0x1c] sm:$0xf]
        %v187 = vld [vmem:[%s179 + $0x24] sm:$0xf]
        %v188 = vld [vmem:[%s179 + $0x28] sm:$0xf]
        %v189 = vld [vmem:[%s179 + $0x30] sm:$0xf]
        %v190 = vld [vmem:[%s179 + $0x34] sm:$0xf]
        %v191 = vld [vmem:[%s179 + $0x3c] sm:$0xf]
        %v192 = vld [vmem:[%s179 + $0x40] sm:$0xf]
        %v193 = vld [vmem:[%s179 + $0x48] sm:$0xf]
        %v194 = vld [vmem:[%s179 + $0x4c] sm:$0xf]
        %v195 = vld [vmem:[%s179 + $0x54] sm:$0xf]
        %v196 = vld [vmem:[%s179 + $0x58] sm:$0xf]
        %v197 = vld [vmem:[%s179 + $0x60] sm:$0xf]
        %v198 = vld [vmem:[%s179 + $0x64] sm:$0xf]
        %v199 = vld [vmem:[%s179 + $0x6c] sm:$0xf]
        %v200 = vld [vmem:[%s179 + $0x70] sm:$0xf]
        %v201 = vld [vmem:[%s179 + $0x78] sm:$0xf]
        %v202 = vld [vmem:[%s179 + $0x7c] sm:$0xf]
        %v203 = vld [vmem:[%s179 + $0x84] sm:$0xf]
        %v204 = vld [vmem:[%s179 + $0x88] sm:$0xf]
        %v205 = vld [vmem:[%s179 + $0x90] sm:$0xf]
        %v206 = vld [vmem:[%s179 + $0x94] sm:$0xf]
        %v207 = vld [vmem:[%s179 + $0x9c] sm:$0xf]
        %v208 = vld [vmem:[%s179 + $0xa0] sm:$0xf]
        %v209 = vld [vmem:[%s179 + $0xa8] sm:$0xf]
        %v210 = vld [vmem:[%s179 + $0xac] sm:$0xf]
        %v211 = vld [vmem:[%s179 + $0xb4] sm:$0xf]
        %v212 = vld [vmem:[%s179 + $0xb8] sm:$0xf]
        %v213 = vld [vmem:[%s1] sm:$0xf]
        %v246 = vunpack.c.l.b16 %v181
        %v247 = vunpack.c.l.b16 %v182
        %v248 = vunpack.c.l.b16 %v183
        %v249 = vunpack.c.l.b16 %v184
        %v250 = vunpack.c.l.b16 %v185
        %v251 = vunpack.c.l.b16 %v186
        %v252 = vunpack.c.l.b16 %v187
        %v253 = vunpack.c.l.b16 %v188
        %v254 = vunpack.c.l.b16 %v189
        %v255 = vunpack.c.l.b16 %v190
        %v256 = vunpack.c.l.b16 %v191
        %v257 = vunpack.c.l.b16 %v192
        %v258 = vunpack.c.l.b16 %v193
        %v259 = vunpack.c.l.b16 %v194
        %v260 = vunpack.c.l.b16 %v195
        %v261 = vunpack.c.l.b16 %v196
        %v262 = vunpack.c.l.b16 %v197
        %v263 = vunpack.c.l.b16 %v198
        %v264 = vunpack.c.l.b16 %v199
        %v265 = vunpack.c.l.b16 %v200
        %v266 = vunpack.c.l.b16 %v201
        %v267 = vunpack.c.l.b16 %v202
        %v268 = vunpack.c.l.b16 %v203
        %v269 = vunpack.c.l.b16 %v204
        %v270 = vunpack.c.l.b16 %v205
        %v271 = vunpack.c.l.b16 %v206
        %v272 = vunpack.c.l.b16 %v207
        %v273 = vunpack.c.l.b16 %v208
        %v274 = vunpack.c.l.b16 %v209
        %v275 = vunpack.c.l.b16 %v210
        %v276 = vunpack.c.l.b16 %v211
        %v277 = vunpack.c.l.b16 %v212
        %v278 = vpack.c.b16 %v247, %v246
        %v279 = vpack.c.b16 %v249, %v248
        %v280 = vpack.c.b16 %v251, %v250
        %v281 = vpack.c.b16 %v253, %v252
        %v282 = vpack.c.b16 %v255, %v254
        %v283 = vpack.c.b16 %v257, %v256
        %v284 = vpack.c.b16 %v259, %v258
        %v285 = vpack.c.b16 %v261, %v260
        %v286 = vpack.c.b16 %v263, %v262
        %v287 = vpack.c.b16 %v265, %v264
        %v288 = vpack.c.b16 %v267, %v266
        %v289 = vpack.c.b16 %v269, %v268
        %v290 = vpack.c.b16 %v271, %v270
        %v291 = vpack.c.b16 %v273, %v272
        %v292 = vpack.c.b16 %v275, %v274
        %v293 = vpack.c.b16 %v277, %v276
        %vm294 = vcmask 64512
        %v296 = vsel %vm294, %v278, 0
        %v299 = vsel %vm294, %v279, 0
        %v302 = vsel %vm294, %v280, 0
        %v305 = vsel %vm294, %v281, 0
        %v308 = vsel %vm294, %v282, 0
        %v311 = vsel %vm294, %v283, 0
        %v314 = vsel %vm294, %v284, 0
        %v317 = vsel %vm294, %v285, 0
        %v320 = vsel %vm294, %v286, 0
        %v323 = vsel %vm294, %v287, 0
        %v326 = vsel %vm294, %v288, 0
        %v329 = vsel %vm294, %v289, 0
        %v332 = vsel %vm294, %v290, 0
        %v335 = vsel %vm294, %v291, 0
        %v338 = vsel %vm294, %v292, 0
        %v341 = vsel %vm294, %v293, 0
        %vm343 = vcmask 1043456
        %v345 = vsel %vm343, %v213, 0
        %347 = vmatprep.subr.bf16.mxu0 0
        %348 = vmatpush1.bf16.msra.mxu0 %v345
        %349 = vmatprep.subr.bf16.mxu0 0
        %350 = vmatpush1.bf16.msra.mxu0 0
        %351 = vmatprep.subr.bf16.mxu0 0
        %352 = vmatpush1.bf16.msra.mxu0 0
        %353 = vmatprep.subr.bf16.mxu0 0
        %354 = vmatpush1.bf16.msra.mxu0 0
        %355 = vmatprep.subr.bf16.mxu0 0
        %356 = vmatpush1.bf16.msra.mxu0 0
        %357 = vmatprep.subr.bf16.mxu0 0
        %358 = vmatpush1.bf16.msra.mxu0 0
        %359 = vmatprep.subr.bf16.mxu0 0
        %360 = vmatpush1.bf16.msra.mxu0 0
        %361 = vmatprep.subr.bf16.mxu0 0
        %362 = vmatpush1.bf16.msra.mxu0 0
        %363 = vmatprep.subr.bf16.mxu0 0
        %364 = vmatpush1.bf16.msra.mxu0 0
        %365 = vmatprep.subr.bf16.mxu0 0
        %366 = vmatpush1.bf16.msra.mxu0 0
        %367 = vmatprep.subr.bf16.mxu0 0
        %368 = vmatpush1.bf16.msra.mxu0 0
        %369 = vmatprep.subr.bf16.mxu0 0
        %370 = vmatpush1.bf16.msra.mxu0 0
        %371 = vmatprep.subr.bf16.mxu0 0
        %372 = vmatpush1.bf16.msra.mxu0 0
        %373 = vmatprep.subr.bf16.mxu0 0
        %374 = vmatpush1.bf16.msra.mxu0 0
        %375 = vmatprep.subr.bf16.mxu0 0
        %376 = vmatpush1.bf16.msra.mxu0 0
        %377 = vmatprep.subr.bf16.mxu0 0
        %378 = vmatpush1.bf16.msra.mxu0 0
        %379 = vmatprep.mubr.bf16.mxu0 0
        %380 = vmatmul.mubr.bf16.gmra.mrb[0].mxu0 %v296
        %v381 = vpop.f32.mrb[0].mxu0
        %v382 = vadd.f32 0.0, %v381
        %v383 = vpop.f32.mrb[0].mxu0
        %v384 = vpop.f32.mrb[0].mxu0
        %v385 = vadd.f32 0.0, %v384
        %v386 = vpop.f32.mrb[0].mxu0
        %387 = vmatprep.mubr.bf16.mxu0 0
        %388 = vmatmul.mubr.bf16.gmra.mrb[0].mxu0 %v299
        %v389 = vpop.f32.mrb[0].mxu0
        %v390 = vadd.f32 0.0, %v389
        %v391 = vpop.f32.mrb[0].mxu0
        %v392 = vpop.f32.mrb[0].mxu0
        %v393 = vadd.f32 0.0, %v392
        %v394 = vpop.f32.mrb[0].mxu0
        %395 = vmatprep.mubr.bf16.mxu0 0
        %396 = vmatmul.mubr.bf16.gmra.mrb[0].mxu0 %v302
        %v397 = vpop.f32.mrb[0].mxu0
        %v398 = vadd.f32 0.0, %v397
        %v399 = vpop.f32.mrb[0].mxu0
        %v400 = vpop.f32.mrb[0].mxu0
        %v401 = vadd.f32 0.0, %v400
        %v402 = vpop.f32.mrb[0].mxu0
        %403 = vmatprep.mubr.bf16.mxu0 0
        %404 = vmatmul.mubr.bf16.gmra.mrb[0].mxu0 %v305
        %v405 = vpop.f32.mrb[0].mxu0
        %v406 = vadd.f32 0.0, %v405
        %v407 = vpop.f32.mrb[0].mxu0
        %v408 = vpop.f32.mrb[0].mxu0
        %v409 = vadd.f32 0.0, %v408
        %v410 = vpop.f32.mrb[0].mxu0
        %411 = vmatprep.mubr.bf16.mxu0 0
        %412 = vmatmul.mubr.bf16.gmra.mrb[0].mxu0 %v308
        %v413 = vpop.f32.mrb[0].mxu0
        %v414 = vadd.f32 0.0, %v413
        %v415 = vpop.f32.mrb[0].mxu0
        %v416 = vpop.f32.mrb[0].mxu0
        %v417 = vadd.f32 0.0, %v416
        %v418 = vpop.f32.mrb[0].mxu0
        %419 = vmatprep.mubr.bf16.mxu0 0
        %420 = vmatmul.mubr.bf16.gmra.mrb[0].mxu0 %v311
        %v421 = vpop.f32.mrb[0].mxu0
        %v422 = vadd.f32 0.0, %v421
        %v423 = vpop.f32.mrb[0].mxu0
        %v424 = vpop.f32.mrb[0].mxu0
        %v425 = vadd.f32 0.0, %v424
        %v426 = vpop.f32.mrb[0].mxu0
        %427 = vmatprep.mubr.bf16.mxu0 0
        %428 = vmatmul.mubr.bf16.gmra.mrb[0].mxu0 %v314
        %v429 = vpop.f32.mrb[0].mxu0
        %v430 = vadd.f32 0.0, %v429
        %v431 = vpop.f32.mrb[0].mxu0
        %v432 = vpop.f32.mrb[0].mxu0
        %v433 = vadd.f32 0.0, %v432
        %v434 = vpop.f32.mrb[0].mxu0
        %435 = vmatprep.mubr.bf16.mxu0 0
        %436 = vmatmul.mubr.bf16.gmra.mrb[0].mxu0 %v317
        %v437 = vpop.f32.mrb[0].mxu0
        %v438 = vadd.f32 0.0, %v437
        %v439 = vpop.f32.mrb[0].mxu0
        %v440 = vpop.f32.mrb[0].mxu0
        %v441 = vadd.f32 0.0, %v440
        %v442 = vpop.f32.mrb[0].mxu0
        %443 = vmatprep.mubr.bf16.mxu0 0
        %444 = vmatmul.mubr.bf16.gmra.mrb[0].mxu0 %v320
        %v445 = vpop.f32.mrb[0].mxu0
        %v446 = vadd.f32 0.0, %v445
        %v447 = vpop.f32.mrb[0].mxu0
        %v448 = vpop.f32.mrb[0].mxu0
        %v449 = vadd.f32 0.0, %v448
        %v450 = vpop.f32.mrb[0].mxu0
        %451 = vmatprep.mubr.bf16.mxu0 0
        %452 = vmatmul.mubr.bf16.gmra.mrb[0].mxu0 %v323
        %v453 = vpop.f32.mrb[0].mxu0
        %v454 = vadd.f32 0.0, %v453
        %v455 = vpop.f32.mrb[0].mxu0
        %v456 = vpop.f32.mrb[0].mxu0
        %v457 = vadd.f32 0.0, %v456
        %v458 = vpop.f32.mrb[0].mxu0
        %459 = vmatprep.mubr.bf16.mxu0 0
        %460 = vmatmul.mubr.bf16.gmra.mrb[0].mxu0 %v326
        %v461 = vpop.f32.mrb[0].mxu0
        %v462 = vadd.f32 0.0, %v461
        %v463 = vpop.f32.mrb[0].mxu0
        %v464 = vpop.f32.mrb[0].mxu0
        %v465 = vadd.f32 0.0, %v464
        %v466 = vpop.f32.mrb[0].mxu0
        %467 = vmatprep.mubr.bf16.mxu0 0
        %468 = vmatmul.mubr.bf16.gmra.mrb[0].mxu0 %v329
        %v469 = vpop.f32.mrb[0].mxu0
        %v470 = vadd.f32 0.0, %v469
        %v471 = vpop.f32.mrb[0].mxu0
        %v472 = vpop.f32.mrb[0].mxu0
        %v473 = vadd.f32 0.0, %v472
        %v474 = vpop.f32.mrb[0].mxu0
        %475 = vmatprep.mubr.bf16.mxu0 0
        %476 = vmatmul.mubr.bf16.gmra.mrb[0].mxu0 %v332
        %v477 = vpop.f32.mrb[0].mxu0
        %v478 = vadd.f32 0.0, %v477
        %v479 = vpop.f32.mrb[0].mxu0
        %v480 = vpop.f32.mrb[0].mxu0
        %v481 = vadd.f32 0.0, %v480
        %v482 = vpop.f32.mrb[0].mxu0
        %483 = vmatprep.mubr.bf16.mxu0 0
        %484 = vmatmul.mubr.bf16.gmra.mrb[0].mxu0 %v335
        %v485 = vpop.f32.mrb[0].mxu0
        %v486 = vadd.f32 0.0, %v485
        %v487 = vpop.f32.mrb[0].mxu0
        %v488 = vpop.f32.mrb[0].mxu0
        %v489 = vadd.f32 0.0, %v488
        %v490 = vpop.f32.mrb[0].mxu0
        %491 = vmatprep.mubr.bf16.mxu0 0
        %492 = vmatmul.mubr.bf16.gmra.mrb[0].mxu0 %v338
        %v493 = vpop.f32.mrb[0].mxu0
        %v494 = vadd.f32 0.0, %v493
        %v495 = vpop.f32.mrb[0].mxu0
        %v496 = vpop.f32.mrb[0].mxu0
        %v497 = vadd.f32 0.0, %v496
        %v498 = vpop.f32.mrb[0].mxu0
        %499 = vmatprep.mubr.bf16.mxu0 0
        %500 = vmatmul.mubr.bf16.gmra.mrb[0].mxu0 %v341
        %v501 = vpop.f32.mrb[0].mxu0
        %v502 = vadd.f32 0.0, %v501
        %v503 = vpop.f32.mrb[0].mxu0
        %v504 = vpop.f32.mrb[0].mxu0
        %v505 = vadd.f32 0.0, %v504
        %v506 = vpop.f32.mrb[0].mxu0
        %507 = vdwg.mxu0
        %508 = vst [vmem:[#allocation2] sm:$0xff] %v382
        %509 = vst [vmem:[#allocation2 + $0x8] sm:$0xff] %v385
        %510 = vst [vmem:[#allocation2 + $0x10] sm:$0xff] %v390
        %511 = vst [vmem:[#allocation2 + $0x18] sm:$0xff] %v393
        %512 = vst [vmem:[#allocation2 + $0x20] sm:$0xff] %v398
        %513 = vst [vmem:[#allocation2 + $0x28] sm:$0xff] %v401
        %514 = vst [vmem:[#allocation2 + $0x30] sm:$0xff] %v406
        %515 = vst [vmem:[#allocation2 + $0x38] sm:$0xff] %v409
        %516 = vst [vmem:[#allocation2 + $0x40] sm:$0xff] %v414
        %517 = vst [vmem:[#allocation2 + $0x48] sm:$0xff] %v417
        %518 = vst [vmem:[#allocation2 + $0x50] sm:$0xff] %v422
        %519 = vst [vmem:[#allocation2 + $0x58] sm:$0xff] %v425
        %520 = vst [vmem:[#allocation2 + $0x60] sm:$0xff] %v430
        %521 = vst [vmem:[#allocation2 + $0x68] sm:$0xff] %v433
        %522 = vst [vmem:[#allocation2 + $0x70] sm:$0xff] %v438
        %523 = vst [vmem:[#allocation2 + $0x78] sm:$0xff] %v441
        %524 = vst [vmem:[#allocation2 + $0x80] sm:$0xff] %v446
        %525 = vst [vmem:[#allocation2 + $0x88] sm:$0xff] %v449
        %526 = vst [vmem:[#allocation2 + $0x90] sm:$0xff] %v454
        %527 = vst [vmem:[#allocation2 + $0x98] sm:$0xff] %v457
        %528 = vst [vmem:[#allocation2 + $0xa0] sm:$0xff] %v462
        %529 = vst [vmem:[#allocation2 + $0xa8] sm:$0xff] %v465
        %530 = vst [vmem:[#allocation2 + $0xb0] sm:$0xff] %v470
        %531 = vst [vmem:[#allocation2 + $0xb8] sm:$0xff] %v473
        %532 = vst [vmem:[#allocation2 + $0xc0] sm:$0xff] %v478
        %533 = vst [vmem:[#allocation2 + $0xc8] sm:$0xff] %v481
        %534 = vst [vmem:[#allocation2 + $0xd0] sm:$0xff] %v486
        %535 = vst [vmem:[#allocation2 + $0xd8] sm:$0xff] %v489
        %536 = vst [vmem:[#allocation2 + $0xe0] sm:$0xff] %v494
        %537 = vst [vmem:[#allocation2 + $0xe8] sm:$0xff] %v497
        %538 = vst [vmem:[#allocation2 + $0xf0] sm:$0xff] %v502
        %539 = vst [vmem:[#allocation2 + $0xf8] sm:$0xff] %v505
        %v540 = vld [vmem:[%s179] sm:$0xf]
        %v541 = vld [vmem:[%s179 + $0x4] sm:$0xf]
        %v542 = vld [vmem:[%s179 + $0x8] sm:$0x1]
        %v543 = vld [vmem:[%s179 + $0xc] sm:$0xf]
        %v544 = vld [vmem:[%s179 + $0x10] sm:$0xf]
        %v545 = vld [vmem:[%s179 + $0x14] sm:$0x1]
        %v546 = vld [vmem:[%s179 + $0x18] sm:$0xf]
        %v547 = vld [vmem:[%s179 + $0x1c] sm:$0xf]
        %v548 = vld [vmem:[%s179 + $0x20] sm:$0x1]
        %v549 = vld [vmem:[%s179 + $0x24] sm:$0xf]
        %v550 = vld [vmem:[%s179 + $0x28] sm:$0xf]
        %v551 = vld [vmem:[%s179 + $0x2c] sm:$0x1]
        %v552 = vld [vmem:[%s179 + $0x30] sm:$0xf]
        %v553 = vld [vmem:[%s179 + $0x34] sm:$0xf]
        %v554 = vld [vmem:[%s179 + $0x38] sm:$0x1]
        %v555 = vld [vmem:[%s179 + $0x3c] sm:$0xf]
        %v556 = vld [vmem:[%s179 + $0x40] sm:$0xf]
        %v557 = vld [vmem:[%s179 + $0x44] sm:$0x1]
        %v558 = vld [vmem:[%s179 + $0x48] sm:$0xf]
        %v559 = vld [vmem:[%s179 + $0x4c] sm:$0xf]
        %v560 = vld [vmem:[%s179 + $0x50] sm:$0x1]
        %v561 = vld [vmem:[%s179 + $0x54] sm:$0xf]
        %v562 = vld [vmem:[%s179 + $0x58] sm:$0xf]
        %v563 = vld [vmem:[%s179 + $0x5c] sm:$0x1]
        %v564 = vld [vmem:[%s179 + $0x60] sm:$0xf]
        %v565 = vld [vmem:[%s179 + $0x64] sm:$0xf]
        %v566 = vld [vmem:[%s179 + $0x68] sm:$0x1]
        %v567 = vld [vmem:[%s179 + $0x6c] sm:$0xf]
        %v568 = vld [vmem:[%s179 + $0x70] sm:$0xf]
        %v569 = vld [vmem:[%s179 + $0x74] sm:$0x1]
        %v570 = vld [vmem:[%s179 + $0x78] sm:$0xf]
        %v571 = vld [vmem:[%s179 + $0x7c] sm:$0xf]
        %v572 = vld [vmem:[%s179 + $0x80] sm:$0x1]
        %v573 = vld [vmem:[%s179 + $0x84] sm:$0xf]
        %v574 = vld [vmem:[%s179 + $0x88] sm:$0xf]
        %v575 = vld [vmem:[%s179 + $0x8c] sm:$0x1]
        %v576 = vld [vmem:[%s179 + $0x90] sm:$0xf]
        %v577 = vld [vmem:[%s179 + $0x94] sm:$0xf]
        %v578 = vld [vmem:[%s179 + $0x98] sm:$0x1]
        %v579 = vld [vmem:[%s179 + $0x9c] sm:$0xf]
        %v580 = vld [vmem:[%s179 + $0xa0] sm:$0xf]
        %v581 = vld [vmem:[%s179 + $0xa4] sm:$0x1]
        %v582 = vld [vmem:[%s179 + $0xa8] sm:$0xf]
        %v583 = vld [vmem:[%s179 + $0xac] sm:$0xf]
        %v584 = vld [vmem:[%s179 + $0xb0] sm:$0x1]
        %v585 = vld [vmem:[%s179 + $0xb4] sm:$0xf]
        %v586 = vld [vmem:[%s179 + $0xb8] sm:$0xf]
        %v587 = vld [vmem:[%s179 + $0xbc] sm:$0x1]
        %vm588 = vsmask.f32 3328
        %vm589 = vsmask.f32 7440
        %vm590 = vmor %vm588, %vm589
        %v592 = vshrl.u32 %v540, 16
        %v594 = vrot.slane %v592, 4
        %v595 = vshll.u32 %v540, 16
        %v597 = vrot.slane %v595, 5
        %v598 = vor.u32 %v594, %v597
        %v599 = vrot.slane %v598, 4
        %v601 = vshll.u32 %v541, 16
        %v603 = vrot.slane %v601, 5
        %v604 = vsel %vm590, %v599, %v603
        %v605 = vshrl.u32 %v541, 16
        %v607 = vrot.slane %v605, 4
        %v608 = vor.u32 %v607, %v603
        %v609 = vrot.slane %v608, 4
        %v611 = vshll.u32 %v542, 16
        %v613 = vrot.slane %v611, 5
        %v614 = vsel %vm590, %v609, %v613
        %v616 = vshrl.u32 %v543, 16
        %v618 = vrot.slane %v616, 4
        %v619 = vshll.u32 %v543, 16
        %v621 = vrot.slane %v619, 5
        %v622 = vor.u32 %v618, %v621
        %v623 = vrot.slane %v622, 4
        %v625 = vshll.u32 %v544, 16
        %v627 = vrot.slane %v625, 5
        %v628 = vsel %vm590, %v623, %v627
        %v629 = vshrl.u32 %v544, 16
        %v631 = vrot.slane %v629, 4
        %v632 = vor.u32 %v631, %v627
        %v633 = vrot.slane %v632, 4
        %v635 = vshll.u32 %v545, 16
        %v637 = vrot.slane %v635, 5
        %v638 = vsel %vm590, %v633, %v637
        %v640 = vshrl.u32 %v546, 16
        %v642 = vrot.slane %v640, 4
        %v643 = vshll.u32 %v546, 16
        %v645 = vrot.slane %v643, 5
        %v646 = vor.u32 %v642, %v645
        %v647 = vrot.slane %v646, 4
        %v649 = vshll.u32 %v547, 16
        %v651 = vrot.slane %v649, 5
        %v652 = vsel %vm590, %v647, %v651
        %v653 = vshrl.u32 %v547, 16
        %v655 = vrot.slane %v653, 4
        %v656 = vor.u32 %v655, %v651
        %v657 = vrot.slane %v656, 4
        %v659 = vshll.u32 %v548, 16
        %v661 = vrot.slane %v659, 5
        %v662 = vsel %vm590, %v657, %v661
        %v664 = vshrl.u32 %v549, 16
        %v666 = vrot.slane %v664, 4
        %v667 = vshll.u32 %v549, 16
        %v669 = vrot.slane %v667, 5
        %v670 = vor.u32 %v666, %v669
        %v671 = vrot.slane %v670, 4
        %v673 = vshll.u32 %v550, 16
        %v675 = vrot.slane %v673, 5
        %v676 = vsel %vm590, %v671, %v675
        %v677 = vshrl.u32 %v550, 16
        %v679 = vrot.slane %v677, 4
        %v680 = vor.u32 %v679, %v675
        %v681 = vrot.slane %v680, 4
        %v683 = vshll.u32 %v551, 16
        %v685 = vrot.slane %v683, 5
        %v686 = vsel %vm590, %v681, %v685
        %v688 = vshrl.u32 %v552, 16
        %v690 = vrot.slane %v688, 4
        %v691 = vshll.u32 %v552, 16
        %v693 = vrot.slane %v691, 5
        %v694 = vor.u32 %v690, %v693
        %v695 = vrot.slane %v694, 4
        %v697 = vshll.u32 %v553, 16
        %v699 = vrot.slane %v697, 5
        %v700 = vsel %vm590, %v695, %v699
        %v701 = vshrl.u32 %v553, 16
        %v703 = vrot.slane %v701, 4
        %v704 = vor.u32 %v703, %v699
        %v705 = vrot.slane %v704, 4
        %v707 = vshll.u32 %v554, 16
        %v709 = vrot.slane %v707, 5
        %v710 = vsel %vm590, %v705, %v709
        %v712 = vshrl.u32 %v555, 16
        %v714 = vrot.slane %v712, 4
        %v715 = vshll.u32 %v555, 16
        %v717 = vrot.slane %v715, 5
        %v718 = vor.u32 %v714, %v717
        %v719 = vrot.slane %v718, 4
        %v721 = vshll.u32 %v556, 16
        %v723 = vrot.slane %v721, 5
        %v724 = vsel %vm590, %v719, %v723
        %v725 = vshrl.u32 %v556, 16
        %v727 = vrot.slane %v725, 4
        %v728 = vor.u32 %v727, %v723
        %v729 = vrot.slane %v728, 4
        %v731 = vshll.u32 %v557, 16
        %v733 = vrot.slane %v731, 5
        %v734 = vsel %vm590, %v729, %v733
        %v736 = vshrl.u32 %v558, 16
        %v738 = vrot.slane %v736, 4
        %v739 = vshll.u32 %v558, 16
        %v741 = vrot.slane %v739, 5
        %v742 = vor.u32 %v738, %v741
        %v743 = vrot.slane %v742, 4
        %v745 = vshll.u32 %v559, 16
        %v747 = vrot.slane %v745, 5
        %v748 = vsel %vm590, %v743, %v747
        %v749 = vshrl.u32 %v559, 16
        %v751 = vrot.slane %v749, 4
        %v752 = vor.u32 %v751, %v747
        %v753 = vrot.slane %v752, 4
        %v755 = vshll.u32 %v560, 16
        %v757 = vrot.slane %v755, 5
        %v758 = vsel %vm590, %v753, %v757
        %v760 = vshrl.u32 %v561, 16
        %v762 = vrot.slane %v760, 4
        %v763 = vshll.u32 %v561, 16
        %v765 = vrot.slane %v763, 5
        %v766 = vor.u32 %v762, %v765
        %v767 = vrot.slane %v766, 4
        %v769 = vshll.u32 %v562, 16
        %v771 = vrot.slane %v769, 5
        %v772 = vsel %vm590, %v767, %v771
        %v773 = vshrl.u32 %v562, 16
        %v775 = vrot.slane %v773, 4
        %v776 = vor.u32 %v775, %v771
        %v777 = vrot.slane %v776, 4
        %v779 = vshll.u32 %v563, 16
        %v781 = vrot.slane %v779, 5
        %v782 = vsel %vm590, %v777, %v781
        %v784 = vshrl.u32 %v564, 16
        %v786 = vrot.slane %v784, 4
        %v787 = vshll.u32 %v564, 16
        %v789 = vrot.slane %v787, 5
        %v790 = vor.u32 %v786, %v789
        %v791 = vrot.slane %v790, 4
        %v793 = vshll.u32 %v565, 16
        %v795 = vrot.slane %v793, 5
        %v796 = vsel %vm590, %v791, %v795
        %v797 = vshrl.u32 %v565, 16
        %v799 = vrot.slane %v797, 4
        %v800 = vor.u32 %v799, %v795
        %v801 = vrot.slane %v800, 4
        %v803 = vshll.u32 %v566, 16
        %v805 = vrot.slane %v803, 5
        %v806 = vsel %vm590, %v801, %v805
        %v808 = vshrl.u32 %v567, 16
        %v810 = vrot.slane %v808, 4
        %v811 = vshll.u32 %v567, 16
        %v813 = vrot.slane %v811, 5
        %v814 = vor.u32 %v810, %v813
        %v815 = vrot.slane %v814, 4
        %v817 = vshll.u32 %v568, 16
        %v819 = vrot.slane %v817, 5
        %v820 = vsel %vm590, %v815, %v819
        %v821 = vshrl.u32 %v568, 16
        %v823 = vrot.slane %v821, 4
        %v824 = vor.u32 %v823, %v819
        %v825 = vrot.slane %v824, 4
        %v827 = vshll.u32 %v569, 16
        %v829 = vrot.slane %v827, 5
        %v830 = vsel %vm590, %v825, %v829
        %v832 = vshrl.u32 %v570, 16
        %v834 = vrot.slane %v832, 4
        %v835 = vshll.u32 %v570, 16
        %v837 = vrot.slane %v835, 5
        %v838 = vor.u32 %v834, %v837
        %v839 = vrot.slane %v838, 4
        %v841 = vshll.u32 %v571, 16
        %v843 = vrot.slane %v841, 5
        %v844 = vsel %vm590, %v839, %v843
        %v845 = vshrl.u32 %v571, 16
        %v847 = vrot.slane %v845, 4
        %v848 = vor.u32 %v847, %v843
        %v849 = vrot.slane %v848, 4
        %v851 = vshll.u32 %v572, 16
        %v853 = vrot.slane %v851, 5
        %v854 = vsel %vm590, %v849, %v853
        %v856 = vshrl.u32 %v573, 16
        %v858 = vrot.slane %v856, 4
        %v859 = vshll.u32 %v573, 16
        %v861 = vrot.slane %v859, 5
        %v862 = vor.u32 %v858, %v861
        %v863 = vrot.slane %v862, 4
        %v865 = vshll.u32 %v574, 16
        %v867 = vrot.slane %v865, 5
        %v868 = vsel %vm590, %v863, %v867
        %v869 = vshrl.u32 %v574, 16
        %v871 = vrot.slane %v869, 4
        %v872 = vor.u32 %v871, %v867
        %v873 = vrot.slane %v872, 4
        %v875 = vshll.u32 %v575, 16
        %v877 = vrot.slane %v875, 5
        %v878 = vsel %vm590, %v873, %v877
        %v880 = vshrl.u32 %v576, 16
        %v882 = vrot.slane %v880, 4
        %v883 = vshll.u32 %v576, 16
        %v885 = vrot.slane %v883, 5
        %v886 = vor.u32 %v882, %v885
        %v887 = vrot.slane %v886, 4
        %v889 = vshll.u32 %v577, 16
        %v891 = vrot.slane %v889, 5
        %v892 = vsel %vm590, %v887, %v891
        %v893 = vshrl.u32 %v577, 16
        %v895 = vrot.slane %v893, 4
        %v896 = vor.u32 %v895, %v891
        %v897 = vrot.slane %v896, 4
        %v899 = vshll.u32 %v578, 16
        %v901 = vrot.slane %v899, 5
        %v902 = vsel %vm590, %v897, %v901
        %v904 = vshrl.u32 %v579, 16
        %v906 = vrot.slane %v904, 4
        %v907 = vshll.u32 %v579, 16
        %v909 = vrot.slane %v907, 5
        %v910 = vor.u32 %v906, %v909
        %v911 = vrot.slane %v910, 4
        %v913 = vshll.u32 %v580, 16
        %v915 = vrot.slane %v913, 5
        %v916 = vsel %vm590, %v911, %v915
        %v917 = vshrl.u32 %v580, 16
        %v919 = vrot.slane %v917, 4
        %v920 = vor.u32 %v919, %v915
        %v921 = vrot.slane %v920, 4
        %v923 = vshll.u32 %v581, 16
        %v925 = vrot.slane %v923, 5
        %v926 = vsel %vm590, %v921, %v925
        %v928 = vshrl.u32 %v582, 16
        %v930 = vrot.slane %v928, 4
        %v931 = vshll.u32 %v582, 16
        %v933 = vrot.slane %v931, 5
        %v934 = vor.u32 %v930, %v933
        %v935 = vrot.slane %v934, 4
        %v937 = vshll.u32 %v583, 16
        %v939 = vrot.slane %v937, 5
        %v940 = vsel %vm590, %v935, %v939
        %v941 = vshrl.u32 %v583, 16
        %v943 = vrot.slane %v941, 4
        %v944 = vor.u32 %v943, %v939
        %v945 = vrot.slane %v944, 4
        %v947 = vshll.u32 %v584, 16
        %v949 = vrot.slane %v947, 5
        %v950 = vsel %vm590, %v945, %v949
        %v952 = vshrl.u32 %v585, 16
        %v954 = vrot.slane %v952, 4
        %v955 = vshll.u32 %v585, 16
        %v957 = vrot.slane %v955, 5
        %v958 = vor.u32 %v954, %v957
        %v959 = vrot.slane %v958, 4
        %v961 = vshll.u32 %v586, 16
        %v963 = vrot.slane %v961, 5
        %v964 = vsel %vm590, %v959, %v963
        %v965 = vshrl.u32 %v586, 16
        %v967 = vrot.slane %v965, 4
        %v968 = vor.u32 %v967, %v963
        %v969 = vrot.slane %v968, 4
        %v971 = vshll.u32 %v587, 16
        %v973 = vrot.slane %v971, 5
        %v974 = vsel %vm590, %v969, %v973
        %s975 = scalar_lea.vmem %s1, 4
        %v976 = vld [vmem:[%s975] sm:$0xf]
        %v977 = vunpack.c.l.b16 %v604
        %v978 = vunpack.c.l.b16 %v614
        %v979 = vunpack.c.l.b16 %v628
        %v980 = vunpack.c.l.b16 %v638
        %v981 = vunpack.c.l.b16 %v652
        %v982 = vunpack.c.l.b16 %v662
        %v983 = vunpack.c.l.b16 %v676
        %v984 = vunpack.c.l.b16 %v686
        %v985 = vunpack.c.l.b16 %v700
        %v986 = vunpack.c.l.b16 %v710
        %v987 = vunpack.c.l.b16 %v724
        %v988 = vunpack.c.l.b16 %v734
        %v989 = vunpack.c.l.b16 %v748
        %v990 = vunpack.c.l.b16 %v758
        %v991 = vunpack.c.l.b16 %v772
        %v992 = vunpack.c.l.b16 %v782
        %v993 = vunpack.c.l.b16 %v796
        %v994 = vunpack.c.l.b16 %v806
        %v995 = vunpack.c.l.b16 %v820
        %v996 = vunpack.c.l.b16 %v830
        %v997 = vunpack.c.l.b16 %v844
        %v998 = vunpack.c.l.b16 %v854
        %v999 = vunpack.c.l.b16 %v868
        %v1000 = vunpack.c.l.b16 %v878
        %v1001 = vunpack.c.l.b16 %v892
        %v1002 = vunpack.c.l.b16 %v902
        %v1003 = vunpack.c.l.b16 %v916
        %v1004 = vunpack.c.l.b16 %v926
        %v1005 = vunpack.c.l.b16 %v940
        %v1006 = vunpack.c.l.b16 %v950
        %v1007 = vunpack.c.l.b16 %v964
        %v1008 = vunpack.c.l.b16 %v974
        %v1009 = vpack.c.b16 %v978, %v977
        %v1010 = vpack.c.b16 %v980, %v979
        %v1011 = vpack.c.b16 %v982, %v981
        %v1012 = vpack.c.b16 %v984, %v983
        %v1013 = vpack.c.b16 %v986, %v985
        %v1014 = vpack.c.b16 %v988, %v987
        %v1015 = vpack.c.b16 %v990, %v989
        %v1016 = vpack.c.b16 %v992, %v991
        %v1017 = vpack.c.b16 %v994, %v993
        %v1018 = vpack.c.b16 %v996, %v995
        %v1019 = vpack.c.b16 %v998, %v997
        %v1020 = vpack.c.b16 %v1000, %v999
        %v1021 = vpack.c.b16 %v1002, %v1001
        %v1022 = vpack.c.b16 %v1004, %v1003
        %v1023 = vpack.c.b16 %v1006, %v1005
        %v1024 = vpack.c.b16 %v1008, %v1007
        %v1026 = vsel %vm294, %v1009, 0
        %v1029 = vsel %vm294, %v1010, 0
        %v1032 = vsel %vm294, %v1011, 0
        %v1035 = vsel %vm294, %v1012, 0
        %v1038 = vsel %vm294, %v1013, 0
        %v1041 = vsel %vm294, %v1014, 0
        %v1044 = vsel %vm294, %v1015, 0
        %v1047 = vsel %vm294, %v1016, 0
        %v1050 = vsel %vm294, %v1017, 0
        %v1053 = vsel %vm294, %v1018, 0
        %v1056 = vsel %vm294, %v1019, 0
        %v1059 = vsel %vm294, %v1020, 0
        %v1062 = vsel %vm294, %v1021, 0
        %v1065 = vsel %vm294, %v1022, 0
        %v1068 = vsel %vm294, %v1023, 0
        %v1071 = vsel %vm294, %v1024, 0
        %v1074 = vsel %vm343, %v976, 0
        %1076 = vmatprep.subr.bf16.mxu0 0
        %1077 = vmatpush1.bf16.msra.mxu0 %v1074
        %1078 = vmatprep.subr.bf16.mxu0 0
        %1079 = vmatpush1.bf16.msra.mxu0 0
        %1080 = vmatprep.subr.bf16.mxu0 0
        %1081 = vmatpush1.bf16.msra.mxu0 0
        %1082 = vmatprep.subr.bf16.mxu0 0
        %1083 = vmatpush1.bf16.msra.mxu0 0
        %1084 = vmatprep.subr.bf16.mxu0 0
        %1085 = vmatpush1.bf16.msra.mxu0 0
        %1086 = vmatprep.subr.bf16.mxu0 0
        %1087 = vmatpush1.bf16.msra.mxu0 0
        %1088 = vmatprep.subr.bf16.mxu0 0
        %1089 = vmatpush1.bf16.msra.mxu0 0
        %1090 = vmatprep.subr.bf16.mxu0 0
        %1091 = vmatpush1.bf16.msra.mxu0 0
        %1092 = vmatprep.subr.bf16.mxu0 0
        %1093 = vmatpush1.bf16.msra.mxu0 0
        %1094 = vmatprep.subr.bf16.mxu0 0
        %1095 = vmatpush1.bf16.msra.mxu0 0
        %1096 = vmatprep.subr.bf16.mxu0 0
        %1097 = vmatpush1.bf16.msra.mxu0 0
        %1098 = vmatprep.subr.bf16.mxu0 0
        %1099 = vmatpush1.bf16.msra.mxu0 0
        %1100 = vmatprep.subr.bf16.mxu0 0
        %1101 = vmatpush1.bf16.msra.mxu0 0
        %1102 = vmatprep.subr.bf16.mxu0 0
        %1103 = vmatpush1.bf16.msra.mxu0 0
        %1104 = vmatprep.subr.bf16.mxu0 0
        %1105 = vmatpush1.bf16.msra.mxu0 0
        %1106 = vmatprep.subr.bf16.mxu0 0
        %1107 = vmatpush1.bf16.msra.mxu0 0
        %1108 = vmatprep.mubr.bf16.mxu0 0
        %1109 = vmatmul.mubr.bf16.gmra.mrb[0].mxu0 %v1026
        %v1110 = vpop.f32.mrb[0].mxu0
        %v1111 = vadd.f32 0.0, %v1110
        %v1112 = vpop.f32.mrb[0].mxu0
        %v1113 = vpop.f32.mrb[0].mxu0
        %v1114 = vadd.f32 0.0, %v1113
        %v1115 = vpop.f32.mrb[0].mxu0
        %1116 = vmatprep.mubr.bf16.mxu0 0
        %1117 = vmatmul.mubr.bf16.gmra.mrb[0].mxu0 %v1029
        %v1118 = vpop.f32.mrb[0].mxu0
        %v1119 = vadd.f32 0.0, %v1118
        %v1120 = vpop.f32.mrb[0].mxu0
        %v1121 = vpop.f32.mrb[0].mxu0
        %v1122 = vadd.f32 0.0, %v1121
        %v1123 = vpop.f32.mrb[0].mxu0
        %1124 = vmatprep.mubr.bf16.mxu0 0
        %1125 = vmatmul.mubr.bf16.gmra.mrb[0].mxu0 %v1032
        %v1126 = vpop.f32.mrb[0].mxu0
        %v1127 = vadd.f32 0.0, %v1126
        %v1128 = vpop.f32.mrb[0].mxu0
        %v1129 = vpop.f32.mrb[0].mxu0
        %v1130 = vadd.f32 0.0, %v1129
        %v1131 = vpop.f32.mrb[0].mxu0
        %1132 = vmatprep.mubr.bf16.mxu0 0
        %1133 = vmatmul.mubr.bf16.gmra.mrb[0].mxu0 %v1035
        %v1134 = vpop.f32.mrb[0].mxu0
        %v1135 = vadd.f32 0.0, %v1134
        %v1136 = vpop.f32.mrb[0].mxu0
        %v1137 = vpop.f32.mrb[0].mxu0
        %v1138 = vadd.f32 0.0, %v1137
        %v1139 = vpop.f32.mrb[0].mxu0
        %1140 = vmatprep.mubr.bf16.mxu0 0
        %1141 = vmatmul.mubr.bf16.gmra.mrb[0].mxu0 %v1038
        %v1142 = vpop.f32.mrb[0].mxu0
        %v1143 = vadd.f32 0.0, %v1142
        %v1144 = vpop.f32.mrb[0].mxu0
        %v1145 = vpop.f32.mrb[0].mxu0
        %v1146 = vadd.f32 0.0, %v1145
        %v1147 = vpop.f32.mrb[0].mxu0
        %1148 = vmatprep.mubr.bf16.mxu0 0
        %1149 = vmatmul.mubr.bf16.gmra.mrb[0].mxu0 %v1041
        %v1150 = vpop.f32.mrb[0].mxu0
        %v1151 = vadd.f32 0.0, %v1150
        %v1152 = vpop.f32.mrb[0].mxu0
        %v1153 = vpop.f32.mrb[0].mxu0
        %v1154 = vadd.f32 0.0, %v1153
        %v1155 = vpop.f32.mrb[0].mxu0
        %1156 = vmatprep.mubr.bf16.mxu0 0
        %1157 = vmatmul.mubr.bf16.gmra.mrb[0].mxu0 %v1044
        %v1158 = vpop.f32.mrb[0].mxu0
        %v1159 = vadd.f32 0.0, %v1158
        %v1160 = vpop.f32.mrb[0].mxu0
        %v1161 = vpop.f32.mrb[0].mxu0
        %v1162 = vadd.f32 0.0, %v1161
        %v1163 = vpop.f32.mrb[0].mxu0
        %1164 = vmatprep.mubr.bf16.mxu0 0
        %1165 = vmatmul.mubr.bf16.gmra.mrb[0].mxu0 %v1047
        %v1166 = vpop.f32.mrb[0].mxu0
        %v1167 = vadd.f32 0.0, %v1166
        %v1168 = vpop.f32.mrb[0].mxu0
        %v1169 = vpop.f32.mrb[0].mxu0
        %v1170 = vadd.f32 0.0, %v1169
        %v1171 = vpop.f32.mrb[0].mxu0
        %1172 = vmatprep.mubr.bf16.mxu0 0
        %1173 = vmatmul.mubr.bf16.gmra.mrb[0].mxu0 %v1050
        %v1174 = vpop.f32.mrb[0].mxu0
        %v1175 = vadd.f32 0.0, %v1174
        %v1176 = vpop.f32.mrb[0].mxu0
        %v1177 = vpop.f32.mrb[0].mxu0
        %v1178 = vadd.f32 0.0, %v1177
        %v1179 = vpop.f32.mrb[0].mxu0
        %1180 = vmatprep.mubr.bf16.mxu0 0
        %1181 = vmatmul.mubr.bf16.gmra.mrb[0].mxu0 %v1053
        %v1182 = vpop.f32.mrb[0].mxu0
        %v1183 = vadd.f32 0.0, %v1182
        %v1184 = vpop.f32.mrb[0].mxu0
        %v1185 = vpop.f32.mrb[0].mxu0
        %v1186 = vadd.f32 0.0, %v1185
        %v1187 = vpop.f32.mrb[0].mxu0
        %1188 = vmatprep.mubr.bf16.mxu0 0
        %1189 = vmatmul.mubr.bf16.gmra.mrb[0].mxu0 %v1056
        %v1190 = vpop.f32.mrb[0].mxu0
        %v1191 = vadd.f32 0.0, %v1190
        %v1192 = vpop.f32.mrb[0].mxu0
        %v1193 = vpop.f32.mrb[0].mxu0
        %v1194 = vadd.f32 0.0, %v1193
        %v1195 = vpop.f32.mrb[0].mxu0
        %1196 = vmatprep.mubr.bf16.mxu0 0
        %1197 = vmatmul.mubr.bf16.gmra.mrb[0].mxu0 %v1059
        %v1198 = vpop.f32.mrb[0].mxu0
        %v1199 = vadd.f32 0.0, %v1198
        %v1200 = vpop.f32.mrb[0].mxu0
        %v1201 = vpop.f32.mrb[0].mxu0
        %v1202 = vadd.f32 0.0, %v1201
        %v1203 = vpop.f32.mrb[0].mxu0
        %1204 = vmatprep.mubr.bf16.mxu0 0
        %1205 = vmatmul.mubr.bf16.gmra.mrb[0].mxu0 %v1062
        %v1206 = vpop.f32.mrb[0].mxu0
        %v1207 = vadd.f32 0.0, %v1206
        %v1208 = vpop.f32.mrb[0].mxu0
        %v1209 = vpop.f32.mrb[0].mxu0
        %v1210 = vadd.f32 0.0, %v1209
        %v1211 = vpop.f32.mrb[0].mxu0
        %1212 = vmatprep.mubr.bf16.mxu0 0
        %1213 = vmatmul.mubr.bf16.gmra.mrb[0].mxu0 %v1065
        %v1214 = vpop.f32.mrb[0].mxu0
        %v1215 = vadd.f32 0.0, %v1214
        %v1216 = vpop.f32.mrb[0].mxu0
        %v1217 = vpop.f32.mrb[0].mxu0
        %v1218 = vadd.f32 0.0, %v1217
        %v1219 = vpop.f32.mrb[0].mxu0
        %1220 = vmatprep.mubr.bf16.mxu0 0
        %1221 = vmatmul.mubr.bf16.gmra.mrb[0].mxu0 %v1068
        %v1222 = vpop.f32.mrb[0].mxu0
        %v1223 = vadd.f32 0.0, %v1222
        %v1224 = vpop.f32.mrb[0].mxu0
        %v1225 = vpop.f32.mrb[0].mxu0
        %v1226 = vadd.f32 0.0, %v1225
        %v1227 = vpop.f32.mrb[0].mxu0
        %1228 = vmatprep.mubr.bf16.mxu0 0
        %1229 = vmatmul.mubr.bf16.gmra.mrb[0].mxu0 %v1071
        %v1230 = vpop.f32.mrb[0].mxu0
        %v1231 = vadd.f32 0.0, %v1230
        %v1232 = vpop.f32.mrb[0].mxu0
        %v1233 = vpop.f32.mrb[0].mxu0
        %v1234 = vadd.f32 0.0, %v1233
        %v1235 = vpop.f32.mrb[0].mxu0
        %1236 = vdwg.mxu0
        %v1237 = vld [vmem:[#allocation2] sm:$0xff]
        %v1238 = vld [vmem:[#allocation2 + $0x8] sm:$0xff]
        %v1239 = vld [vmem:[#allocation2 + $0x10] sm:$0xff]
        %v1240 = vld [vmem:[#allocation2 + $0x18] sm:$0xff]
        %v1241 = vld [vmem:[#allocation2 + $0x20] sm:$0xff]
        %v1242 = vld [vmem:[#allocation2 + $0x28] sm:$0xff]
        %v1243 = vld [vmem:[#allocation2 + $0x30] sm:$0xff]
        %v1244 = vld [vmem:[#allocation2 + $0x38] sm:$0xff]
        %v1245 = vld [vmem:[#allocation2 + $0x40] sm:$0xff]
        %v1246 = vld [vmem:[#allocation2 + $0x48] sm:$0xff]
        %v1247 = vld [vmem:[#allocation2 + $0x50] sm:$0xff]
        %v1248 = vld [vmem:[#allocation2 + $0x58] sm:$0xff]
        %v1249 = vld [vmem:[#allocation2 + $0x60] sm:$0xff]
        %v1250 = vld [vmem:[#allocation2 + $0x68] sm:$0xff]
        %v1251 = vld [vmem:[#allocation2 + $0x70] sm:$0xff]
        %v1252 = vld [vmem:[#allocation2 + $0x78] sm:$0xff]
        %v1253 = vld [vmem:[#allocation2 + $0x80] sm:$0xff]
        %v1254 = vld [vmem:[#allocation2 + $0x88] sm:$0xff]
        %v1255 = vld [vmem:[#allocation2 + $0x90] sm:$0xff]
        %v1256 = vld [vmem:[#allocation2 + $0x98] sm:$0xff]
        %v1257 = vld [vmem:[#allocation2 + $0xa0] sm:$0xff]
        %v1258 = vld [vmem:[#allocation2 + $0xa8] sm:$0xff]
        %v1259 = vld [vmem:[#allocation2 + $0xb0] sm:$0xff]
        %v1260 = vld [vmem:[#allocation2 + $0xb8] sm:$0xff]
        %v1261 = vld [vmem:[#allocation2 + $0xc0] sm:$0xff]
        %v1262 = vld [vmem:[#allocation2 + $0xc8] sm:$0xff]
        %v1263 = vld [vmem:[#allocation2 + $0xd0] sm:$0xff]
        %v1264 = vld [vmem:[#allocation2 + $0xd8] sm:$0xff]
        %v1265 = vld [vmem:[#allocation2 + $0xe0] sm:$0xff]
        %v1266 = vld [vmem:[#allocation2 + $0xe8] sm:$0xff]
        %v1267 = vld [vmem:[#allocation2 + $0xf0] sm:$0xff]
        %v1268 = vld [vmem:[#allocation2 + $0xf8] sm:$0xff]
        %v1269 = vadd.f32 %v1237, %v1111
        %v1270 = vadd.f32 %v1238, %v1114
        %v1271 = vadd.f32 %v1239, %v1119
        %v1272 = vadd.f32 %v1240, %v1122
        %v1273 = vadd.f32 %v1241, %v1127
        %v1274 = vadd.f32 %v1242, %v1130
        %v1275 = vadd.f32 %v1243, %v1135
        %v1276 = vadd.f32 %v1244, %v1138
        %v1277 = vadd.f32 %v1245, %v1143
        %v1278 = vadd.f32 %v1246, %v1146
        %v1279 = vadd.f32 %v1247, %v1151
        %v1280 = vadd.f32 %v1248, %v1154
        %v1281 = vadd.f32 %v1249, %v1159
        %v1282 = vadd.f32 %v1250, %v1162
        %v1283 = vadd.f32 %v1251, %v1167
        %v1284 = vadd.f32 %v1252, %v1170
        %v1285 = vadd.f32 %v1253, %v1175
        %v1286 = vadd.f32 %v1254, %v1178
        %v1287 = vadd.f32 %v1255, %v1183
        %v1288 = vadd.f32 %v1256, %v1186
        %v1289 = vadd.f32 %v1257, %v1191
        %v1290 = vadd.f32 %v1258, %v1194
        %v1291 = vadd.f32 %v1259, %v1199
        %v1292 = vadd.f32 %v1260, %v1202
        %v1293 = vadd.f32 %v1261, %v1207
        %v1294 = vadd.f32 %v1262, %v1210
        %v1295 = vadd.f32 %v1263, %v1215
        %v1296 = vadd.f32 %v1264, %v1218
        %v1297 = vadd.f32 %v1265, %v1223
        %v1298 = vadd.f32 %v1266, %v1226
        %v1299 = vadd.f32 %v1267, %v1231
        %v1300 = vadd.f32 %v1268, %v1234
        %1301 = vst [vmem:[#allocation2] sm:$0xff] %v1269
        %1302 = vst [vmem:[#allocation2 + $0x8] sm:$0xff] %v1270
        %1303 = vst [vmem:[#allocation2 + $0x10] sm:$0xff] %v1271
        %1304 = vst [vmem:[#allocation2 + $0x18] sm:$0xff] %v1272
        %1305 = vst [vmem:[#allocation2 + $0x20] sm:$0xff] %v1273
        %1306 = vst [vmem:[#allocation2 + $0x28] sm:$0xff] %v1274
        %1307 = vst [vmem:[#allocation2 + $0x30] sm:$0xff] %v1275
        %1308 = vst [vmem:[#allocation2 + $0x38] sm:$0xff] %v1276
        %1309 = vst [vmem:[#allocation2 + $0x40] sm:$0xff] %v1277
        %1310 = vst [vmem:[#allocation2 + $0x48] sm:$0xff] %v1278
        %1311 = vst [vmem:[#allocation2 + $0x50] sm:$0xff] %v1279
        %1312 = vst [vmem:[#allocation2 + $0x58] sm:$0xff] %v1280
        %1313 = vst [vmem:[#allocation2 + $0x60] sm:$0xff] %v1281
        %1314 = vst [vmem:[#allocation2 + $0x68] sm:$0xff] %v1282
        %1315 = vst [vmem:[#allocation2 + $0x70] sm:$0xff] %v1283
        %1316 = vst [vmem:[#allocation2 + $0x78] sm:$0xff] %v1284
        %1317 = vst [vmem:[#allocation2 + $0x80] sm:$0xff] %v1285
        %1318 = vst [vmem:[#allocation2 + $0x88] sm:$0xff] %v1286
        %1319 = vst [vmem:[#allocation2 + $0x90] sm:$0xff] %v1287
        %1320 = vst [vmem:[#allocation2 + $0x98] sm:$0xff] %v1288
        %1321 = vst [vmem:[#allocation2 + $0xa0] sm:$0xff] %v1289
        %1322 = vst [vmem:[#allocation2 + $0xa8] sm:$0xff] %v1290
        %1323 = vst [vmem:[#allocation2 + $0xb0] sm:$0xff] %v1291
        %1324 = vst [vmem:[#allocation2 + $0xb8] sm:$0xff] %v1292
        %1325 = vst [vmem:[#allocation2 + $0xc0] sm:$0xff] %v1293
        %1326 = vst [vmem:[#allocation2 + $0xc8] sm:$0xff] %v1294
        %1327 = vst [vmem:[#allocation2 + $0xd0] sm:$0xff] %v1295
        %1328 = vst [vmem:[#allocation2 + $0xd8] sm:$0xff] %v1296
        %1329 = vst [vmem:[#allocation2 + $0xe0] sm:$0xff] %v1297
        %1330 = vst [vmem:[#allocation2 + $0xe8] sm:$0xff] %v1298
        %1331 = vst [vmem:[#allocation2 + $0xf0] sm:$0xff] %v1299
        %1332 = vst [vmem:[#allocation2 + $0xf8] sm:$0xff] %v1300
        %v1333 = vld [vmem:[%s179] sm:$0xe]
        %v1334 = vld [vmem:[%s179 + $0x4] sm:$0xf]
        %v1335 = vld [vmem:[%s179 + $0x8] sm:$0x1]
        %v1336 = vld [vmem:[%s179 + $0xc] sm:$0xe]
        %v1337 = vld [vmem:[%s179 + $0x10] sm:$0xf]
        %v1338 = vld [vmem:[%s179 + $0x14] sm:$0x1]
        %v1339 = vld [vmem:[%s179 + $0x18] sm:$0xe]
        %v1340 = vld [vmem:[%s179 + $0x1c] sm:$0xf]
        %v1341 = vld [vmem:[%s179 + $0x20] sm:$0x1]
        %v1342 = vld [vmem:[%s179 + $0x24] sm:$0xe]
        %v1343 = vld [vmem:[%s179 + $0x28] sm:$0xf]
        %v1344 = vld [vmem:[%s179 + $0x2c] sm:$0x1]
        %v1345 = vld [vmem:[%s179 + $0x30] sm:$0xe]
        %v1346 = vld [vmem:[%s179 + $0x34] sm:$0xf]
        %v1347 = vld [vmem:[%s179 + $0x38] sm:$0x1]
        %v1348 = vld [vmem:[%s179 + $0x3c] sm:$0xe]
        %v1349 = vld [vmem:[%s179 + $0x40] sm:$0xf]
        %v1350 = vld [vmem:[%s179 + $0x44] sm:$0x1]
        %v1351 = vld [vmem:[%s179 + $0x48] sm:$0xe]
        %v1352 = vld [vmem:[%s179 + $0x4c] sm:$0xf]
        %v1353 = vld [vmem:[%s179 + $0x50] sm:$0x1]
        %v1354 = vld [vmem:[%s179 + $0x54] sm:$0xe]
        %v1355 = vld [vmem:[%s179 + $0x58] sm:$0xf]
        %v1356 = vld [vmem:[%s179 + $0x5c] sm:$0x1]
        %v1357 = vld [vmem:[%s179 + $0x60] sm:$0xe]
        %v1358 = vld [vmem:[%s179 + $0x64] sm:$0xf]
        %v1359 = vld [vmem:[%s179 + $0x68] sm:$0x1]
        %v1360 = vld [vmem:[%s179 + $0x6c] sm:$0xe]
        %v1361 = vld [vmem:[%s179 + $0x70] sm:$0xf]
        %v1362 = vld [vmem:[%s179 + $0x74] sm:$0x1]
        %v1363 = vld [vmem:[%s179 + $0x78] sm:$0xe]
        %v1364 = vld [vmem:[%s179 + $0x7c] sm:$0xf]
        %v1365 = vld [vmem:[%s179 + $0x80] sm:$0x1]
        %v1366 = vld [vmem:[%s179 + $0x84] sm:$0xe]
        %v1367 = vld [vmem:[%s179 + $0x88] sm:$0xf]
        %v1368 = vld [vmem:[%s179 + $0x8c] sm:$0x1]
        %v1369 = vld [vmem:[%s179 + $0x90] sm:$0xe]
        %v1370 = vld [vmem:[%s179 + $0x94] sm:$0xf]
        %v1371 = vld [vmem:[%s179 + $0x98] sm:$0x1]
        %v1372 = vld [vmem:[%s179 + $0x9c] sm:$0xe]
        %v1373 = vld [vmem:[%s179 + $0xa0] sm:$0xf]
        %v1374 = vld [vmem:[%s179 + $0xa4] sm:$0x1]
        %v1375 = vld [vmem:[%s179 + $0xa8] sm:$0xe]
        %v1376 = vld [vmem:[%s179 + $0xac] sm:$0xf]
        %v1377 = vld [vmem:[%s179 + $0xb0] sm:$0x1]
        %v1378 = vld [vmem:[%s179 + $0xb4] sm:$0xe]
        %v1379 = vld [vmem:[%s179 + $0xb8] sm:$0xf]
        %v1380 = vld [vmem:[%s179 + $0xbc] sm:$0x1]
        %vm1429 = vcmask 1042432
        %vm1430 = vcmask 1046532
        %vm1431 = vmor %vm1429, %vm1430
        %v1432 = vrot.slane %v1333, 5
        %v1433 = vrot.slane %v1432, 4
        %v1434 = vrot.slane %v1334, 5
        %v1435 = vsel %vm1431, %v1433, %v1434
        %v1436 = vrot.slane %v1434, 4
        %v1437 = vrot.slane %v1335, 5
        %v1438 = vsel %vm1431, %v1436, %v1437
        %v1439 = vrot.slane %v1336, 5
        %v1440 = vrot.slane %v1439, 4
        %v1441 = vrot.slane %v1337, 5
        %v1442 = vsel %vm1431, %v1440, %v1441
        %v1443 = vrot.slane %v1441, 4
        %v1444 = vrot.slane %v1338, 5
        %v1445 = vsel %vm1431, %v1443, %v1444
        %v1446 = vrot.slane %v1339, 5
        %v1447 = vrot.slane %v1446, 4
        %v1448 = vrot.slane %v1340, 5
        %v1449 = vsel %vm1431, %v1447, %v1448
        %v1450 = vrot.slane %v1448, 4
        %v1451 = vrot.slane %v1341, 5
        %v1452 = vsel %vm1431, %v1450, %v1451
        %v1453 = vrot.slane %v1342, 5
        %v1454 = vrot.slane %v1453, 4
        %v1455 = vrot.slane %v1343, 5
        %v1456 = vsel %vm1431, %v1454, %v1455
        %v1457 = vrot.slane %v1455, 4
        %v1458 = vrot.slane %v1344, 5
        %v1459 = vsel %vm1431, %v1457, %v1458
        %v1460 = vrot.slane %v1345, 5
        %v1461 = vrot.slane %v1460, 4
        %v1462 = vrot.slane %v1346, 5
        %v1463 = vsel %vm1431, %v1461, %v1462
        %v1464 = vrot.slane %v1462, 4
        %v1465 = vrot.slane %v1347, 5
        %v1466 = vsel %vm1431, %v1464, %v1465
        %v1467 = vrot.slane %v1348, 5
        %v1468 = vrot.slane %v1467, 4
        %v1469 = vrot.slane %v1349, 5
        %v1470 = vsel %vm1431, %v1468, %v1469
        %v1471 = vrot.slane %v1469, 4
        %v1472 = vrot.slane %v1350, 5
        %v1473 = vsel %vm1431, %v1471, %v1472
        %v1474 = vrot.slane %v1351, 5
        %v1475 = vrot.slane %v1474, 4
        %v1476 = vrot.slane %v1352, 5
        %v1477 = vsel %vm1431, %v1475, %v1476
        %v1478 = vrot.slane %v1476, 4
        %v1479 = vrot.slane %v1353, 5
        %v1480 = vsel %vm1431, %v1478, %v1479
        %v1481 = vrot.slane %v1354, 5
        %v1482 = vrot.slane %v1481, 4
        %v1483 = vrot.slane %v1355, 5
        %v1484 = vsel %vm1431, %v1482, %v1483
        %v1485 = vrot.slane %v1483, 4
        %v1486 = vrot.slane %v1356, 5
        %v1487 = vsel %vm1431, %v1485, %v1486
        %v1488 = vrot.slane %v1357, 5
        %v1489 = vrot.slane %v1488, 4
        %v1490 = vrot.slane %v1358, 5
        %v1491 = vsel %vm1431, %v1489, %v1490
        %v1492 = vrot.slane %v1490, 4
        %v1493 = vrot.slane %v1359, 5
        %v1494 = vsel %vm1431, %v1492, %v1493
        %v1495 = vrot.slane %v1360, 5
        %v1496 = vrot.slane %v1495, 4
        %v1497 = vrot.slane %v1361, 5
        %v1498 = vsel %vm1431, %v1496, %v1497
        %v1499 = vrot.slane %v1497, 4
        %v1500 = vrot.slane %v1362, 5
        %v1501 = vsel %vm1431, %v1499, %v1500
        %v1502 = vrot.slane %v1363, 5
        %v1503 = vrot.slane %v1502, 4
        %v1504 = vrot.slane %v1364, 5
        %v1505 = vsel %vm1431, %v1503, %v1504
        %v1506 = vrot.slane %v1504, 4
        %v1507 = vrot.slane %v1365, 5
        %v1508 = vsel %vm1431, %v1506, %v1507
        %v1509 = vrot.slane %v1366, 5
        %v1510 = vrot.slane %v1509, 4
        %v1511 = vrot.slane %v1367, 5
        %v1512 = vsel %vm1431, %v1510, %v1511
        %v1513 = vrot.slane %v1511, 4
        %v1514 = vrot.slane %v1368, 5
        %v1515 = vsel %vm1431, %v1513, %v1514
        %v1516 = vrot.slane %v1369, 5
        %v1517 = vrot.slane %v1516, 4
        %v1518 = vrot.slane %v1370, 5
        %v1519 = vsel %vm1431, %v1517, %v1518
        %v1520 = vrot.slane %v1518, 4
        %v1521 = vrot.slane %v1371, 5
        %v1522 = vsel %vm1431, %v1520, %v1521
        %v1523 = vrot.slane %v1372, 5
        %v1524 = vrot.slane %v1523, 4
        %v1525 = vrot.slane %v1373, 5
        %v1526 = vsel %vm1431, %v1524, %v1525
        %v1527 = vrot.slane %v1525, 4
        %v1528 = vrot.slane %v1374, 5
        %v1529 = vsel %vm1431, %v1527, %v1528
        %v1530 = vrot.slane %v1375, 5
        %v1531 = vrot.slane %v1530, 4
        %v1532 = vrot.slane %v1376, 5
        %v1533 = vsel %vm1431, %v1531, %v1532
        %v1534 = vrot.slane %v1532, 4
        %v1535 = vrot.slane %v1377, 5
        %v1536 = vsel %vm1431, %v1534, %v1535
        %v1537 = vrot.slane %v1378, 5
        %v1538 = vrot.slane %v1537, 4
        %v1539 = vrot.slane %v1379, 5
        %v1540 = vsel %vm1431, %v1538, %v1539
        %v1541 = vrot.slane %v1539, 4
        %v1542 = vrot.slane %v1380, 5
        %v1543 = vsel %vm1431, %v1541, %v1542
        %s1544 = scalar_lea.vmem %s1, 8
        %v1545 = vld [vmem:[%s1544] sm:$0xf]
        %v1546 = vunpack.c.l.b16 %v1435
        %v1547 = vunpack.c.l.b16 %v1438
        %v1548 = vunpack.c.l.b16 %v1442
        %v1549 = vunpack.c.l.b16 %v1445
        %v1550 = vunpack.c.l.b16 %v1449
        %v1551 = vunpack.c.l.b16 %v1452
        %v1552 = vunpack.c.l.b16 %v1456
        %v1553 = vunpack.c.l.b16 %v1459
        %v1554 = vunpack.c.l.b16 %v1463
        %v1555 = vunpack.c.l.b16 %v1466
        %v1556 = vunpack.c.l.b16 %v1470
        %v1557 = vunpack.c.l.b16 %v1473
        %v1558 = vunpack.c.l.b16 %v1477
        %v1559 = vunpack.c.l.b16 %v1480
        %v1560 = vunpack.c.l.b16 %v1484
        %v1561 = vunpack.c.l.b16 %v1487
        %v1562 = vunpack.c.l.b16 %v1491
        %v1563 = vunpack.c.l.b16 %v1494
        %v1564 = vunpack.c.l.b16 %v1498
        %v1565 = vunpack.c.l.b16 %v1501
        %v1566 = vunpack.c.l.b16 %v1505
        %v1567 = vunpack.c.l.b16 %v1508
        %v1568 = vunpack.c.l.b16 %v1512
        %v1569 = vunpack.c.l.b16 %v1515
        %v1570 = vunpack.c.l.b16 %v1519
        %v1571 = vunpack.c.l.b16 %v1522
        %v1572 = vunpack.c.l.b16 %v1526
        %v1573 = vunpack.c.l.b16 %v1529
        %v1574 = vunpack.c.l.b16 %v1533
        %v1575 = vunpack.c.l.b16 %v1536
        %v1576 = vunpack.c.l.b16 %v1540
        %v1577 = vunpack.c.l.b16 %v1543
        %v1578 = vpack.c.b16 %v1547, %v1546
        %v1579 = vpack.c.b16 %v1549, %v1548
        %v1580 = vpack.c.b16 %v1551, %v1550
        %v1581 = vpack.c.b16 %v1553, %v1552
        %v1582 = vpack.c.b16 %v1555, %v1554
        %v1583 = vpack.c.b16 %v1557, %v1556
        %v1584 = vpack.c.b16 %v1559, %v1558
        %v1585 = vpack.c.b16 %v1561, %v1560
        %v1586 = vpack.c.b16 %v1563, %v1562
        %v1587 = vpack.c.b16 %v1565, %v1564
        %v1588 = vpack.c.b16 %v1567, %v1566
        %v1589 = vpack.c.b16 %v1569, %v1568
        %v1590 = vpack.c.b16 %v1571, %v1570
        %v1591 = vpack.c.b16 %v1573, %v1572
        %v1592 = vpack.c.b16 %v1575, %v1574
        %v1593 = vpack.c.b16 %v1577, %v1576
        %v1595 = vsel %vm294, %v1578, 0
        %v1598 = vsel %vm294, %v1579, 0
        %v1601 = vsel %vm294, %v1580, 0
        %v1604 = vsel %vm294, %v1581, 0
        %v1607 = vsel %vm294, %v1582, 0
        %v1610 = vsel %vm294, %v1583, 0
        %v1613 = vsel %vm294, %v1584, 0
        %v1616 = vsel %vm294, %v1585, 0
        %v1619 = vsel %vm294, %v1586, 0
        %v1622 = vsel %vm294, %v1587, 0
        %v1625 = vsel %vm294, %v1588, 0
        %v1628 = vsel %vm294, %v1589, 0
        %v1631 = vsel %vm294, %v1590, 0
        %v1634 = vsel %vm294, %v1591, 0
        %v1637 = vsel %vm294, %v1592, 0
        %v1640 = vsel %vm294, %v1593, 0
        %v1643 = vsel %vm343, %v1545, 0
        %1645 = vmatprep.subr.bf16.mxu0 0
        %1646 = vmatpush1.bf16.msra.mxu0 %v1643
        %1647 = vmatprep.subr.bf16.mxu0 0
        %1648 = vmatpush1.bf16.msra.mxu0 0
        %1649 = vmatprep.subr.bf16.mxu0 0
        %1650 = vmatpush1.bf16.msra.mxu0 0
        %1651 = vmatprep.subr.bf16.mxu0 0
        %1652 = vmatpush1.bf16.msra.mxu0 0
        %1653 = vmatprep.subr.bf16.mxu0 0
        %1654 = vmatpush1.bf16.msra.mxu0 0
        %1655 = vmatprep.subr.bf16.mxu0 0
        %1656 = vmatpush1.bf16.msra.mxu0 0
        %1657 = vmatprep.subr.bf16.mxu0 0
        %1658 = vmatpush1.bf16.msra.mxu0 0
        %1659 = vmatprep.subr.bf16.mxu0 0
        %1660 = vmatpush1.bf16.msra.mxu0 0
        %1661 = vmatprep.subr.bf16.mxu0 0
        %1662 = vmatpush1.bf16.msra.mxu0 0
        %1663 = vmatprep.subr.bf16.mxu0 0
        %1664 = vmatpush1.bf16.msra.mxu0 0
        %1665 = vmatprep.subr.bf16.mxu0 0
        %1666 = vmatpush1.bf16.msra.mxu0 0
        %1667 = vmatprep.subr.bf16.mxu0 0
        %1668 = vmatpush1.bf16.msra.mxu0 0
        %1669 = vmatprep.subr.bf16.mxu0 0
        %1670 = vmatpush1.bf16.msra.mxu0 0
        %1671 = vmatprep.subr.bf16.mxu0 0
        %1672 = vmatpush1.bf16.msra.mxu0 0
        %1673 = vmatprep.subr.bf16.mxu0 0
        %1674 = vmatpush1.bf16.msra.mxu0 0
        %1675 = vmatprep.subr.bf16.mxu0 0
        %1676 = vmatpush1.bf16.msra.mxu0 0
        %1677 = vmatprep.mubr.bf16.mxu0 0
        %1678 = vmatmul.mubr.bf16.gmra.mrb[0].mxu0 %v1595
        %v1679 = vpop.f32.mrb[0].mxu0
        %v1680 = vadd.f32 0.0, %v1679
        %v1681 = vpop.f32.mrb[0].mxu0
        %v1682 = vpop.f32.mrb[0].mxu0
        %v1683 = vadd.f32 0.0, %v1682
        %v1684 = vpop.f32.mrb[0].mxu0
        %1685 = vmatprep.mubr.bf16.mxu0 0
        %1686 = vmatmul.mubr.bf16.gmra.mrb[0].mxu0 %v1598
        %v1687 = vpop.f32.mrb[0].mxu0
        %v1688 = vadd.f32 0.0, %v1687
        %v1689 = vpop.f32.mrb[0].mxu0
        %v1690 = vpop.f32.mrb[0].mxu0
        %v1691 = vadd.f32 0.0, %v1690
        %v1692 = vpop.f32.mrb[0].mxu0
        %1693 = vmatprep.mubr.bf16.mxu0 0
        %1694 = vmatmul.mubr.bf16.gmra.mrb[0].mxu0 %v1601
        %v1695 = vpop.f32.mrb[0].mxu0
        %v1696 = vadd.f32 0.0, %v1695
        %v1697 = vpop.f32.mrb[0].mxu0
        %v1698 = vpop.f32.mrb[0].mxu0
        %v1699 = vadd.f32 0.0, %v1698
        %v1700 = vpop.f32.mrb[0].mxu0
        %1701 = vmatprep.mubr.bf16.mxu0 0
        %1702 = vmatmul.mubr.bf16.gmra.mrb[0].mxu0 %v1604
        %v1703 = vpop.f32.mrb[0].mxu0
        %v1704 = vadd.f32 0.0, %v1703
        %v1705 = vpop.f32.mrb[0].mxu0
        %v1706 = vpop.f32.mrb[0].mxu0
        %v1707 = vadd.f32 0.0, %v1706
        %v1708 = vpop.f32.mrb[0].mxu0
        %1709 = vmatprep.mubr.bf16.mxu0 0
        %1710 = vmatmul.mubr.bf16.gmra.mrb[0].mxu0 %v1607
        %v1711 = vpop.f32.mrb[0].mxu0
        %v1712 = vadd.f32 0.0, %v1711
        %v1713 = vpop.f32.mrb[0].mxu0
        %v1714 = vpop.f32.mrb[0].mxu0
        %v1715 = vadd.f32 0.0, %v1714
        %v1716 = vpop.f32.mrb[0].mxu0
        %1717 = vmatprep.mubr.bf16.mxu0 0
        %1718 = vmatmul.mubr.bf16.gmra.mrb[0].mxu0 %v1610
        %v1719 = vpop.f32.mrb[0].mxu0
        %v1720 = vadd.f32 0.0, %v1719
        %v1721 = vpop.f32.mrb[0].mxu0
        %v1722 = vpop.f32.mrb[0].mxu0
        %v1723 = vadd.f32 0.0, %v1722
        %v1724 = vpop.f32.mrb[0].mxu0
        %1725 = vmatprep.mubr.bf16.mxu0 0
        %1726 = vmatmul.mubr.bf16.gmra.mrb[0].mxu0 %v1613
        %v1727 = vpop.f32.mrb[0].mxu0
        %v1728 = vadd.f32 0.0, %v1727
        %v1729 = vpop.f32.mrb[0].mxu0
        %v1730 = vpop.f32.mrb[0].mxu0
        %v1731 = vadd.f32 0.0, %v1730
        %v1732 = vpop.f32.mrb[0].mxu0
        %1733 = vmatprep.mubr.bf16.mxu0 0
        %1734 = vmatmul.mubr.bf16.gmra.mrb[0].mxu0 %v1616
        %v1735 = vpop.f32.mrb[0].mxu0
        %v1736 = vadd.f32 0.0, %v1735
        %v1737 = vpop.f32.mrb[0].mxu0
        %v1738 = vpop.f32.mrb[0].mxu0
        %v1739 = vadd.f32 0.0, %v1738
        %v1740 = vpop.f32.mrb[0].mxu0
        %1741 = vmatprep.mubr.bf16.mxu0 0
        %1742 = vmatmul.mubr.bf16.gmra.mrb[0].mxu0 %v1619
        %v1743 = vpop.f32.mrb[0].mxu0
        %v1744 = vadd.f32 0.0, %v1743
        %v1745 = vpop.f32.mrb[0].mxu0
        %v1746 = vpop.f32.mrb[0].mxu0
        %v1747 = vadd.f32 0.0, %v1746
        %v1748 = vpop.f32.mrb[0].mxu0
        %1749 = vmatprep.mubr.bf16.mxu0 0
        %1750 = vmatmul.mubr.bf16.gmra.mrb[0].mxu0 %v1622
        %v1751 = vpop.f32.mrb[0].mxu0
        %v1752 = vadd.f32 0.0, %v1751
        %v1753 = vpop.f32.mrb[0].mxu0
        %v1754 = vpop.f32.mrb[0].mxu0
        %v1755 = vadd.f32 0.0, %v1754
        %v1756 = vpop.f32.mrb[0].mxu0
        %1757 = vmatprep.mubr.bf16.mxu0 0
        %1758 = vmatmul.mubr.bf16.gmra.mrb[0].mxu0 %v1625
        %v1759 = vpop.f32.mrb[0].mxu0
        %v1760 = vadd.f32 0.0, %v1759
        %v1761 = vpop.f32.mrb[0].mxu0
        %v1762 = vpop.f32.mrb[0].mxu0
        %v1763 = vadd.f32 0.0, %v1762
        %v1764 = vpop.f32.mrb[0].mxu0
        %1765 = vmatprep.mubr.bf16.mxu0 0
        %1766 = vmatmul.mubr.bf16.gmra.mrb[0].mxu0 %v1628
        %v1767 = vpop.f32.mrb[0].mxu0
        %v1768 = vadd.f32 0.0, %v1767
        %v1769 = vpop.f32.mrb[0].mxu0
        %v1770 = vpop.f32.mrb[0].mxu0
        %v1771 = vadd.f32 0.0, %v1770
        %v1772 = vpop.f32.mrb[0].mxu0
        %1773 = vmatprep.mubr.bf16.mxu0 0
        %1774 = vmatmul.mubr.bf16.gmra.mrb[0].mxu0 %v1631
        %v1775 = vpop.f32.mrb[0].mxu0
        %v1776 = vadd.f32 0.0, %v1775
        %v1777 = vpop.f32.mrb[0].mxu0
        %v1778 = vpop.f32.mrb[0].mxu0
        %v1779 = vadd.f32 0.0, %v1778
        %v1780 = vpop.f32.mrb[0].mxu0
        %1781 = vmatprep.mubr.bf16.mxu0 0
        %1782 = vmatmul.mubr.bf16.gmra.mrb[0].mxu0 %v1634
        %v1783 = vpop.f32.mrb[0].mxu0
        %v1784 = vadd.f32 0.0, %v1783
        %v1785 = vpop.f32.mrb[0].mxu0
        %v1786 = vpop.f32.mrb[0].mxu0
        %v1787 = vadd.f32 0.0, %v1786
        %v1788 = vpop.f32.mrb[0].mxu0
        %1789 = vmatprep.mubr.bf16.mxu0 0
        %1790 = vmatmul.mubr.bf16.gmra.mrb[0].mxu0 %v1637
        %v1791 = vpop.f32.mrb[0].mxu0
        %v1792 = vadd.f32 0.0, %v1791
        %v1793 = vpop.f32.mrb[0].mxu0
        %v1794 = vpop.f32.mrb[0].mxu0
        %v1795 = vadd.f32 0.0, %v1794
        %v1796 = vpop.f32.mrb[0].mxu0
        %1797 = vmatprep.mubr.bf16.mxu0 0
        %1798 = vmatmul.mubr.bf16.gmra.mrb[0].mxu0 %v1640
        %v1799 = vpop.f32.mrb[0].mxu0
        %v1800 = vadd.f32 0.0, %v1799
        %v1801 = vpop.f32.mrb[0].mxu0
        %v1802 = vpop.f32.mrb[0].mxu0
        %v1803 = vadd.f32 0.0, %v1802
        %v1804 = vpop.f32.mrb[0].mxu0
        %1805 = vdwg.mxu0
        %v1806 = vld [vmem:[#allocation2] sm:$0xff]
        %v1807 = vld [vmem:[#allocation2 + $0x8] sm:$0xff]
        %v1808 = vld [vmem:[#allocation2 + $0x10] sm:$0xff]
        %v1809 = vld [vmem:[#allocation2 + $0x18] sm:$0xff]
        %v1810 = vld [vmem:[#allocation2 + $0x20] sm:$0xff]
        %v1811 = vld [vmem:[#allocation2 + $0x28] sm:$0xff]
        %v1812 = vld [vmem:[#allocation2 + $0x30] sm:$0xff]
        %v1813 = vld [vmem:[#allocation2 + $0x38] sm:$0xff]
        %v1814 = vld [vmem:[#allocation2 + $0x40] sm:$0xff]
        %v1815 = vld [vmem:[#allocation2 + $0x48] sm:$0xff]
        %v1816 = vld [vmem:[#allocation2 + $0x50] sm:$0xff]
        %v1817 = vld [vmem:[#allocation2 + $0x58] sm:$0xff]
        %v1818 = vld [vmem:[#allocation2 + $0x60] sm:$0xff]
        %v1819 = vld [vmem:[#allocation2 + $0x68] sm:$0xff]
        %v1820 = vld [vmem:[#allocation2 + $0x70] sm:$0xff]
        %v1821 = vld [vmem:[#allocation2 + $0x78] sm:$0xff]
        %v1822 = vld [vmem:[#allocation2 + $0x80] sm:$0xff]
        %v1823 = vld [vmem:[#allocation2 + $0x88] sm:$0xff]
        %v1824 = vld [vmem:[#allocation2 + $0x90] sm:$0xff]
        %v1825 = vld [vmem:[#allocation2 + $0x98] sm:$0xff]
        %v1826 = vld [vmem:[#allocation2 + $0xa0] sm:$0xff]
        %v1827 = vld [vmem:[#allocation2 + $0xa8] sm:$0xff]
        %v1828 = vld [vmem:[#allocation2 + $0xb0] sm:$0xff]
        %v1829 = vld [vmem:[#allocation2 + $0xb8] sm:$0xff]
        %v1830 = vld [vmem:[#allocation2 + $0xc0] sm:$0xff]
        %v1831 = vld [vmem:[#allocation2 + $0xc8] sm:$0xff]
        %v1832 = vld [vmem:[#allocation2 + $0xd0] sm:$0xff]
        %v1833 = vld [vmem:[#allocation2 + $0xd8] sm:$0xff]
        %v1834 = vld [vmem:[#allocation2 + $0xe0] sm:$0xff]
        %v1835 = vld [vmem:[#allocation2 + $0xe8] sm:$0xff]
        %v1836 = vld [vmem:[#allocation2 + $0xf0] sm:$0xff]
        %v1837 = vld [vmem:[#allocation2 + $0xf8] sm:$0xff]
        %v1838 = vadd.f32 %v1806, %v1680
        %v1839 = vadd.f32 %v1807, %v1683
        %v1840 = vadd.f32 %v1808, %v1688
        %v1841 = vadd.f32 %v1809, %v1691
        %v1842 = vadd.f32 %v1810, %v1696
        %v1843 = vadd.f32 %v1811, %v1699
        %v1844 = vadd.f32 %v1812, %v1704
        %v1845 = vadd.f32 %v1813, %v1707
        %v1846 = vadd.f32 %v1814, %v1712
        %v1847 = vadd.f32 %v1815, %v1715
        %v1848 = vadd.f32 %v1816, %v1720
        %v1849 = vadd.f32 %v1817, %v1723
        %v1850 = vadd.f32 %v1818, %v1728
        %v1851 = vadd.f32 %v1819, %v1731
        %v1852 = vadd.f32 %v1820, %v1736
        %v1853 = vadd.f32 %v1821, %v1739
        %v1854 = vadd.f32 %v1822, %v1744
        %v1855 = vadd.f32 %v1823, %v1747
        %v1856 = vadd.f32 %v1824, %v1752
        %v1857 = vadd.f32 %v1825, %v1755
        %v1858 = vadd.f32 %v1826, %v1760
        %v1859 = vadd.f32 %v1827, %v1763
        %v1860 = vadd.f32 %v1828, %v1768
        %v1861 = vadd.f32 %v1829, %v1771
        %v1862 = vadd.f32 %v1830, %v1776
        %v1863 = vadd.f32 %v1831, %v1779
        %v1864 = vadd.f32 %v1832, %v1784
        %v1865 = vadd.f32 %v1833, %v1787
        %v1866 = vadd.f32 %v1834, %v1792
        %v1867 = vadd.f32 %v1835, %v1795
        %v1868 = vadd.f32 %v1836, %v1800
        %v1869 = vadd.f32 %v1837, %v1803
        %1870 = vst [vmem:[#allocation2] sm:$0xff] %v1838
        %1871 = vst [vmem:[#allocation2 + $0x8] sm:$0xff] %v1839
        %1872 = vst [vmem:[#allocation2 + $0x10] sm:$0xff] %v1840
        %1873 = vst [vmem:[#allocation2 + $0x18] sm:$0xff] %v1841
        %1874 = vst [vmem:[#allocation2 + $0x20] sm:$0xff] %v1842
        %1875 = vst [vmem:[#allocation2 + $0x28] sm:$0xff] %v1843
        %1876 = vst [vmem:[#allocation2 + $0x30] sm:$0xff] %v1844
        %1877 = vst [vmem:[#allocation2 + $0x38] sm:$0xff] %v1845
        %1878 = vst [vmem:[#allocation2 + $0x40] sm:$0xff] %v1846
        %1879 = vst [vmem:[#allocation2 + $0x48] sm:$0xff] %v1847
        %1880 = vst [vmem:[#allocation2 + $0x50] sm:$0xff] %v1848
        %1881 = vst [vmem:[#allocation2 + $0x58] sm:$0xff] %v1849
        %1882 = vst [vmem:[#allocation2 + $0x60] sm:$0xff] %v1850
        %1883 = vst [vmem:[#allocation2 + $0x68] sm:$0xff] %v1851
        %1884 = vst [vmem:[#allocation2 + $0x70] sm:$0xff] %v1852
        %1885 = vst [vmem:[#allocation2 + $0x78] sm:$0xff] %v1853
        %1886 = vst [vmem:[#allocation2 + $0x80] sm:$0xff] %v1854
        %1887 = vst [vmem:[#allocation2 + $0x88] sm:$0xff] %v1855
        %1888 = vst [vmem:[#allocation2 + $0x90] sm:$0xff] %v1856
        %1889 = vst [vmem:[#allocation2 + $0x98] sm:$0xff] %v1857
        %1890 = vst [vmem:[#allocation2 + $0xa0] sm:$0xff] %v1858
        %1891 = vst [vmem:[#allocation2 + $0xa8] sm:$0xff] %v1859
        %1892 = vst [vmem:[#allocation2 + $0xb0] sm:$0xff] %v1860
        %1893 = vst [vmem:[#allocation2 + $0xb8] sm:$0xff] %v1861
        %1894 = vst [vmem:[#allocation2 + $0xc0] sm:$0xff] %v1862
        %1895 = vst [vmem:[#allocation2 + $0xc8] sm:$0xff] %v1863
        %1896 = vst [vmem:[#allocation2 + $0xd0] sm:$0xff] %v1864
        %1897 = vst [vmem:[#allocation2 + $0xd8] sm:$0xff] %v1865
        %1898 = vst [vmem:[#allocation2 + $0xe0] sm:$0xff] %v1866
        %1899 = vst [vmem:[#allocation2 + $0xe8] sm:$0xff] %v1867
        %1900 = vst [vmem:[#allocation2 + $0xf0] sm:$0xff] %v1868
        %1901 = vst [vmem:[#allocation2 + $0xf8] sm:$0xff] %v1869
        %s1902 = scalar_lea.vmem %s179, 12
        %v1903 = vld [vmem:[%s1902] sm:$0xf]
        %v1904 = vld [vmem:[%s1902 + $0x4] sm:$0xf]
        %v1905 = vld [vmem:[%s1902 + $0xc] sm:$0xf]
        %v1906 = vld [vmem:[%s1902 + $0x10] sm:$0xf]
        %v1907 = vld [vmem:[%s1902 + $0x18] sm:$0xf]
        %v1908 = vld [vmem:[%s1902 + $0x1c] sm:$0xf]
        %v1909 = vld [vmem:[%s1902 + $0x24] sm:$0xf]
        %v1910 = vld [vmem:[%s1902 + $0x28] sm:$0xf]
        %v1911 = vld [vmem:[%s1902 + $0x30] sm:$0xf]
        %v1912 = vld [vmem:[%s1902 + $0x34] sm:$0xf]
        %v1913 = vld [vmem:[%s1902 + $0x3c] sm:$0xf]
        %v1914 = vld [vmem:[%s1902 + $0x40] sm:$0xf]
        %v1915 = vld [vmem:[%s1902 + $0x48] sm:$0xf]
        %v1916 = vld [vmem:[%s1902 + $0x4c] sm:$0xf]
        %v1917 = vld [vmem:[%s1902 + $0x54] sm:$0xf]
        %v1918 = vld [vmem:[%s1902 + $0x58] sm:$0xf]
        %v1919 = vld [vmem:[%s1902 + $0x60] sm:$0xf]
        %v1920 = vld [vmem:[%s1902 + $0x64] sm:$0xf]
        %v1921 = vld [vmem:[%s1902 + $0x6c] sm:$0xf]
        %v1922 = vld [vmem:[%s1902 + $0x70] sm:$0xf]
        %v1923 = vld [vmem:[%s1902 + $0x78] sm:$0xf]
        %v1924 = vld [vmem:[%s1902 + $0x7c] sm:$0xf]
        %v1925 = vld [vmem:[%s1902 + $0x84] sm:$0xf]
        %v1926 = vld [vmem:[%s1902 + $0x88] sm:$0xf]
        %v1927 = vld [vmem:[%s1902 + $0x90] sm:$0xf]
        %v1928 = vld [vmem:[%s1902 + $0x94] sm:$0xf]
        %v1929 = vld [vmem:[%s1902 + $0x9c] sm:$0xf]
        %v1930 = vld [vmem:[%s1902 + $0xa0] sm:$0xf]
        %v1931 = vld [vmem:[%s1902 + $0xa8] sm:$0xf]
        %v1932 = vld [vmem:[%s1902 + $0xac] sm:$0xf]
        %v1933 = vld [vmem:[%s1902 + $0xb4] sm:$0xf]
        %v1934 = vld [vmem:[%s1902 + $0xb8] sm:$0xf]
        %s1935 = scalar_lea.vmem %s1, 12
        %v1936 = vld [vmem:[%s1935] sm:$0xf]
        %v1969 = vunpack.c.l.b16 %v1903
        %v1970 = vunpack.c.l.b16 %v1904
        %v1971 = vunpack.c.l.b16 %v1905
        %v1972 = vunpack.c.l.b16 %v1906
        %v1973 = vunpack.c.l.b16 %v1907
        %v1974 = vunpack.c.l.b16 %v1908
        %v1975 = vunpack.c.l.b16 %v1909
        %v1976 = vunpack.c.l.b16 %v1910
        %v1977 = vunpack.c.l.b16 %v1911
        %v1978 = vunpack.c.l.b16 %v1912
        %v1979 = vunpack.c.l.b16 %v1913
        %v1980 = vunpack.c.l.b16 %v1914
        %v1981 = vunpack.c.l.b16 %v1915
        %v1982 = vunpack.c.l.b16 %v1916
        %v1983 = vunpack.c.l.b16 %v1917
        %v1984 = vunpack.c.l.b16 %v1918
        %v1985 = vunpack.c.l.b16 %v1919
        %v1986 = vunpack.c.l.b16 %v1920
        %v1987 = vunpack.c.l.b16 %v1921
        %v1988 = vunpack.c.l.b16 %v1922
        %v1989 = vunpack.c.l.b16 %v1923
        %v1990 = vunpack.c.l.b16 %v1924
        %v1991 = vunpack.c.l.b16 %v1925
        %v1992 = vunpack.c.l.b16 %v1926
        %v1993 = vunpack.c.l.b16 %v1927
        %v1994 = vunpack.c.l.b16 %v1928
        %v1995 = vunpack.c.l.b16 %v1929
        %v1996 = vunpack.c.l.b16 %v1930
        %v1997 = vunpack.c.l.b16 %v1931
        %v1998 = vunpack.c.l.b16 %v1932
        %v1999 = vunpack.c.l.b16 %v1933
        %v2000 = vunpack.c.l.b16 %v1934
        %v2001 = vpack.c.b16 %v1970, %v1969
        %v2002 = vpack.c.b16 %v1972, %v1971
        %v2003 = vpack.c.b16 %v1974, %v1973
        %v2004 = vpack.c.b16 %v1976, %v1975
        %v2005 = vpack.c.b16 %v1978, %v1977
        %v2006 = vpack.c.b16 %v1980, %v1979
        %v2007 = vpack.c.b16 %v1982, %v1981
        %v2008 = vpack.c.b16 %v1984, %v1983
        %v2009 = vpack.c.b16 %v1986, %v1985
        %v2010 = vpack.c.b16 %v1988, %v1987
        %v2011 = vpack.c.b16 %v1990, %v1989
        %v2012 = vpack.c.b16 %v1992, %v1991
        %v2013 = vpack.c.b16 %v1994, %v1993
        %v2014 = vpack.c.b16 %v1996, %v1995
        %v2015 = vpack.c.b16 %v1998, %v1997
        %v2016 = vpack.c.b16 %v2000, %v1999
        %v2018 = vsel %vm294, %v2001, 0
        %v2021 = vsel %vm294, %v2002, 0
        %v2024 = vsel %vm294, %v2003, 0
        %v2027 = vsel %vm294, %v2004, 0
        %v2030 = vsel %vm294, %v2005, 0
        %v2033 = vsel %vm294, %v2006, 0
        %v2036 = vsel %vm294, %v2007, 0
        %v2039 = vsel %vm294, %v2008, 0
        %v2042 = vsel %vm294, %v2009, 0
        %v2045 = vsel %vm294, %v2010, 0
        %v2048 = vsel %vm294, %v2011, 0
        %v2051 = vsel %vm294, %v2012, 0
        %v2054 = vsel %vm294, %v2013, 0
        %v2057 = vsel %vm294, %v2014, 0
        %v2060 = vsel %vm294, %v2015, 0
        %v2063 = vsel %vm294, %v2016, 0
        %v2066 = vsel %vm343, %v1936, 0
        %2068 = vmatprep.subr.bf16.mxu0 0
        %2069 = vmatpush1.bf16.msra.mxu0 %v2066
        %2070 = vmatprep.subr.bf16.mxu0 0
        %2071 = vmatpush1.bf16.msra.mxu0 0
        %2072 = vmatprep.subr.bf16.mxu0 0
        %2073 = vmatpush1.bf16.msra.mxu0 0
        %2074 = vmatprep.subr.bf16.mxu0 0
        %2075 = vmatpush1.bf16.msra.mxu0 0
        %2076 = vmatprep.subr.bf16.mxu0 0
        %2077 = vmatpush1.bf16.msra.mxu0 0
        %2078 = vmatprep.subr.bf16.mxu0 0
        %2079 = vmatpush1.bf16.msra.mxu0 0
        %2080 = vmatprep.subr.bf16.mxu0 0
        %2081 = vmatpush1.bf16.msra.mxu0 0
        %2082 = vmatprep.subr.bf16.mxu0 0
        %2083 = vmatpush1.bf16.msra.mxu0 0
        %2084 = vmatprep.subr.bf16.mxu0 0
        %2085 = vmatpush1.bf16.msra.mxu0 0
        %2086 = vmatprep.subr.bf16.mxu0 0
        %2087 = vmatpush1.bf16.msra.mxu0 0
        %2088 = vmatprep.subr.bf16.mxu0 0
        %2089 = vmatpush1.bf16.msra.mxu0 0
        %2090 = vmatprep.subr.bf16.mxu0 0
        %2091 = vmatpush1.bf16.msra.mxu0 0
        %2092 = vmatprep.subr.bf16.mxu0 0
        %2093 = vmatpush1.bf16.msra.mxu0 0
        %2094 = vmatprep.subr.bf16.mxu0 0
        %2095 = vmatpush1.bf16.msra.mxu0 0
        %2096 = vmatprep.subr.bf16.mxu0 0
        %2097 = vmatpush1.bf16.msra.mxu0 0
        %2098 = vmatprep.subr.bf16.mxu0 0
        %2099 = vmatpush1.bf16.msra.mxu0 0
        %2100 = vmatprep.mubr.bf16.mxu0 0
        %2101 = vmatmul.mubr.bf16.gmra.mrb[0].mxu0 %v2018
        %v2102 = vpop.f32.mrb[0].mxu0
        %v2103 = vadd.f32 0.0, %v2102
        %v2104 = vpop.f32.mrb[0].mxu0
        %v2105 = vpop.f32.mrb[0].mxu0
        %v2106 = vadd.f32 0.0, %v2105
        %v2107 = vpop.f32.mrb[0].mxu0
        %2108 = vmatprep.mubr.bf16.mxu0 0
        %2109 = vmatmul.mubr.bf16.gmra.mrb[0].mxu0 %v2021
        %v2110 = vpop.f32.mrb[0].mxu0
        %v2111 = vadd.f32 0.0, %v2110
        %v2112 = vpop.f32.mrb[0].mxu0
        %v2113 = vpop.f32.mrb[0].mxu0
        %v2114 = vadd.f32 0.0, %v2113
        %v2115 = vpop.f32.mrb[0].mxu0
        %2116 = vmatprep.mubr.bf16.mxu0 0
        %2117 = vmatmul.mubr.bf16.gmra.mrb[0].mxu0 %v2024
        %v2118 = vpop.f32.mrb[0].mxu0
        %v2119 = vadd.f32 0.0, %v2118
        %v2120 = vpop.f32.mrb[0].mxu0
        %v2121 = vpop.f32.mrb[0].mxu0
        %v2122 = vadd.f32 0.0, %v2121
        %v2123 = vpop.f32.mrb[0].mxu0
        %2124 = vmatprep.mubr.bf16.mxu0 0
        %2125 = vmatmul.mubr.bf16.gmra.mrb[0].mxu0 %v2027
        %v2126 = vpop.f32.mrb[0].mxu0
        %v2127 = vadd.f32 0.0, %v2126
        %v2128 = vpop.f32.mrb[0].mxu0
        %v2129 = vpop.f32.mrb[0].mxu0
        %v2130 = vadd.f32 0.0, %v2129
        %v2131 = vpop.f32.mrb[0].mxu0
        %2132 = vmatprep.mubr.bf16.mxu0 0
        %2133 = vmatmul.mubr.bf16.gmra.mrb[0].mxu0 %v2030
        %v2134 = vpop.f32.mrb[0].mxu0
        %v2135 = vadd.f32 0.0, %v2134
        %v2136 = vpop.f32.mrb[0].mxu0
        %v2137 = vpop.f32.mrb[0].mxu0
        %v2138 = vadd.f32 0.0, %v2137
        %v2139 = vpop.f32.mrb[0].mxu0
        %2140 = vmatprep.mubr.bf16.mxu0 0
        %2141 = vmatmul.mubr.bf16.gmra.mrb[0].mxu0 %v2033
        %v2142 = vpop.f32.mrb[0].mxu0
        %v2143 = vadd.f32 0.0, %v2142
        %v2144 = vpop.f32.mrb[0].mxu0
        %v2145 = vpop.f32.mrb[0].mxu0
        %v2146 = vadd.f32 0.0, %v2145
        %v2147 = vpop.f32.mrb[0].mxu0
        %2148 = vmatprep.mubr.bf16.mxu0 0
        %2149 = vmatmul.mubr.bf16.gmra.mrb[0].mxu0 %v2036
        %v2150 = vpop.f32.mrb[0].mxu0
        %v2151 = vadd.f32 0.0, %v2150
        %v2152 = vpop.f32.mrb[0].mxu0
        %v2153 = vpop.f32.mrb[0].mxu0
        %v2154 = vadd.f32 0.0, %v2153
        %v2155 = vpop.f32.mrb[0].mxu0
        %2156 = vmatprep.mubr.bf16.mxu0 0
        %2157 = vmatmul.mubr.bf16.gmra.mrb[0].mxu0 %v2039
        %v2158 = vpop.f32.mrb[0].mxu0
        %v2159 = vadd.f32 0.0, %v2158
        %v2160 = vpop.f32.mrb[0].mxu0
        %v2161 = vpop.f32.mrb[0].mxu0
        %v2162 = vadd.f32 0.0, %v2161
        %v2163 = vpop.f32.mrb[0].mxu0
        %2164 = vmatprep.mubr.bf16.mxu0 0
        %2165 = vmatmul.mubr.bf16.gmra.mrb[0].mxu0 %v2042
        %v2166 = vpop.f32.mrb[0].mxu0
        %v2167 = vadd.f32 0.0, %v2166
        %v2168 = vpop.f32.mrb[0].mxu0
        %v2169 = vpop.f32.mrb[0].mxu0
        %v2170 = vadd.f32 0.0, %v2169
        %v2171 = vpop.f32.mrb[0].mxu0
        %2172 = vmatprep.mubr.bf16.mxu0 0
        %2173 = vmatmul.mubr.bf16.gmra.mrb[0].mxu0 %v2045
        %v2174 = vpop.f32.mrb[0].mxu0
        %v2175 = vadd.f32 0.0, %v2174
        %v2176 = vpop.f32.mrb[0].mxu0
        %v2177 = vpop.f32.mrb[0].mxu0
        %v2178 = vadd.f32 0.0, %v2177
        %v2179 = vpop.f32.mrb[0].mxu0
        %2180 = vmatprep.mubr.bf16.mxu0 0
        %2181 = vmatmul.mubr.bf16.gmra.mrb[0].mxu0 %v2048
        %v2182 = vpop.f32.mrb[0].mxu0
        %v2183 = vadd.f32 0.0, %v2182
        %v2184 = vpop.f32.mrb[0].mxu0
        %v2185 = vpop.f32.mrb[0].mxu0
        %v2186 = vadd.f32 0.0, %v2185
        %v2187 = vpop.f32.mrb[0].mxu0
        %2188 = vmatprep.mubr.bf16.mxu0 0
        %2189 = vmatmul.mubr.bf16.gmra.mrb[0].mxu0 %v2051
        %v2190 = vpop.f32.mrb[0].mxu0
        %v2191 = vadd.f32 0.0, %v2190
        %v2192 = vpop.f32.mrb[0].mxu0
        %v2193 = vpop.f32.mrb[0].mxu0
        %v2194 = vadd.f32 0.0, %v2193
        %v2195 = vpop.f32.mrb[0].mxu0
        %2196 = vmatprep.mubr.bf16.mxu0 0
        %2197 = vmatmul.mubr.bf16.gmra.mrb[0].mxu0 %v2054
        %v2198 = vpop.f32.mrb[0].mxu0
        %v2199 = vadd.f32 0.0, %v2198
        %v2200 = vpop.f32.mrb[0].mxu0
        %v2201 = vpop.f32.mrb[0].mxu0
        %v2202 = vadd.f32 0.0, %v2201
        %v2203 = vpop.f32.mrb[0].mxu0
        %2204 = vmatprep.mubr.bf16.mxu0 0
        %2205 = vmatmul.mubr.bf16.gmra.mrb[0].mxu0 %v2057
        %v2206 = vpop.f32.mrb[0].mxu0
        %v2207 = vadd.f32 0.0, %v2206
        %v2208 = vpop.f32.mrb[0].mxu0
        %v2209 = vpop.f32.mrb[0].mxu0
        %v2210 = vadd.f32 0.0, %v2209
        %v2211 = vpop.f32.mrb[0].mxu0
        %2212 = vmatprep.mubr.bf16.mxu0 0
        %2213 = vmatmul.mubr.bf16.gmra.mrb[0].mxu0 %v2060
        %v2214 = vpop.f32.mrb[0].mxu0
        %v2215 = vadd.f32 0.0, %v2214
        %v2216 = vpop.f32.mrb[0].mxu0
        %v2217 = vpop.f32.mrb[0].mxu0
        %v2218 = vadd.f32 0.0, %v2217
        %v2219 = vpop.f32.mrb[0].mxu0
        %2220 = vmatprep.mubr.bf16.mxu0 0
        %2221 = vmatmul.mubr.bf16.gmra.mrb[0].mxu0 %v2063
        %v2222 = vpop.f32.mrb[0].mxu0
        %v2223 = vadd.f32 0.0, %v2222
        %v2224 = vpop.f32.mrb[0].mxu0
        %v2225 = vpop.f32.mrb[0].mxu0
        %v2226 = vadd.f32 0.0, %v2225
        %v2227 = vpop.f32.mrb[0].mxu0
        %2228 = vdwg.mxu0
        %v2229 = vld [vmem:[#allocation2] sm:$0xff]
        %v2230 = vld [vmem:[#allocation2 + $0x8] sm:$0xff]
        %v2231 = vld [vmem:[#allocation2 + $0x10] sm:$0xff]
        %v2232 = vld [vmem:[#allocation2 + $0x18] sm:$0xff]
        %v2233 = vld [vmem:[#allocation2 + $0x20] sm:$0xff]
        %v2234 = vld [vmem:[#allocation2 + $0x28] sm:$0xff]
        %v2235 = vld [vmem:[#allocation2 + $0x30] sm:$0xff]
        %v2236 = vld [vmem:[#allocation2 + $0x38] sm:$0xff]
        %v2237 = vld [vmem:[#allocation2 + $0x40] sm:$0xff]
        %v2238 = vld [vmem:[#allocation2 + $0x48] sm:$0xff]
        %v2239 = vld [vmem:[#allocation2 + $0x50] sm:$0xff]
        %v2240 = vld [vmem:[#allocation2 + $0x58] sm:$0xff]
        %v2241 = vld [vmem:[#allocation2 + $0x60] sm:$0xff]
        %v2242 = vld [vmem:[#allocation2 + $0x68] sm:$0xff]
        %v2243 = vld [vmem:[#allocation2 + $0x70] sm:$0xff]
        %v2244 = vld [vmem:[#allocation2 + $0x78] sm:$0xff]
        %v2245 = vld [vmem:[#allocation2 + $0x80] sm:$0xff]
        %v2246 = vld [vmem:[#allocation2 + $0x88] sm:$0xff]
        %v2247 = vld [vmem:[#allocation2 + $0x90] sm:$0xff]
        %v2248 = vld [vmem:[#allocation2 + $0x98] sm:$0xff]
        %v2249 = vld [vmem:[#allocation2 + $0xa0] sm:$0xff]
        %v2250 = vld [vmem:[#allocation2 + $0xa8] sm:$0xff]
        %v2251 = vld [vmem:[#allocation2 + $0xb0] sm:$0xff]
        %v2252 = vld [vmem:[#allocation2 + $0xb8] sm:$0xff]
        %v2253 = vld [vmem:[#allocation2 + $0xc0] sm:$0xff]
        %v2254 = vld [vmem:[#allocation2 + $0xc8] sm:$0xff]
        %v2255 = vld [vmem:[#allocation2 + $0xd0] sm:$0xff]
        %v2256 = vld [vmem:[#allocation2 + $0xd8] sm:$0xff]
        %v2257 = vld [vmem:[#allocation2 + $0xe0] sm:$0xff]
        %v2258 = vld [vmem:[#allocation2 + $0xe8] sm:$0xff]
        %v2259 = vld [vmem:[#allocation2 + $0xf0] sm:$0xff]
        %v2260 = vld [vmem:[#allocation2 + $0xf8] sm:$0xff]
        %v2261 = vadd.f32 %v2229, %v2103
        %v2262 = vadd.f32 %v2230, %v2106
        %v2263 = vadd.f32 %v2231, %v2111
        %v2264 = vadd.f32 %v2232, %v2114
        %v2265 = vadd.f32 %v2233, %v2119
        %v2266 = vadd.f32 %v2234, %v2122
        %v2267 = vadd.f32 %v2235, %v2127
        %v2268 = vadd.f32 %v2236, %v2130
        %v2269 = vadd.f32 %v2237, %v2135
        %v2270 = vadd.f32 %v2238, %v2138
        %v2271 = vadd.f32 %v2239, %v2143
        %v2272 = vadd.f32 %v2240, %v2146
        %v2273 = vadd.f32 %v2241, %v2151
        %v2274 = vadd.f32 %v2242, %v2154
        %v2275 = vadd.f32 %v2243, %v2159
        %v2276 = vadd.f32 %v2244, %v2162
        %v2277 = vadd.f32 %v2245, %v2167
        %v2278 = vadd.f32 %v2246, %v2170
        %v2279 = vadd.f32 %v2247, %v2175
        %v2280 = vadd.f32 %v2248, %v2178
        %v2281 = vadd.f32 %v2249, %v2183
        %v2282 = vadd.f32 %v2250, %v2186
        %v2283 = vadd.f32 %v2251, %v2191
        %v2284 = vadd.f32 %v2252, %v2194
        %v2285 = vadd.f32 %v2253, %v2199
        %v2286 = vadd.f32 %v2254, %v2202
        %v2287 = vadd.f32 %v2255, %v2207
        %v2288 = vadd.f32 %v2256, %v2210
        %v2289 = vadd.f32 %v2257, %v2215
        %v2290 = vadd.f32 %v2258, %v2218
        %v2291 = vadd.f32 %v2259, %v2223
        %v2292 = vadd.f32 %v2260, %v2226
        %2293 = vst [vmem:[#allocation2] sm:$0xff] %v2261
        %2294 = vst [vmem:[#allocation2 + $0x8] sm:$0xff] %v2262
        %2295 = vst [vmem:[#allocation2 + $0x10] sm:$0xff] %v2263
        %2296 = vst [vmem:[#allocation2 + $0x18] sm:$0xff] %v2264
        %2297 = vst [vmem:[#allocation2 + $0x20] sm:$0xff] %v2265
        %2298 = vst [vmem:[#allocation2 + $0x28] sm:$0xff] %v2266
        %2299 = vst [vmem:[#allocation2 + $0x30] sm:$0xff] %v2267
        %2300 = vst [vmem:[#allocation2 + $0x38] sm:$0xff] %v2268
        %2301 = vst [vmem:[#allocation2 + $0x40] sm:$0xff] %v2269
        %2302 = vst [vmem:[#allocation2 + $0x48] sm:$0xff] %v2270
        %2303 = vst [vmem:[#allocation2 + $0x50] sm:$0xff] %v2271
        %2304 = vst [vmem:[#allocation2 + $0x58] sm:$0xff] %v2272
        %2305 = vst [vmem:[#allocation2 + $0x60] sm:$0xff] %v2273
        %2306 = vst [vmem:[#allocation2 + $0x68] sm:$0xff] %v2274
        %2307 = vst [vmem:[#allocation2 + $0x70] sm:$0xff] %v2275
        %2308 = vst [vmem:[#allocation2 + $0x78] sm:$0xff] %v2276
        %2309 = vst [vmem:[#allocation2 + $0x80] sm:$0xff] %v2277
        %2310 = vst [vmem:[#allocation2 + $0x88] sm:$0xff] %v2278
        %2311 = vst [vmem:[#allocation2 + $0x90] sm:$0xff] %v2279
        %2312 = vst [vmem:[#allocation2 + $0x98] sm:$0xff] %v2280
        %2313 = vst [vmem:[#allocation2 + $0xa0] sm:$0xff] %v2281
        %2314 = vst [vmem:[#allocation2 + $0xa8] sm:$0xff] %v2282
        %2315 = vst [vmem:[#allocation2 + $0xb0] sm:$0xff] %v2283
        %2316 = vst [vmem:[#allocation2 + $0xb8] sm:$0xff] %v2284
        %2317 = vst [vmem:[#allocation2 + $0xc0] sm:$0xff] %v2285
        %2318 = vst [vmem:[#allocation2 + $0xc8] sm:$0xff] %v2286
        %2319 = vst [vmem:[#allocation2 + $0xd0] sm:$0xff] %v2287
        %2320 = vst [vmem:[#allocation2 + $0xd8] sm:$0xff] %v2288
        %2321 = vst [vmem:[#allocation2 + $0xe0] sm:$0xff] %v2289
        %2322 = vst [vmem:[#allocation2 + $0xe8] sm:$0xff] %v2290
        %2323 = vst [vmem:[#allocation2 + $0xf0] sm:$0xff] %v2291
        %2324 = vst [vmem:[#allocation2 + $0xf8] sm:$0xff] %v2292
        %v2325 = vld [vmem:[%s1902] sm:$0xf]
        %v2326 = vld [vmem:[%s1902 + $0x4] sm:$0xf]
        %v2327 = vld [vmem:[%s1902 + $0x8] sm:$0x1]
        %v2328 = vld [vmem:[%s1902 + $0xc] sm:$0xf]
        %v2329 = vld [vmem:[%s1902 + $0x10] sm:$0xf]
        %v2330 = vld [vmem:[%s1902 + $0x14] sm:$0x1]
        %v2331 = vld [vmem:[%s1902 + $0x18] sm:$0xf]
        %v2332 = vld [vmem:[%s1902 + $0x1c] sm:$0xf]
        %v2333 = vld [vmem:[%s1902 + $0x20] sm:$0x1]
        %v2334 = vld [vmem:[%s1902 + $0x24] sm:$0xf]
        %v2335 = vld [vmem:[%s1902 + $0x28] sm:$0xf]
        %v2336 = vld [vmem:[%s1902 + $0x2c] sm:$0x1]
        %v2337 = vld [vmem:[%s1902 + $0x30] sm:$0xf]
        %v2338 = vld [vmem:[%s1902 + $0x34] sm:$0xf]
        %v2339 = vld [vmem:[%s1902 + $0x38] sm:$0x1]
        %v2340 = vld [vmem:[%s1902 + $0x3c] sm:$0xf]
        %v2341 = vld [vmem:[%s1902 + $0x40] sm:$0xf]
        %v2342 = vld [vmem:[%s1902 + $0x44] sm:$0x1]
        %v2343 = vld [vmem:[%s1902 + $0x48] sm:$0xf]
        %v2344 = vld [vmem:[%s1902 + $0x4c] sm:$0xf]
        %v2345 = vld [vmem:[%s1902 + $0x50] sm:$0x1]
        %v2346 = vld [vmem:[%s1902 + $0x54] sm:$0xf]
        %v2347 = vld [vmem:[%s1902 + $0x58] sm:$0xf]
        %v2348 = vld [vmem:[%s1902 + $0x5c] sm:$0x1]
        %v2349 = vld [vmem:[%s1902 + $0x60] sm:$0xf]
        %v2350 = vld [vmem:[%s1902 + $0x64] sm:$0xf]
        %v2351 = vld [vmem:[%s1902 + $0x68] sm:$0x1]
        %v2352 = vld [vmem:[%s1902 + $0x6c] sm:$0xf]
        %v2353 = vld [vmem:[%s1902 + $0x70] sm:$0xf]
        %v2354 = vld [vmem:[%s1902 + $0x74] sm:$0x1]
        %v2355 = vld [vmem:[%s1902 + $0x78] sm:$0xf]
        %v2356 = vld [vmem:[%s1902 + $0x7c] sm:$0xf]
        %v2357 = vld [vmem:[%s1902 + $0x80] sm:$0x1]
        %v2358 = vld [vmem:[%s1902 + $0x84] sm:$0xf]
        %v2359 = vld [vmem:[%s1902 + $0x88] sm:$0xf]
        %v2360 = vld [vmem:[%s1902 + $0x8c] sm:$0x1]
        %v2361 = vld [vmem:[%s1902 + $0x90] sm:$0xf]
        %v2362 = vld [vmem:[%s1902 + $0x94] sm:$0xf]
        %v2363 = vld [vmem:[%s1902 + $0x98] sm:$0x1]
        %v2364 = vld [vmem:[%s1902 + $0x9c] sm:$0xf]
        %v2365 = vld [vmem:[%s1902 + $0xa0] sm:$0xf]
        %v2366 = vld [vmem:[%s1902 + $0xa4] sm:$0x1]
        %v2367 = vld [vmem:[%s1902 + $0xa8] sm:$0xf]
        %v2368 = vld [vmem:[%s1902 + $0xac] sm:$0xf]
        %v2369 = vld [vmem:[%s1902 + $0xb0] sm:$0x1]
        %v2370 = vld [vmem:[%s1902 + $0xb4] sm:$0xf]
        %v2371 = vld [vmem:[%s1902 + $0xb8] sm:$0xf]
        %v2372 = vld [vmem:[%s1902 + $0xbc] sm:$0x1]
        %v2374 = vshrl.u32 %v2325, 16
        %v2376 = vrot.slane %v2374, 4
        %v2377 = vshll.u32 %v2325, 16
        %v2379 = vrot.slane %v2377, 5
        %v2380 = vor.u32 %v2376, %v2379
        %v2381 = vrot.slane %v2380, 4
        %v2383 = vshll.u32 %v2326, 16
        %v2385 = vrot.slane %v2383, 5
        %v2386 = vsel %vm590, %v2381, %v2385
        %v2387 = vshrl.u32 %v2326, 16
        %v2389 = vrot.slane %v2387, 4
        %v2390 = vor.u32 %v2389, %v2385
        %v2391 = vrot.slane %v2390, 4
        %v2393 = vshll.u32 %v2327, 16
        %v2395 = vrot.slane %v2393, 5
        %v2396 = vsel %vm590, %v2391, %v2395
        %v2398 = vshrl.u32 %v2328, 16
        %v2400 = vrot.slane %v2398, 4
        %v2401 = vshll.u32 %v2328, 16
        %v2403 = vrot.slane %v2401, 5
        %v2404 = vor.u32 %v2400, %v2403
        %v2405 = vrot.slane %v2404, 4
        %v2407 = vshll.u32 %v2329, 16
        %v2409 = vrot.slane %v2407, 5
        %v2410 = vsel %vm590, %v2405, %v2409
        %v2411 = vshrl.u32 %v2329, 16
        %v2413 = vrot.slane %v2411, 4
        %v2414 = vor.u32 %v2413, %v2409
        %v2415 = vrot.slane %v2414, 4
        %v2417 = vshll.u32 %v2330, 16
        %v2419 = vrot.slane %v2417, 5
        %v2420 = vsel %vm590, %v2415, %v2419
        %v2422 = vshrl.u32 %v2331, 16
        %v2424 = vrot.slane %v2422, 4
        %v2425 = vshll.u32 %v2331, 16
        %v2427 = vrot.slane %v2425, 5
        %v2428 = vor.u32 %v2424, %v2427
        %v2429 = vrot.slane %v2428, 4
        %v2431 = vshll.u32 %v2332, 16
        %v2433 = vrot.slane %v2431, 5
        %v2434 = vsel %vm590, %v2429, %v2433
        %v2435 = vshrl.u32 %v2332, 16
        %v2437 = vrot.slane %v2435, 4
        %v2438 = vor.u32 %v2437, %v2433
        %v2439 = vrot.slane %v2438, 4
        %v2441 = vshll.u32 %v2333, 16
        %v2443 = vrot.slane %v2441, 5
        %v2444 = vsel %vm590, %v2439, %v2443
        %v2446 = vshrl.u32 %v2334, 16
        %v2448 = vrot.slane %v2446, 4
        %v2449 = vshll.u32 %v2334, 16
        %v2451 = vrot.slane %v2449, 5
        %v2452 = vor.u32 %v2448, %v2451
        %v2453 = vrot.slane %v2452, 4
        %v2455 = vshll.u32 %v2335, 16
        %v2457 = vrot.slane %v2455, 5
        %v2458 = vsel %vm590, %v2453, %v2457
        %v2459 = vshrl.u32 %v2335, 16
        %v2461 = vrot.slane %v2459, 4
        %v2462 = vor.u32 %v2461, %v2457
        %v2463 = vrot.slane %v2462, 4
        %v2465 = vshll.u32 %v2336, 16
        %v2467 = vrot.slane %v2465, 5
        %v2468 = vsel %vm590, %v2463, %v2467
        %v2470 = vshrl.u32 %v2337, 16
        %v2472 = vrot.slane %v2470, 4
        %v2473 = vshll.u32 %v2337, 16
        %v2475 = vrot.slane %v2473, 5
        %v2476 = vor.u32 %v2472, %v2475
        %v2477 = vrot.slane %v2476, 4
        %v2479 = vshll.u32 %v2338, 16
        %v2481 = vrot.slane %v2479, 5
        %v2482 = vsel %vm590, %v2477, %v2481
        %v2483 = vshrl.u32 %v2338, 16
        %v2485 = vrot.slane %v2483, 4
        %v2486 = vor.u32 %v2485, %v2481
        %v2487 = vrot.slane %v2486, 4
        %v2489 = vshll.u32 %v2339, 16
        %v2491 = vrot.slane %v2489, 5
        %v2492 = vsel %vm590, %v2487, %v2491
        %v2494 = vshrl.u32 %v2340, 16
        %v2496 = vrot.slane %v2494, 4
        %v2497 = vshll.u32 %v2340, 16
        %v2499 = vrot.slane %v2497, 5
        %v2500 = vor.u32 %v2496, %v2499
        %v2501 = vrot.slane %v2500, 4
        %v2503 = vshll.u32 %v2341, 16
        %v2505 = vrot.slane %v2503, 5
        %v2506 = vsel %vm590, %v2501, %v2505
        %v2507 = vshrl.u32 %v2341, 16
        %v2509 = vrot.slane %v2507, 4
        %v2510 = vor.u32 %v2509, %v2505
        %v2511 = vrot.slane %v2510, 4
        %v2513 = vshll.u32 %v2342, 16
        %v2515 = vrot.slane %v2513, 5
        %v2516 = vsel %vm590, %v2511, %v2515
        %v2518 = vshrl.u32 %v2343, 16
        %v2520 = vrot.slane %v2518, 4
        %v2521 = vshll.u32 %v2343, 16
        %v2523 = vrot.slane %v2521, 5
        %v2524 = vor.u32 %v2520, %v2523
        %v2525 = vrot.slane %v2524, 4
        %v2527 = vshll.u32 %v2344, 16
        %v2529 = vrot.slane %v2527, 5
        %v2530 = vsel %vm590, %v2525, %v2529
        %v2531 = vshrl.u32 %v2344, 16
        %v2533 = vrot.slane %v2531, 4
        %v2534 = vor.u32 %v2533, %v2529
        %v2535 = vrot.slane %v2534, 4
        %v2537 = vshll.u32 %v2345, 16
        %v2539 = vrot.slane %v2537, 5
        %v2540 = vsel %vm590, %v2535, %v2539
        %v2542 = vshrl.u32 %v2346, 16
        %v2544 = vrot.slane %v2542, 4
        %v2545 = vshll.u32 %v2346, 16
        %v2547 = vrot.slane %v2545, 5
        %v2548 = vor.u32 %v2544, %v2547
        %v2549 = vrot.slane %v2548, 4
        %v2551 = vshll.u32 %v2347, 16
        %v2553 = vrot.slane %v2551, 5
        %v2554 = vsel %vm590, %v2549, %v2553
        %v2555 = vshrl.u32 %v2347, 16
        %v2557 = vrot.slane %v2555, 4
        %v2558 = vor.u32 %v2557, %v2553
        %v2559 = vrot.slane %v2558, 4
        %v2561 = vshll.u32 %v2348, 16
        %v2563 = vrot.slane %v2561, 5
        %v2564 = vsel %vm590, %v2559, %v2563
        %v2566 = vshrl.u32 %v2349, 16
        %v2568 = vrot.slane %v2566, 4
        %v2569 = vshll.u32 %v2349, 16
        %v2571 = vrot.slane %v2569, 5
        %v2572 = vor.u32 %v2568, %v2571
        %v2573 = vrot.slane %v2572, 4
        %v2575 = vshll.u32 %v2350, 16
        %v2577 = vrot.slane %v2575, 5
        %v2578 = vsel %vm590, %v2573, %v2577
        %v2579 = vshrl.u32 %v2350, 16
        %v2581 = vrot.slane %v2579, 4
        %v2582 = vor.u32 %v2581, %v2577
        %v2583 = vrot.slane %v2582, 4
        %v2585 = vshll.u32 %v2351, 16
        %v2587 = vrot.slane %v2585, 5
        %v2588 = vsel %vm590, %v2583, %v2587
        %v2590 = vshrl.u32 %v2352, 16
        %v2592 = vrot.slane %v2590, 4
        %v2593 = vshll.u32 %v2352, 16
        %v2595 = vrot.slane %v2593, 5
        %v2596 = vor.u32 %v2592, %v2595
        %v2597 = vrot.slane %v2596, 4
        %v2599 = vshll.u32 %v2353, 16
        %v2601 = vrot.slane %v2599, 5
        %v2602 = vsel %vm590, %v2597, %v2601
        %v2603 = vshrl.u32 %v2353, 16
        %v2605 = vrot.slane %v2603, 4
        %v2606 = vor.u32 %v2605, %v2601
        %v2607 = vrot.slane %v2606, 4
        %v2609 = vshll.u32 %v2354, 16
        %v2611 = vrot.slane %v2609, 5
        %v2612 = vsel %vm590, %v2607, %v2611
        %v2614 = vshrl.u32 %v2355, 16
        %v2616 = vrot.slane %v2614, 4
        %v2617 = vshll.u32 %v2355, 16
        %v2619 = vrot.slane %v2617, 5
        %v2620 = vor.u32 %v2616, %v2619
        %v2621 = vrot.slane %v2620, 4
        %v2623 = vshll.u32 %v2356, 16
        %v2625 = vrot.slane %v2623, 5
        %v2626 = vsel %vm590, %v2621, %v2625
        %v2627 = vshrl.u32 %v2356, 16
        %v2629 = vrot.slane %v2627, 4
        %v2630 = vor.u32 %v2629, %v2625
        %v2631 = vrot.slane %v2630, 4
        %v2633 = vshll.u32 %v2357, 16
        %v2635 = vrot.slane %v2633, 5
        %v2636 = vsel %vm590, %v2631, %v2635
        %v2638 = vshrl.u32 %v2358, 16
        %v2640 = vrot.slane %v2638, 4
        %v2641 = vshll.u32 %v2358, 16
        %v2643 = vrot.slane %v2641, 5
        %v2644 = vor.u32 %v2640, %v2643
        %v2645 = vrot.slane %v2644, 4
        %v2647 = vshll.u32 %v2359, 16
        %v2649 = vrot.slane %v2647, 5
        %v2650 = vsel %vm590, %v2645, %v2649
        %v2651 = vshrl.u32 %v2359, 16
        %v2653 = vrot.slane %v2651, 4
        %v2654 = vor.u32 %v2653, %v2649
        %v2655 = vrot.slane %v2654, 4
        %v2657 = vshll.u32 %v2360, 16
        %v2659 = vrot.slane %v2657, 5
        %v2660 = vsel %vm590, %v2655, %v2659
        %v2662 = vshrl.u32 %v2361, 16
        %v2664 = vrot.slane %v2662, 4
        %v2665 = vshll.u32 %v2361, 16
        %v2667 = vrot.slane %v2665, 5
        %v2668 = vor.u32 %v2664, %v2667
        %v2669 = vrot.slane %v2668, 4
        %v2671 = vshll.u32 %v2362, 16
        %v2673 = vrot.slane %v2671, 5
        %v2674 = vsel %vm590, %v2669, %v2673
        %v2675 = vshrl.u32 %v2362, 16
        %v2677 = vrot.slane %v2675, 4
        %v2678 = vor.u32 %v2677, %v2673
        %v2679 = vrot.slane %v2678, 4
        %v2681 = vshll.u32 %v2363, 16
        %v2683 = vrot.slane %v2681, 5
        %v2684 = vsel %vm590, %v2679, %v2683
        %v2686 = vshrl.u32 %v2364, 16
        %v2688 = vrot.slane %v2686, 4
        %v2689 = vshll.u32 %v2364, 16
        %v2691 = vrot.slane %v2689, 5
        %v2692 = vor.u32 %v2688, %v2691
        %v2693 = vrot.slane %v2692, 4
        %v2695 = vshll.u32 %v2365, 16
        %v2697 = vrot.slane %v2695, 5
        %v2698 = vsel %vm590, %v2693, %v2697
        %v2699 = vshrl.u32 %v2365, 16
        %v2701 = vrot.slane %v2699, 4
        %v2702 = vor.u32 %v2701, %v2697
        %v2703 = vrot.slane %v2702, 4
        %v2705 = vshll.u32 %v2366, 16
        %v2707 = vrot.slane %v2705, 5
        %v2708 = vsel %vm590, %v2703, %v2707
        %v2710 = vshrl.u32 %v2367, 16
        %v2712 = vrot.slane %v2710, 4
        %v2713 = vshll.u32 %v2367, 16
        %v2715 = vrot.slane %v2713, 5
        %v2716 = vor.u32 %v2712, %v2715
        %v2717 = vrot.slane %v2716, 4
        %v2719 = vshll.u32 %v2368, 16
        %v2721 = vrot.slane %v2719, 5
        %v2722 = vsel %vm590, %v2717, %v2721
        %v2723 = vshrl.u32 %v2368, 16
        %v2725 = vrot.slane %v2723, 4
        %v2726 = vor.u32 %v2725, %v2721
        %v2727 = vrot.slane %v2726, 4
        %v2729 = vshll.u32 %v2369, 16
        %v2731 = vrot.slane %v2729, 5
        %v2732 = vsel %vm590, %v2727, %v2731
        %v2734 = vshrl.u32 %v2370, 16
        %v2736 = vrot.slane %v2734, 4
        %v2737 = vshll.u32 %v2370, 16
        %v2739 = vrot.slane %v2737, 5
        %v2740 = vor.u32 %v2736, %v2739
        %v2741 = vrot.slane %v2740, 4
        %v2743 = vshll.u32 %v2371, 16
        %v2745 = vrot.slane %v2743, 5
        %v2746 = vsel %vm590, %v2741, %v2745
        %v2747 = vshrl.u32 %v2371, 16
        %v2749 = vrot.slane %v2747, 4
        %v2750 = vor.u32 %v2749, %v2745
        %v2751 = vrot.slane %v2750, 4
        %v2753 = vshll.u32 %v2372, 16
        %v2755 = vrot.slane %v2753, 5
        %v2756 = vsel %vm590, %v2751, %v2755
        %s2757 = scalar_lea.vmem %s1, 16
        %v2758 = vld [vmem:[%s2757] sm:$0xf]
        %v2759 = vunpack.c.l.b16 %v2386
        %v2760 = vunpack.c.l.b16 %v2396
        %v2761 = vunpack.c.l.b16 %v2410
        %v2762 = vunpack.c.l.b16 %v2420
        %v2763 = vunpack.c.l.b16 %v2434
        %v2764 = vunpack.c.l.b16 %v2444
        %v2765 = vunpack.c.l.b16 %v2458
        %v2766 = vunpack.c.l.b16 %v2468
        %v2767 = vunpack.c.l.b16 %v2482
        %v2768 = vunpack.c.l.b16 %v2492
        %v2769 = vunpack.c.l.b16 %v2506
        %v2770 = vunpack.c.l.b16 %v2516
        %v2771 = vunpack.c.l.b16 %v2530
        %v2772 = vunpack.c.l.b16 %v2540
        %v2773 = vunpack.c.l.b16 %v2554
        %v2774 = vunpack.c.l.b16 %v2564
        %v2775 = vunpack.c.l.b16 %v2578
        %v2776 = vunpack.c.l.b16 %v2588
        %v2777 = vunpack.c.l.b16 %v2602
        %v2778 = vunpack.c.l.b16 %v2612
        %v2779 = vunpack.c.l.b16 %v2626
        %v2780 = vunpack.c.l.b16 %v2636
        %v2781 = vunpack.c.l.b16 %v2650
        %v2782 = vunpack.c.l.b16 %v2660
        %v2783 = vunpack.c.l.b16 %v2674
        %v2784 = vunpack.c.l.b16 %v2684
        %v2785 = vunpack.c.l.b16 %v2698
        %v2786 = vunpack.c.l.b16 %v2708
        %v2787 = vunpack.c.l.b16 %v2722
        %v2788 = vunpack.c.l.b16 %v2732
        %v2789 = vunpack.c.l.b16 %v2746
        %v2790 = vunpack.c.l.b16 %v2756
        %v2791 = vpack.c.b16 %v2760, %v2759
        %v2792 = vpack.c.b16 %v2762, %v2761
        %v2793 = vpack.c.b16 %v2764, %v2763
        %v2794 = vpack.c.b16 %v2766, %v2765
        %v2795 = vpack.c.b16 %v2768, %v2767
        %v2796 = vpack.c.b16 %v2770, %v2769
        %v2797 = vpack.c.b16 %v2772, %v2771
        %v2798 = vpack.c.b16 %v2774, %v2773
        %v2799 = vpack.c.b16 %v2776, %v2775
        %v2800 = vpack.c.b16 %v2778, %v2777
        %v2801 = vpack.c.b16 %v2780, %v2779
        %v2802 = vpack.c.b16 %v2782, %v2781
        %v2803 = vpack.c.b16 %v2784, %v2783
        %v2804 = vpack.c.b16 %v2786, %v2785
        %v2805 = vpack.c.b16 %v2788, %v2787
        %v2806 = vpack.c.b16 %v2790, %v2789
        %v2808 = vsel %vm294, %v2791, 0
        %v2811 = vsel %vm294, %v2792, 0
        %v2814 = vsel %vm294, %v2793, 0
        %v2817 = vsel %vm294, %v2794, 0
        %v2820 = vsel %vm294, %v2795, 0
        %v2823 = vsel %vm294, %v2796, 0
        %v2826 = vsel %vm294, %v2797, 0
        %v2829 = vsel %vm294, %v2798, 0
        %v2832 = vsel %vm294, %v2799, 0
        %v2835 = vsel %vm294, %v2800, 0
        %v2838 = vsel %vm294, %v2801, 0
        %v2841 = vsel %vm294, %v2802, 0
        %v2844 = vsel %vm294, %v2803, 0
        %v2847 = vsel %vm294, %v2804, 0
        %v2850 = vsel %vm294, %v2805, 0
        %v2853 = vsel %vm294, %v2806, 0
        %v2856 = vsel %vm343, %v2758, 0
        %2858 = vmatprep.subr.bf16.mxu0 0
        %2859 = vmatpush1.bf16.msra.mxu0 %v2856
        %2860 = vmatprep.subr.bf16.mxu0 0
        %2861 = vmatpush1.bf16.msra.mxu0 0
        %2862 = vmatprep.subr.bf16.mxu0 0
        %2863 = vmatpush1.bf16.msra.mxu0 0
        %2864 = vmatprep.subr.bf16.mxu0 0
        %2865 = vmatpush1.bf16.msra.mxu0 0
        %2866 = vmatprep.subr.bf16.mxu0 0
        %2867 = vmatpush1.bf16.msra.mxu0 0
        %2868 = vmatprep.subr.bf16.mxu0 0
        %2869 = vmatpush1.bf16.msra.mxu0 0
        %2870 = vmatprep.subr.bf16.mxu0 0
        %2871 = vmatpush1.bf16.msra.mxu0 0
        %2872 = vmatprep.subr.bf16.mxu0 0
        %2873 = vmatpush1.bf16.msra.mxu0 0
        %2874 = vmatprep.subr.bf16.mxu0 0
        %2875 = vmatpush1.bf16.msra.mxu0 0
        %2876 = vmatprep.subr.bf16.mxu0 0
        %2877 = vmatpush1.bf16.msra.mxu0 0
        %2878 = vmatprep.subr.bf16.mxu0 0
        %2879 = vmatpush1.bf16.msra.mxu0 0
        %2880 = vmatprep.subr.bf16.mxu0 0
        %2881 = vmatpush1.bf16.msra.mxu0 0
        %2882 = vmatprep.subr.bf16.mxu0 0
        %2883 = vmatpush1.bf16.msra.mxu0 0
        %2884 = vmatprep.subr.bf16.mxu0 0
        %2885 = vmatpush1.bf16.msra.mxu0 0
        %2886 = vmatprep.subr.bf16.mxu0 0
        %2887 = vmatpush1.bf16.msra.mxu0 0
        %2888 = vmatprep.subr.bf16.mxu0 0
        %2889 = vmatpush1.bf16.msra.mxu0 0
        %2890 = vmatprep.mubr.bf16.mxu0 0
        %2891 = vmatmul.mubr.bf16.gmra.mrb[0].mxu0 %v2808
        %v2892 = vpop.f32.mrb[0].mxu0
        %v2893 = vadd.f32 0.0, %v2892
        %v2894 = vpop.f32.mrb[0].mxu0
        %v2895 = vpop.f32.mrb[0].mxu0
        %v2896 = vadd.f32 0.0, %v2895
        %v2897 = vpop.f32.mrb[0].mxu0
        %2898 = vmatprep.mubr.bf16.mxu0 0
        %2899 = vmatmul.mubr.bf16.gmra.mrb[0].mxu0 %v2811
        %v2900 = vpop.f32.mrb[0].mxu0
        %v2901 = vadd.f32 0.0, %v2900
        %v2902 = vpop.f32.mrb[0].mxu0
        %v2903 = vpop.f32.mrb[0].mxu0
        %v2904 = vadd.f32 0.0, %v2903
        %v2905 = vpop.f32.mrb[0].mxu0
        %2906 = vmatprep.mubr.bf16.mxu0 0
        %2907 = vmatmul.mubr.bf16.gmra.mrb[0].mxu0 %v2814
        %v2908 = vpop.f32.mrb[0].mxu0
        %v2909 = vadd.f32 0.0, %v2908
        %v2910 = vpop.f32.mrb[0].mxu0
        %v2911 = vpop.f32.mrb[0].mxu0
        %v2912 = vadd.f32 0.0, %v2911
        %v2913 = vpop.f32.mrb[0].mxu0
        %2914 = vmatprep.mubr.bf16.mxu0 0
        %2915 = vmatmul.mubr.bf16.gmra.mrb[0].mxu0 %v2817
        %v2916 = vpop.f32.mrb[0].mxu0
        %v2917 = vadd.f32 0.0, %v2916
        %v2918 = vpop.f32.mrb[0].mxu0
        %v2919 = vpop.f32.mrb[0].mxu0
        %v2920 = vadd.f32 0.0, %v2919
        %v2921 = vpop.f32.mrb[0].mxu0
        %2922 = vmatprep.mubr.bf16.mxu0 0
        %2923 = vmatmul.mubr.bf16.gmra.mrb[0].mxu0 %v2820
        %v2924 = vpop.f32.mrb[0].mxu0
        %v2925 = vadd.f32 0.0, %v2924
        %v2926 = vpop.f32.mrb[0].mxu0
        %v2927 = vpop.f32.mrb[0].mxu0
        %v2928 = vadd.f32 0.0, %v2927
        %v2929 = vpop.f32.mrb[0].mxu0
        %2930 = vmatprep.mubr.bf16.mxu0 0
        %2931 = vmatmul.mubr.bf16.gmra.mrb[0].mxu0 %v2823
        %v2932 = vpop.f32.mrb[0].mxu0
        %v2933 = vadd.f32 0.0, %v2932
        %v2934 = vpop.f32.mrb[0].mxu0
        %v2935 = vpop.f32.mrb[0].mxu0
        %v2936 = vadd.f32 0.0, %v2935
        %v2937 = vpop.f32.mrb[0].mxu0
        %2938 = vmatprep.mubr.bf16.mxu0 0
        %2939 = vmatmul.mubr.bf16.gmra.mrb[0].mxu0 %v2826
        %v2940 = vpop.f32.mrb[0].mxu0
        %v2941 = vadd.f32 0.0, %v2940
        %v2942 = vpop.f32.mrb[0].mxu0
        %v2943 = vpop.f32.mrb[0].mxu0
        %v2944 = vadd.f32 0.0, %v2943
        %v2945 = vpop.f32.mrb[0].mxu0
        %2946 = vmatprep.mubr.bf16.mxu0 0
        %2947 = vmatmul.mubr.bf16.gmra.mrb[0].mxu0 %v2829
        %v2948 = vpop.f32.mrb[0].mxu0
        %v2949 = vadd.f32 0.0, %v2948
        %v2950 = vpop.f32.mrb[0].mxu0
        %v2951 = vpop.f32.mrb[0].mxu0
        %v2952 = vadd.f32 0.0, %v2951
        %v2953 = vpop.f32.mrb[0].mxu0
        %2954 = vmatprep.mubr.bf16.mxu0 0
        %2955 = vmatmul.mubr.bf16.gmra.mrb[0].mxu0 %v2832
        %v2956 = vpop.f32.mrb[0].mxu0
        %v2957 = vadd.f32 0.0, %v2956
        %v2958 = vpop.f32.mrb[0].mxu0
        %v2959 = vpop.f32.mrb[0].mxu0
        %v2960 = vadd.f32 0.0, %v2959
        %v2961 = vpop.f32.mrb[0].mxu0
        %2962 = vmatprep.mubr.bf16.mxu0 0
        %2963 = vmatmul.mubr.bf16.gmra.mrb[0].mxu0 %v2835
        %v2964 = vpop.f32.mrb[0].mxu0
        %v2965 = vadd.f32 0.0, %v2964
        %v2966 = vpop.f32.mrb[0].mxu0
        %v2967 = vpop.f32.mrb[0].mxu0
        %v2968 = vadd.f32 0.0, %v2967
        %v2969 = vpop.f32.mrb[0].mxu0
        %2970 = vmatprep.mubr.bf16.mxu0 0
        %2971 = vmatmul.mubr.bf16.gmra.mrb[0].mxu0 %v2838
        %v2972 = vpop.f32.mrb[0].mxu0
        %v2973 = vadd.f32 0.0, %v2972
        %v2974 = vpop.f32.mrb[0].mxu0
        %v2975 = vpop.f32.mrb[0].mxu0
        %v2976 = vadd.f32 0.0, %v2975
        %v2977 = vpop.f32.mrb[0].mxu0
        %2978 = vmatprep.mubr.bf16.mxu0 0
        %2979 = vmatmul.mubr.bf16.gmra.mrb[0].mxu0 %v2841
        %v2980 = vpop.f32.mrb[0].mxu0
        %v2981 = vadd.f32 0.0, %v2980
        %v2982 = vpop.f32.mrb[0].mxu0
        %v2983 = vpop.f32.mrb[0].mxu0
        %v2984 = vadd.f32 0.0, %v2983
        %v2985 = vpop.f32.mrb[0].mxu0
        %2986 = vmatprep.mubr.bf16.mxu0 0
        %2987 = vmatmul.mubr.bf16.gmra.mrb[0].mxu0 %v2844
        %v2988 = vpop.f32.mrb[0].mxu0
        %v2989 = vadd.f32 0.0, %v2988
        %v2990 = vpop.f32.mrb[0].mxu0
        %v2991 = vpop.f32.mrb[0].mxu0
        %v2992 = vadd.f32 0.0, %v2991
        %v2993 = vpop.f32.mrb[0].mxu0
        %2994 = vmatprep.mubr.bf16.mxu0 0
        %2995 = vmatmul.mubr.bf16.gmra.mrb[0].mxu0 %v2847
        %v2996 = vpop.f32.mrb[0].mxu0
        %v2997 = vadd.f32 0.0, %v2996
        %v2998 = vpop.f32.mrb[0].mxu0
        %v2999 = vpop.f32.mrb[0].mxu0
        %v3000 = vadd.f32 0.0, %v2999
        %v3001 = vpop.f32.mrb[0].mxu0
        %3002 = vmatprep.mubr.bf16.mxu0 0
        %3003 = vmatmul.mubr.bf16.gmra.mrb[0].mxu0 %v2850
        %v3004 = vpop.f32.mrb[0].mxu0
        %v3005 = vadd.f32 0.0, %v3004
        %v3006 = vpop.f32.mrb[0].mxu0
        %v3007 = vpop.f32.mrb[0].mxu0
        %v3008 = vadd.f32 0.0, %v3007
        %v3009 = vpop.f32.mrb[0].mxu0
        %3010 = vmatprep.mubr.bf16.mxu0 0
        %3011 = vmatmul.mubr.bf16.gmra.mrb[0].mxu0 %v2853
        %v3012 = vpop.f32.mrb[0].mxu0
        %v3013 = vadd.f32 0.0, %v3012
        %v3014 = vpop.f32.mrb[0].mxu0
        %v3015 = vpop.f32.mrb[0].mxu0
        %v3016 = vadd.f32 0.0, %v3015
        %v3017 = vpop.f32.mrb[0].mxu0
        %3018 = vdwg.mxu0
        %v3019 = vld [vmem:[#allocation2] sm:$0xff]
        %v3020 = vld [vmem:[#allocation2 + $0x8] sm:$0xff]
        %v3021 = vld [vmem:[#allocation2 + $0x10] sm:$0xff]
        %v3022 = vld [vmem:[#allocation2 + $0x18] sm:$0xff]
        %v3023 = vld [vmem:[#allocation2 + $0x20] sm:$0xff]
        %v3024 = vld [vmem:[#allocation2 + $0x28] sm:$0xff]
        %v3025 = vld [vmem:[#allocation2 + $0x30] sm:$0xff]
        %v3026 = vld [vmem:[#allocation2 + $0x38] sm:$0xff]
        %v3027 = vld [vmem:[#allocation2 + $0x40] sm:$0xff]
        %v3028 = vld [vmem:[#allocation2 + $0x48] sm:$0xff]
        %v3029 = vld [vmem:[#allocation2 + $0x50] sm:$0xff]
        %v3030 = vld [vmem:[#allocation2 + $0x58] sm:$0xff]
        %v3031 = vld [vmem:[#allocation2 + $0x60] sm:$0xff]
        %v3032 = vld [vmem:[#allocation2 + $0x68] sm:$0xff]
        %v3033 = vld [vmem:[#allocation2 + $0x70] sm:$0xff]
        %v3034 = vld [vmem:[#allocation2 + $0x78] sm:$0xff]
        %v3035 = vld [vmem:[#allocation2 + $0x80] sm:$0xff]
        %v3036 = vld [vmem:[#allocation2 + $0x88] sm:$0xff]
        %v3037 = vld [vmem:[#allocation2 + $0x90] sm:$0xff]
        %v3038 = vld [vmem:[#allocation2 + $0x98] sm:$0xff]
        %v3039 = vld [vmem:[#allocation2 + $0xa0] sm:$0xff]
        %v3040 = vld [vmem:[#allocation2 + $0xa8] sm:$0xff]
        %v3041 = vld [vmem:[#allocation2 + $0xb0] sm:$0xff]
        %v3042 = vld [vmem:[#allocation2 + $0xb8] sm:$0xff]
        %v3043 = vld [vmem:[#allocation2 + $0xc0] sm:$0xff]
        %v3044 = vld [vmem:[#allocation2 + $0xc8] sm:$0xff]
        %v3045 = vld [vmem:[#allocation2 + $0xd0] sm:$0xff]
        %v3046 = vld [vmem:[#allocation2 + $0xd8] sm:$0xff]
        %v3047 = vld [vmem:[#allocation2 + $0xe0] sm:$0xff]
        %v3048 = vld [vmem:[#allocation2 + $0xe8] sm:$0xff]
        %v3049 = vld [vmem:[#allocation2 + $0xf0] sm:$0xff]
        %v3050 = vld [vmem:[#allocation2 + $0xf8] sm:$0xff]
        %v3051 = vadd.f32 %v3019, %v2893
        %v3052 = vadd.f32 %v3020, %v2896
        %v3053 = vadd.f32 %v3021, %v2901
        %v3054 = vadd.f32 %v3022, %v2904
        %v3055 = vadd.f32 %v3023, %v2909
        %v3056 = vadd.f32 %v3024, %v2912
        %v3057 = vadd.f32 %v3025, %v2917
        %v3058 = vadd.f32 %v3026, %v2920
        %v3059 = vadd.f32 %v3027, %v2925
        %v3060 = vadd.f32 %v3028, %v2928
        %v3061 = vadd.f32 %v3029, %v2933
        %v3062 = vadd.f32 %v3030, %v2936
        %v3063 = vadd.f32 %v3031, %v2941
        %v3064 = vadd.f32 %v3032, %v2944
        %v3065 = vadd.f32 %v3033, %v2949
        %v3066 = vadd.f32 %v3034, %v2952
        %v3067 = vadd.f32 %v3035, %v2957
        %v3068 = vadd.f32 %v3036, %v2960
        %v3069 = vadd.f32 %v3037, %v2965
        %v3070 = vadd.f32 %v3038, %v2968
        %v3071 = vadd.f32 %v3039, %v2973
        %v3072 = vadd.f32 %v3040, %v2976
        %v3073 = vadd.f32 %v3041, %v2981
        %v3074 = vadd.f32 %v3042, %v2984
        %v3075 = vadd.f32 %v3043, %v2989
        %v3076 = vadd.f32 %v3044, %v2992
        %v3077 = vadd.f32 %v3045, %v2997
        %v3078 = vadd.f32 %v3046, %v3000
        %v3079 = vadd.f32 %v3047, %v3005
        %v3080 = vadd.f32 %v3048, %v3008
        %v3081 = vadd.f32 %v3049, %v3013
        %v3082 = vadd.f32 %v3050, %v3016
        %3083 = vst [vmem:[#allocation2] sm:$0xff] %v3051
        %3084 = vst [vmem:[#allocation2 + $0x8] sm:$0xff] %v3052
        %3085 = vst [vmem:[#allocation2 + $0x10] sm:$0xff] %v3053
        %3086 = vst [vmem:[#allocation2 + $0x18] sm:$0xff] %v3054
        %3087 = vst [vmem:[#allocation2 + $0x20] sm:$0xff] %v3055
        %3088 = vst [vmem:[#allocation2 + $0x28] sm:$0xff] %v3056
        %3089 = vst [vmem:[#allocation2 + $0x30] sm:$0xff] %v3057
        %3090 = vst [vmem:[#allocation2 + $0x38] sm:$0xff] %v3058
        %3091 = vst [vmem:[#allocation2 + $0x40] sm:$0xff] %v3059
        %3092 = vst [vmem:[#allocation2 + $0x48] sm:$0xff] %v3060
        %3093 = vst [vmem:[#allocation2 + $0x50] sm:$0xff] %v3061
        %3094 = vst [vmem:[#allocation2 + $0x58] sm:$0xff] %v3062
        %3095 = vst [vmem:[#allocation2 + $0x60] sm:$0xff] %v3063
        %3096 = vst [vmem:[#allocation2 + $0x68] sm:$0xff] %v3064
        %3097 = vst [vmem:[#allocation2 + $0x70] sm:$0xff] %v3065
        %3098 = vst [vmem:[#allocation2 + $0x78] sm:$0xff] %v3066
        %3099 = vst [vmem:[#allocation2 + $0x80] sm:$0xff] %v3067
        %3100 = vst [vmem:[#allocation2 + $0x88] sm:$0xff] %v3068
        %3101 = vst [vmem:[#allocation2 + $0x90] sm:$0xff] %v3069
        %3102 = vst [vmem:[#allocation2 + $0x98] sm:$0xff] %v3070
        %3103 = vst [vmem:[#allocation2 + $0xa0] sm:$0xff] %v3071
        %3104 = vst [vmem:[#allocation2 + $0xa8] sm:$0xff] %v3072
        %3105 = vst [vmem:[#allocation2 + $0xb0] sm:$0xff] %v3073
        %3106 = vst [vmem:[#allocation2 + $0xb8] sm:$0xff] %v3074
        %3107 = vst [vmem:[#allocation2 + $0xc0] sm:$0xff] %v3075
        %3108 = vst [vmem:[#allocation2 + $0xc8] sm:$0xff] %v3076
        %3109 = vst [vmem:[#allocation2 + $0xd0] sm:$0xff] %v3077
        %3110 = vst [vmem:[#allocation2 + $0xd8] sm:$0xff] %v3078
        %3111 = vst [vmem:[#allocation2 + $0xe0] sm:$0xff] %v3079
        %3112 = vst [vmem:[#allocation2 + $0xe8] sm:$0xff] %v3080
        %3113 = vst [vmem:[#allocation2 + $0xf0] sm:$0xff] %v3081
        %3114 = vst [vmem:[#allocation2 + $0xf8] sm:$0xff] %v3082
        %v3115 = vld [vmem:[%s1902] sm:$0xe]
        %v3116 = vld [vmem:[%s1902 + $0x4] sm:$0xf]
        %v3117 = vld [vmem:[%s1902 + $0x8] sm:$0x1]
        %v3118 = vld [vmem:[%s1902 + $0xc] sm:$0xe]
        %v3119 = vld [vmem:[%s1902 + $0x10] sm:$0xf]
        %v3120 = vld [vmem:[%s1902 + $0x14] sm:$0x1]
        %v3121 = vld [vmem:[%s1902 + $0x18] sm:$0xe]
        %v3122 = vld [vmem:[%s1902 + $0x1c] sm:$0xf]
        %v3123 = vld [vmem:[%s1902 + $0x20] sm:$0x1]
        %v3124 = vld [vmem:[%s1902 + $0x24] sm:$0xe]
        %v3125 = vld [vmem:[%s1902 + $0x28] sm:$0xf]
        %v3126 = vld [vmem:[%s1902 + $0x2c] sm:$0x1]
        %v3127 = vld [vmem:[%s1902 + $0x30] sm:$0xe]
        %v3128 = vld [vmem:[%s1902 + $0x34] sm:$0xf]
        %v3129 = vld [vmem:[%s1902 + $0x38] sm:$0x1]
        %v3130 = vld [vmem:[%s1902 + $0x3c] sm:$0xe]
        %v3131 = vld [vmem:[%s1902 + $0x40] sm:$0xf]
        %v3132 = vld [vmem:[%s1902 + $0x44] sm:$0x1]
        %v3133 = vld [vmem:[%s1902 + $0x48] sm:$0xe]
        %v3134 = vld [vmem:[%s1902 + $0x4c] sm:$0xf]
        %v3135 = vld [vmem:[%s1902 + $0x50] sm:$0x1]
        %v3136 = vld [vmem:[%s1902 + $0x54] sm:$0xe]
        %v3137 = vld [vmem:[%s1902 + $0x58] sm:$0xf]
        %v3138 = vld [vmem:[%s1902 + $0x5c] sm:$0x1]
        %v3139 = vld [vmem:[%s1902 + $0x60] sm:$0xe]
        %v3140 = vld [vmem:[%s1902 + $0x64] sm:$0xf]
        %v3141 = vld [vmem:[%s1902 + $0x68] sm:$0x1]
        %v3142 = vld [vmem:[%s1902 + $0x6c] sm:$0xe]
        %v3143 = vld [vmem:[%s1902 + $0x70] sm:$0xf]
        %v3144 = vld [vmem:[%s1902 + $0x74] sm:$0x1]
        %v3145 = vld [vmem:[%s1902 + $0x78] sm:$0xe]
        %v3146 = vld [vmem:[%s1902 + $0x7c] sm:$0xf]
        %v3147 = vld [vmem:[%s1902 + $0x80] sm:$0x1]
        %v3148 = vld [vmem:[%s1902 + $0x84] sm:$0xe]
        %v3149 = vld [vmem:[%s1902 + $0x88] sm:$0xf]
        %v3150 = vld [vmem:[%s1902 + $0x8c] sm:$0x1]
        %v3151 = vld [vmem:[%s1902 + $0x90] sm:$0xe]
        %v3152 = vld [vmem:[%s1902 + $0x94] sm:$0xf]
        %v3153 = vld [vmem:[%s1902 + $0x98] sm:$0x1]
        %v3154 = vld [vmem:[%s1902 + $0x9c] sm:$0xe]
        %v3155 = vld [vmem:[%s1902 + $0xa0] sm:$0xf]
        %v3156 = vld [vmem:[%s1902 + $0xa4] sm:$0x1]
        %v3157 = vld [vmem:[%s1902 + $0xa8] sm:$0xe]
        %v3158 = vld [vmem:[%s1902 + $0xac] sm:$0xf]
        %v3159 = vld [vmem:[%s1902 + $0xb0] sm:$0x1]
        %v3160 = vld [vmem:[%s1902 + $0xb4] sm:$0xe]
        %v3161 = vld [vmem:[%s1902 + $0xb8] sm:$0xf]
        %v3162 = vld [vmem:[%s1902 + $0xbc] sm:$0x1]
        %v3211 = vrot.slane %v3115, 5
        %v3212 = vrot.slane %v3211, 4
        %v3213 = vrot.slane %v3116, 5
        %v3214 = vsel %vm1431, %v3212, %v3213
        %v3215 = vrot.slane %v3213, 4
        %v3216 = vrot.slane %v3117, 5
        %v3217 = vsel %vm1431, %v3215, %v3216
        %v3218 = vrot.slane %v3118, 5
        %v3219 = vrot.slane %v3218, 4
        %v3220 = vrot.slane %v3119, 5
        %v3221 = vsel %vm1431, %v3219, %v3220
        %v3222 = vrot.slane %v3220, 4
        %v3223 = vrot.slane %v3120, 5
        %v3224 = vsel %vm1431, %v3222, %v3223
        %v3225 = vrot.slane %v3121, 5
        %v3226 = vrot.slane %v3225, 4
        %v3227 = vrot.slane %v3122, 5
        %v3228 = vsel %vm1431, %v3226, %v3227
        %v3229 = vrot.slane %v3227, 4
        %v3230 = vrot.slane %v3123, 5
        %v3231 = vsel %vm1431, %v3229, %v3230
        %v3232 = vrot.slane %v3124, 5
        %v3233 = vrot.slane %v3232, 4
        %v3234 = vrot.slane %v3125, 5
        %v3235 = vsel %vm1431, %v3233, %v3234
        %v3236 = vrot.slane %v3234, 4
        %v3237 = vrot.slane %v3126, 5
        %v3238 = vsel %vm1431, %v3236, %v3237
        %v3239 = vrot.slane %v3127, 5
        %v3240 = vrot.slane %v3239, 4
        %v3241 = vrot.slane %v3128, 5
        %v3242 = vsel %vm1431, %v3240, %v3241
        %v3243 = vrot.slane %v3241, 4
        %v3244 = vrot.slane %v3129, 5
        %v3245 = vsel %vm1431, %v3243, %v3244
        %v3246 = vrot.slane %v3130, 5
        %v3247 = vrot.slane %v3246, 4
        %v3248 = vrot.slane %v3131, 5
        %v3249 = vsel %vm1431, %v3247, %v3248
        %v3250 = vrot.slane %v3248, 4
        %v3251 = vrot.slane %v3132, 5
        %v3252 = vsel %vm1431, %v3250, %v3251
        %v3253 = vrot.slane %v3133, 5
        %v3254 = vrot.slane %v3253, 4
        %v3255 = vrot.slane %v3134, 5
        %v3256 = vsel %vm1431, %v3254, %v3255
        %v3257 = vrot.slane %v3255, 4
        %v3258 = vrot.slane %v3135, 5
        %v3259 = vsel %vm1431, %v3257, %v3258
        %v3260 = vrot.slane %v3136, 5
        %v3261 = vrot.slane %v3260, 4
        %v3262 = vrot.slane %v3137, 5
        %v3263 = vsel %vm1431, %v3261, %v3262
        %v3264 = vrot.slane %v3262, 4
        %v3265 = vrot.slane %v3138, 5
        %v3266 = vsel %vm1431, %v3264, %v3265
        %v3267 = vrot.slane %v3139, 5
        %v3268 = vrot.slane %v3267, 4
        %v3269 = vrot.slane %v3140, 5
        %v3270 = vsel %vm1431, %v3268, %v3269
        %v3271 = vrot.slane %v3269, 4
        %v3272 = vrot.slane %v3141, 5
        %v3273 = vsel %vm1431, %v3271, %v3272
        %v3274 = vrot.slane %v3142, 5
        %v3275 = vrot.slane %v3274, 4
        %v3276 = vrot.slane %v3143, 5
        %v3277 = vsel %vm1431, %v3275, %v3276
        %v3278 = vrot.slane %v3276, 4
        %v3279 = vrot.slane %v3144, 5
        %v3280 = vsel %vm1431, %v3278, %v3279
        %v3281 = vrot.slane %v3145, 5
        %v3282 = vrot.slane %v3281, 4
        %v3283 = vrot.slane %v3146, 5
        %v3284 = vsel %vm1431, %v3282, %v3283
        %v3285 = vrot.slane %v3283, 4
        %v3286 = vrot.slane %v3147, 5
        %v3287 = vsel %vm1431, %v3285, %v3286
        %v3288 = vrot.slane %v3148, 5
        %v3289 = vrot.slane %v3288, 4
        %v3290 = vrot.slane %v3149, 5
        %v3291 = vsel %vm1431, %v3289, %v3290
        %v3292 = vrot.slane %v3290, 4
        %v3293 = vrot.slane %v3150, 5
        %v3294 = vsel %vm1431, %v3292, %v3293
        %v3295 = vrot.slane %v3151, 5
        %v3296 = vrot.slane %v3295, 4
        %v3297 = vrot.slane %v3152, 5
        %v3298 = vsel %vm1431, %v3296, %v3297
        %v3299 = vrot.slane %v3297, 4
        %v3300 = vrot.slane %v3153, 5
        %v3301 = vsel %vm1431, %v3299, %v3300
        %v3302 = vrot.slane %v3154, 5
        %v3303 = vrot.slane %v3302, 4
        %v3304 = vrot.slane %v3155, 5
        %v3305 = vsel %vm1431, %v3303, %v3304
        %v3306 = vrot.slane %v3304, 4
        %v3307 = vrot.slane %v3156, 5
        %v3308 = vsel %vm1431, %v3306, %v3307
        %v3309 = vrot.slane %v3157, 5
        %v3310 = vrot.slane %v3309, 4
        %v3311 = vrot.slane %v3158, 5
        %v3312 = vsel %vm1431, %v3310, %v3311
        %v3313 = vrot.slane %v3311, 4
        %v3314 = vrot.slane %v3159, 5
        %v3315 = vsel %vm1431, %v3313, %v3314
        %v3316 = vrot.slane %v3160, 5
        %v3317 = vrot.slane %v3316, 4
        %v3318 = vrot.slane %v3161, 5
        %v3319 = vsel %vm1431, %v3317, %v3318
        %v3320 = vrot.slane %v3318, 4
        %v3321 = vrot.slane %v3162, 5
        %v3322 = vsel %vm1431, %v3320, %v3321
        %s3323 = scalar_lea.vmem %s1, 20
        %v3324 = vld [vmem:[%s3323] sm:$0xf]
        %v3325 = vunpack.c.l.b16 %v3214
        %v3326 = vunpack.c.l.b16 %v3217
        %v3327 = vunpack.c.l.b16 %v3221
        %v3328 = vunpack.c.l.b16 %v3224
        %v3329 = vunpack.c.l.b16 %v3228
        %v3330 = vunpack.c.l.b16 %v3231
        %v3331 = vunpack.c.l.b16 %v3235
        %v3332 = vunpack.c.l.b16 %v3238
        %v3333 = vunpack.c.l.b16 %v3242
        %v3334 = vunpack.c.l.b16 %v3245
        %v3335 = vunpack.c.l.b16 %v3249
        %v3336 = vunpack.c.l.b16 %v3252
        %v3337 = vunpack.c.l.b16 %v3256
        %v3338 = vunpack.c.l.b16 %v3259
        %v3339 = vunpack.c.l.b16 %v3263
        %v3340 = vunpack.c.l.b16 %v3266
        %v3341 = vunpack.c.l.b16 %v3270
        %v3342 = vunpack.c.l.b16 %v3273
        %v3343 = vunpack.c.l.b16 %v3277
        %v3344 = vunpack.c.l.b16 %v3280
        %v3345 = vunpack.c.l.b16 %v3284
        %v3346 = vunpack.c.l.b16 %v3287
        %v3347 = vunpack.c.l.b16 %v3291
        %v3348 = vunpack.c.l.b16 %v3294
        %v3349 = vunpack.c.l.b16 %v3298
        %v3350 = vunpack.c.l.b16 %v3301
        %v3351 = vunpack.c.l.b16 %v3305
        %v3352 = vunpack.c.l.b16 %v3308
        %v3353 = vunpack.c.l.b16 %v3312
        %v3354 = vunpack.c.l.b16 %v3315
        %v3355 = vunpack.c.l.b16 %v3319
        %v3356 = vunpack.c.l.b16 %v3322
        %v3357 = vpack.c.b16 %v3326, %v3325
        %v3358 = vpack.c.b16 %v3328, %v3327
        %v3359 = vpack.c.b16 %v3330, %v3329
        %v3360 = vpack.c.b16 %v3332, %v3331
        %v3361 = vpack.c.b16 %v3334, %v3333
        %v3362 = vpack.c.b16 %v3336, %v3335
        %v3363 = vpack.c.b16 %v3338, %v3337
        %v3364 = vpack.c.b16 %v3340, %v3339
        %v3365 = vpack.c.b16 %v3342, %v3341
        %v3366 = vpack.c.b16 %v3344, %v3343
        %v3367 = vpack.c.b16 %v3346, %v3345
        %v3368 = vpack.c.b16 %v3348, %v3347
        %v3369 = vpack.c.b16 %v3350, %v3349
        %v3370 = vpack.c.b16 %v3352, %v3351
        %v3371 = vpack.c.b16 %v3354, %v3353
        %v3372 = vpack.c.b16 %v3356, %v3355
        %v3374 = vsel %vm294, %v3357, 0
        %v3377 = vsel %vm294, %v3358, 0
        %v3380 = vsel %vm294, %v3359, 0
        %v3383 = vsel %vm294, %v3360, 0
        %v3386 = vsel %vm294, %v3361, 0
        %v3389 = vsel %vm294, %v3362, 0
        %v3392 = vsel %vm294, %v3363, 0
        %v3395 = vsel %vm294, %v3364, 0
        %v3398 = vsel %vm294, %v3365, 0
        %v3401 = vsel %vm294, %v3366, 0
        %v3404 = vsel %vm294, %v3367, 0
        %v3407 = vsel %vm294, %v3368, 0
        %v3410 = vsel %vm294, %v3369, 0
        %v3413 = vsel %vm294, %v3370, 0
        %v3416 = vsel %vm294, %v3371, 0
        %v3419 = vsel %vm294, %v3372, 0
        %v3422 = vsel %vm343, %v3324, 0
        %3424 = vmatprep.subr.bf16.mxu0 0
        %3425 = vmatpush1.bf16.msra.mxu0 %v3422
        %3426 = vmatprep.subr.bf16.mxu0 0
        %3427 = vmatpush1.bf16.msra.mxu0 0
        %3428 = vmatprep.subr.bf16.mxu0 0
        %3429 = vmatpush1.bf16.msra.mxu0 0
        %3430 = vmatprep.subr.bf16.mxu0 0
        %3431 = vmatpush1.bf16.msra.mxu0 0
        %3432 = vmatprep.subr.bf16.mxu0 0
        %3433 = vmatpush1.bf16.msra.mxu0 0
        %3434 = vmatprep.subr.bf16.mxu0 0
        %3435 = vmatpush1.bf16.msra.mxu0 0
        %3436 = vmatprep.subr.bf16.mxu0 0
        %3437 = vmatpush1.bf16.msra.mxu0 0
        %3438 = vmatprep.subr.bf16.mxu0 0
        %3439 = vmatpush1.bf16.msra.mxu0 0
        %3440 = vmatprep.subr.bf16.mxu0 0
        %3441 = vmatpush1.bf16.msra.mxu0 0
        %3442 = vmatprep.subr.bf16.mxu0 0
        %3443 = vmatpush1.bf16.msra.mxu0 0
        %3444 = vmatprep.subr.bf16.mxu0 0
        %3445 = vmatpush1.bf16.msra.mxu0 0
        %3446 = vmatprep.subr.bf16.mxu0 0
        %3447 = vmatpush1.bf16.msra.mxu0 0
        %3448 = vmatprep.subr.bf16.mxu0 0
        %3449 = vmatpush1.bf16.msra.mxu0 0
        %3450 = vmatprep.subr.bf16.mxu0 0
        %3451 = vmatpush1.bf16.msra.mxu0 0
        %3452 = vmatprep.subr.bf16.mxu0 0
        %3453 = vmatpush1.bf16.msra.mxu0 0
        %3454 = vmatprep.subr.bf16.mxu0 0
        %3455 = vmatpush1.bf16.msra.mxu0 0
        %3456 = vmatprep.mubr.bf16.mxu0 0
        %3457 = vmatmul.mubr.bf16.gmra.mrb[0].mxu0 %v3374
        %v3458 = vpop.f32.mrb[0].mxu0
        %v3459 = vadd.f32 0.0, %v3458
        %v3460 = vpop.f32.mrb[0].mxu0
        %v3461 = vpop.f32.mrb[0].mxu0
        %v3462 = vadd.f32 0.0, %v3461
        %v3463 = vpop.f32.mrb[0].mxu0
        %3464 = vmatprep.mubr.bf16.mxu0 0
        %3465 = vmatmul.mubr.bf16.gmra.mrb[0].mxu0 %v3377
        %v3466 = vpop.f32.mrb[0].mxu0
        %v3467 = vadd.f32 0.0, %v3466
        %v3468 = vpop.f32.mrb[0].mxu0
        %v3469 = vpop.f32.mrb[0].mxu0
        %v3470 = vadd.f32 0.0, %v3469
        %v3471 = vpop.f32.mrb[0].mxu0
        %3472 = vmatprep.mubr.bf16.mxu0 0
        %3473 = vmatmul.mubr.bf16.gmra.mrb[0].mxu0 %v3380
        %v3474 = vpop.f32.mrb[0].mxu0
        %v3475 = vadd.f32 0.0, %v3474
        %v3476 = vpop.f32.mrb[0].mxu0
        %v3477 = vpop.f32.mrb[0].mxu0
        %v3478 = vadd.f32 0.0, %v3477
        %v3479 = vpop.f32.mrb[0].mxu0
        %3480 = vmatprep.mubr.bf16.mxu0 0
        %3481 = vmatmul.mubr.bf16.gmra.mrb[0].mxu0 %v3383
        %v3482 = vpop.f32.mrb[0].mxu0
        %v3483 = vadd.f32 0.0, %v3482
        %v3484 = vpop.f32.mrb[0].mxu0
        %v3485 = vpop.f32.mrb[0].mxu0
        %v3486 = vadd.f32 0.0, %v3485
        %v3487 = vpop.f32.mrb[0].mxu0
        %3488 = vmatprep.mubr.bf16.mxu0 0
        %3489 = vmatmul.mubr.bf16.gmra.mrb[0].mxu0 %v3386
        %v3490 = vpop.f32.mrb[0].mxu0
        %v3491 = vadd.f32 0.0, %v3490
        %v3492 = vpop.f32.mrb[0].mxu0
        %v3493 = vpop.f32.mrb[0].mxu0
        %v3494 = vadd.f32 0.0, %v3493
        %v3495 = vpop.f32.mrb[0].mxu0
        %3496 = vmatprep.mubr.bf16.mxu0 0
        %3497 = vmatmul.mubr.bf16.gmra.mrb[0].mxu0 %v3389
        %v3498 = vpop.f32.mrb[0].mxu0
        %v3499 = vadd.f32 0.0, %v3498
        %v3500 = vpop.f32.mrb[0].mxu0
        %v3501 = vpop.f32.mrb[0].mxu0
        %v3502 = vadd.f32 0.0, %v3501
        %v3503 = vpop.f32.mrb[0].mxu0
        %3504 = vmatprep.mubr.bf16.mxu0 0
        %3505 = vmatmul.mubr.bf16.gmra.mrb[0].mxu0 %v3392
        %v3506 = vpop.f32.mrb[0].mxu0
        %v3507 = vadd.f32 0.0, %v3506
        %v3508 = vpop.f32.mrb[0].mxu0
        %v3509 = vpop.f32.mrb[0].mxu0
        %v3510 = vadd.f32 0.0, %v3509
        %v3511 = vpop.f32.mrb[0].mxu0
        %3512 = vmatprep.mubr.bf16.mxu0 0
        %3513 = vmatmul.mubr.bf16.gmra.mrb[0].mxu0 %v3395
        %v3514 = vpop.f32.mrb[0].mxu0
        %v3515 = vadd.f32 0.0, %v3514
        %v3516 = vpop.f32.mrb[0].mxu0
        %v3517 = vpop.f32.mrb[0].mxu0
        %v3518 = vadd.f32 0.0, %v3517
        %v3519 = vpop.f32.mrb[0].mxu0
        %3520 = vmatprep.mubr.bf16.mxu0 0
        %3521 = vmatmul.mubr.bf16.gmra.mrb[0].mxu0 %v3398
        %v3522 = vpop.f32.mrb[0].mxu0
        %v3523 = vadd.f32 0.0, %v3522
        %v3524 = vpop.f32.mrb[0].mxu0
        %v3525 = vpop.f32.mrb[0].mxu0
        %v3526 = vadd.f32 0.0, %v3525
        %v3527 = vpop.f32.mrb[0].mxu0
        %3528 = vmatprep.mubr.bf16.mxu0 0
        %3529 = vmatmul.mubr.bf16.gmra.mrb[0].mxu0 %v3401
        %v3530 = vpop.f32.mrb[0].mxu0
        %v3531 = vadd.f32 0.0, %v3530
        %v3532 = vpop.f32.mrb[0].mxu0
        %v3533 = vpop.f32.mrb[0].mxu0
        %v3534 = vadd.f32 0.0, %v3533
        %v3535 = vpop.f32.mrb[0].mxu0
        %3536 = vmatprep.mubr.bf16.mxu0 0
        %3537 = vmatmul.mubr.bf16.gmra.mrb[0].mxu0 %v3404
        %v3538 = vpop.f32.mrb[0].mxu0
        %v3539 = vadd.f32 0.0, %v3538
        %v3540 = vpop.f32.mrb[0].mxu0
        %v3541 = vpop.f32.mrb[0].mxu0
        %v3542 = vadd.f32 0.0, %v3541
        %v3543 = vpop.f32.mrb[0].mxu0
        %3544 = vmatprep.mubr.bf16.mxu0 0
        %3545 = vmatmul.mubr.bf16.gmra.mrb[0].mxu0 %v3407
        %v3546 = vpop.f32.mrb[0].mxu0
        %v3547 = vadd.f32 0.0, %v3546
        %v3548 = vpop.f32.mrb[0].mxu0
        %v3549 = vpop.f32.mrb[0].mxu0
        %v3550 = vadd.f32 0.0, %v3549
        %v3551 = vpop.f32.mrb[0].mxu0
        %3552 = vmatprep.mubr.bf16.mxu0 0
        %3553 = vmatmul.mubr.bf16.gmra.mrb[0].mxu0 %v3410
        %v3554 = vpop.f32.mrb[0].mxu0
        %v3555 = vadd.f32 0.0, %v3554
        %v3556 = vpop.f32.mrb[0].mxu0
        %v3557 = vpop.f32.mrb[0].mxu0
        %v3558 = vadd.f32 0.0, %v3557
        %v3559 = vpop.f32.mrb[0].mxu0
        %3560 = vmatprep.mubr.bf16.mxu0 0
        %3561 = vmatmul.mubr.bf16.gmra.mrb[0].mxu0 %v3413
        %v3562 = vpop.f32.mrb[0].mxu0
        %v3563 = vadd.f32 0.0, %v3562
        %v3564 = vpop.f32.mrb[0].mxu0
        %v3565 = vpop.f32.mrb[0].mxu0
        %v3566 = vadd.f32 0.0, %v3565
        %v3567 = vpop.f32.mrb[0].mxu0
        %3568 = vmatprep.mubr.bf16.mxu0 0
        %3569 = vmatmul.mubr.bf16.gmra.mrb[0].mxu0 %v3416
        %v3570 = vpop.f32.mrb[0].mxu0
        %v3571 = vadd.f32 0.0, %v3570
        %v3572 = vpop.f32.mrb[0].mxu0
        %v3573 = vpop.f32.mrb[0].mxu0
        %v3574 = vadd.f32 0.0, %v3573
        %v3575 = vpop.f32.mrb[0].mxu0
        %3576 = vmatprep.mubr.bf16.mxu0 0
        %3577 = vmatmul.mubr.bf16.gmra.mrb[0].mxu0 %v3419
        %v3578 = vpop.f32.mrb[0].mxu0
        %v3579 = vadd.f32 0.0, %v3578
        %v3580 = vpop.f32.mrb[0].mxu0
        %v3581 = vpop.f32.mrb[0].mxu0
        %v3582 = vadd.f32 0.0, %v3581
        %v3583 = vpop.f32.mrb[0].mxu0
        %3584 = vdwg.mxu0
        %v3585 = vld [vmem:[#allocation2] sm:$0xff]
        %v3586 = vld [vmem:[#allocation2 + $0x8] sm:$0xff]
        %v3587 = vld [vmem:[#allocation2 + $0x10] sm:$0xff]
        %v3588 = vld [vmem:[#allocation2 + $0x18] sm:$0xff]
        %v3589 = vld [vmem:[#allocation2 + $0x20] sm:$0xff]
        %v3590 = vld [vmem:[#allocation2 + $0x28] sm:$0xff]
        %v3591 = vld [vmem:[#allocation2 + $0x30] sm:$0xff]
        %v3592 = vld [vmem:[#allocation2 + $0x38] sm:$0xff]
        %v3593 = vld [vmem:[#allocation2 + $0x40] sm:$0xff]
        %v3594 = vld [vmem:[#allocation2 + $0x48] sm:$0xff]
        %v3595 = vld [vmem:[#allocation2 + $0x50] sm:$0xff]
        %v3596 = vld [vmem:[#allocation2 + $0x58] sm:$0xff]
        %v3597 = vld [vmem:[#allocation2 + $0x60] sm:$0xff]
        %v3598 = vld [vmem:[#allocation2 + $0x68] sm:$0xff]
        %v3599 = vld [vmem:[#allocation2 + $0x70] sm:$0xff]
        %v3600 = vld [vmem:[#allocation2 + $0x78] sm:$0xff]
        %v3601 = vld [vmem:[#allocation2 + $0x80] sm:$0xff]
        %v3602 = vld [vmem:[#allocation2 + $0x88] sm:$0xff]
        %v3603 = vld [vmem:[#allocation2 + $0x90] sm:$0xff]
        %v3604 = vld [vmem:[#allocation2 + $0x98] sm:$0xff]
        %v3605 = vld [vmem:[#allocation2 + $0xa0] sm:$0xff]
        %v3606 = vld [vmem:[#allocation2 + $0xa8] sm:$0xff]
        %v3607 = vld [vmem:[#allocation2 + $0xb0] sm:$0xff]
        %v3608 = vld [vmem:[#allocation2 + $0xb8] sm:$0xff]
        %v3609 = vld [vmem:[#allocation2 + $0xc0] sm:$0xff]
        %v3610 = vld [vmem:[#allocation2 + $0xc8] sm:$0xff]
        %v3611 = vld [vmem:[#allocation2 + $0xd0] sm:$0xff]
        %v3612 = vld [vmem:[#allocation2 + $0xd8] sm:$0xff]
        %v3613 = vld [vmem:[#allocation2 + $0xe0] sm:$0xff]
        %v3614 = vld [vmem:[#allocation2 + $0xe8] sm:$0xff]
        %v3615 = vld [vmem:[#allocation2 + $0xf0] sm:$0xff]
        %v3616 = vld [vmem:[#allocation2 + $0xf8] sm:$0xff]
        %v3617 = vadd.f32 %v3585, %v3459
        %v3618 = vadd.f32 %v3586, %v3462
        %v3619 = vadd.f32 %v3587, %v3467
        %v3620 = vadd.f32 %v3588, %v3470
        %v3621 = vadd.f32 %v3589, %v3475
        %v3622 = vadd.f32 %v3590, %v3478
        %v3623 = vadd.f32 %v3591, %v3483
        %v3624 = vadd.f32 %v3592, %v3486
        %v3625 = vadd.f32 %v3593, %v3491
        %v3626 = vadd.f32 %v3594, %v3494
        %v3627 = vadd.f32 %v3595, %v3499
        %v3628 = vadd.f32 %v3596, %v3502
        %v3629 = vadd.f32 %v3597, %v3507
        %v3630 = vadd.f32 %v3598, %v3510
        %v3631 = vadd.f32 %v3599, %v3515
        %v3632 = vadd.f32 %v3600, %v3518
        %v3633 = vadd.f32 %v3601, %v3523
        %v3634 = vadd.f32 %v3602, %v3526
        %v3635 = vadd.f32 %v3603, %v3531
        %v3636 = vadd.f32 %v3604, %v3534
        %v3637 = vadd.f32 %v3605, %v3539
        %v3638 = vadd.f32 %v3606, %v3542
        %v3639 = vadd.f32 %v3607, %v3547
        %v3640 = vadd.f32 %v3608, %v3550
        %v3641 = vadd.f32 %v3609, %v3555
        %v3642 = vadd.f32 %v3610, %v3558
        %v3643 = vadd.f32 %v3611, %v3563
        %v3644 = vadd.f32 %v3612, %v3566
        %v3645 = vadd.f32 %v3613, %v3571
        %v3646 = vadd.f32 %v3614, %v3574
        %v3647 = vadd.f32 %v3615, %v3579
        %v3648 = vadd.f32 %v3616, %v3582
        %3649 = vst [vmem:[#allocation2] sm:$0xff] %v3617
        %3650 = vst [vmem:[#allocation2 + $0x8] sm:$0xff] %v3618
        %3651 = vst [vmem:[#allocation2 + $0x10] sm:$0xff] %v3619
        %3652 = vst [vmem:[#allocation2 + $0x18] sm:$0xff] %v3620
        %3653 = vst [vmem:[#allocation2 + $0x20] sm:$0xff] %v3621
        %3654 = vst [vmem:[#allocation2 + $0x28] sm:$0xff] %v3622
        %3655 = vst [vmem:[#allocation2 + $0x30] sm:$0xff] %v3623
        %3656 = vst [vmem:[#allocation2 + $0x38] sm:$0xff] %v3624
        %3657 = vst [vmem:[#allocation2 + $0x40] sm:$0xff] %v3625
        %3658 = vst [vmem:[#allocation2 + $0x48] sm:$0xff] %v3626
        %3659 = vst [vmem:[#allocation2 + $0x50] sm:$0xff] %v3627
        %3660 = vst [vmem:[#allocation2 + $0x58] sm:$0xff] %v3628
        %3661 = vst [vmem:[#allocation2 + $0x60] sm:$0xff] %v3629
        %3662 = vst [vmem:[#allocation2 + $0x68] sm:$0xff] %v3630
        %3663 = vst [vmem:[#allocation2 + $0x70] sm:$0xff] %v3631
        %3664 = vst [vmem:[#allocation2 + $0x78] sm:$0xff] %v3632
        %3665 = vst [vmem:[#allocation2 + $0x80] sm:$0xff] %v3633
        %3666 = vst [vmem:[#allocation2 + $0x88] sm:$0xff] %v3634
        %3667 = vst [vmem:[#allocation2 + $0x90] sm:$0xff] %v3635
        %3668 = vst [vmem:[#allocation2 + $0x98] sm:$0xff] %v3636
        %3669 = vst [vmem:[#allocation2 + $0xa0] sm:$0xff] %v3637
        %3670 = vst [vmem:[#allocation2 + $0xa8] sm:$0xff] %v3638
        %3671 = vst [vmem:[#allocation2 + $0xb0] sm:$0xff] %v3639
        %3672 = vst [vmem:[#allocation2 + $0xb8] sm:$0xff] %v3640
        %3673 = vst [vmem:[#allocation2 + $0xc0] sm:$0xff] %v3641
        %3674 = vst [vmem:[#allocation2 + $0xc8] sm:$0xff] %v3642
        %3675 = vst [vmem:[#allocation2 + $0xd0] sm:$0xff] %v3643
        %3676 = vst [vmem:[#allocation2 + $0xd8] sm:$0xff] %v3644
        %3677 = vst [vmem:[#allocation2 + $0xe0] sm:$0xff] %v3645
        %3678 = vst [vmem:[#allocation2 + $0xe8] sm:$0xff] %v3646
        %3679 = vst [vmem:[#allocation2 + $0xf0] sm:$0xff] %v3647
        %3680 = vst [vmem:[#allocation2 + $0xf8] sm:$0xff] %v3648
        %s3681 = scalar_lea.vmem %s179, 24
        %v3682 = vld [vmem:[%s3681] sm:$0xf]
        %v3683 = vld [vmem:[%s3681 + $0x4] sm:$0xf]
        %v3684 = vld [vmem:[%s3681 + $0xc] sm:$0xf]
        %v3685 = vld [vmem:[%s3681 + $0x10] sm:$0xf]
        %v3686 = vld [vmem:[%s3681 + $0x18] sm:$0xf]
        %v3687 = vld [vmem:[%s3681 + $0x1c] sm:$0xf]
        %v3688 = vld [vmem:[%s3681 + $0x24] sm:$0xf]
        %v3689 = vld [vmem:[%s3681 + $0x28] sm:$0xf]
        %v3690 = vld [vmem:[%s3681 + $0x30] sm:$0xf]
        %v3691 = vld [vmem:[%s3681 + $0x34] sm:$0xf]
        %v3692 = vld [vmem:[%s3681 + $0x3c] sm:$0xf]
        %v3693 = vld [vmem:[%s3681 + $0x40] sm:$0xf]
        %v3694 = vld [vmem:[%s3681 + $0x48] sm:$0xf]
        %v3695 = vld [vmem:[%s3681 + $0x4c] sm:$0xf]
        %v3696 = vld [vmem:[%s3681 + $0x54] sm:$0xf]
        %v3697 = vld [vmem:[%s3681 + $0x58] sm:$0xf]
        %v3698 = vld [vmem:[%s3681 + $0x60] sm:$0xf]
        %v3699 = vld [vmem:[%s3681 + $0x64] sm:$0xf]
        %v3700 = vld [vmem:[%s3681 + $0x6c] sm:$0xf]
        %v3701 = vld [vmem:[%s3681 + $0x70] sm:$0xf]
        %v3702 = vld [vmem:[%s3681 + $0x78] sm:$0xf]
        %v3703 = vld [vmem:[%s3681 + $0x7c] sm:$0xf]
        %v3704 = vld [vmem:[%s3681 + $0x84] sm:$0xf]
        %v3705 = vld [vmem:[%s3681 + $0x88] sm:$0xf]
        %v3706 = vld [vmem:[%s3681 + $0x90] sm:$0xf]
        %v3707 = vld [vmem:[%s3681 + $0x94] sm:$0xf]
        %v3708 = vld [vmem:[%s3681 + $0x9c] sm:$0xf]
        %v3709 = vld [vmem:[%s3681 + $0xa0] sm:$0xf]
        %v3710 = vld [vmem:[%s3681 + $0xa8] sm:$0xf]
        %v3711 = vld [vmem:[%s3681 + $0xac] sm:$0xf]
        %v3712 = vld [vmem:[%s3681 + $0xb4] sm:$0xf]
        %v3713 = vld [vmem:[%s3681 + $0xb8] sm:$0xf]
        %s3714 = scalar_lea.vmem %s1, 24
        %v3715 = vld [vmem:[%s3714] sm:$0xf]
        %v3748 = vunpack.c.l.b16 %v3682
        %v3749 = vunpack.c.l.b16 %v3683
        %v3750 = vunpack.c.l.b16 %v3684
        %v3751 = vunpack.c.l.b16 %v3685
        %v3752 = vunpack.c.l.b16 %v3686
        %v3753 = vunpack.c.l.b16 %v3687
        %v3754 = vunpack.c.l.b16 %v3688
        %v3755 = vunpack.c.l.b16 %v3689
        %v3756 = vunpack.c.l.b16 %v3690
        %v3757 = vunpack.c.l.b16 %v3691
        %v3758 = vunpack.c.l.b16 %v3692
        %v3759 = vunpack.c.l.b16 %v3693
        %v3760 = vunpack.c.l.b16 %v3694
        %v3761 = vunpack.c.l.b16 %v3695
        %v3762 = vunpack.c.l.b16 %v3696
        %v3763 = vunpack.c.l.b16 %v3697
        %v3764 = vunpack.c.l.b16 %v3698
        %v3765 = vunpack.c.l.b16 %v3699
        %v3766 = vunpack.c.l.b16 %v3700
        %v3767 = vunpack.c.l.b16 %v3701
        %v3768 = vunpack.c.l.b16 %v3702
        %v3769 = vunpack.c.l.b16 %v3703
        %v3770 = vunpack.c.l.b16 %v3704
        %v3771 = vunpack.c.l.b16 %v3705
        %v3772 = vunpack.c.l.b16 %v3706
        %v3773 = vunpack.c.l.b16 %v3707
        %v3774 = vunpack.c.l.b16 %v3708
        %v3775 = vunpack.c.l.b16 %v3709
        %v3776 = vunpack.c.l.b16 %v3710
        %v3777 = vunpack.c.l.b16 %v3711
        %v3778 = vunpack.c.l.b16 %v3712
        %v3779 = vunpack.c.l.b16 %v3713
        %v3780 = vpack.c.b16 %v3749, %v3748
        %v3781 = vpack.c.b16 %v3751, %v3750
        %v3782 = vpack.c.b16 %v3753, %v3752
        %v3783 = vpack.c.b16 %v3755, %v3754
        %v3784 = vpack.c.b16 %v3757, %v3756
        %v3785 = vpack.c.b16 %v3759, %v3758
        %v3786 = vpack.c.b16 %v3761, %v3760
        %v3787 = vpack.c.b16 %v3763, %v3762
        %v3788 = vpack.c.b16 %v3765, %v3764
        %v3789 = vpack.c.b16 %v3767, %v3766
        %v3790 = vpack.c.b16 %v3769, %v3768
        %v3791 = vpack.c.b16 %v3771, %v3770
        %v3792 = vpack.c.b16 %v3773, %v3772
        %v3793 = vpack.c.b16 %v3775, %v3774
        %v3794 = vpack.c.b16 %v3777, %v3776
        %v3795 = vpack.c.b16 %v3779, %v3778
        %v3797 = vsel %vm294, %v3780, 0
        %v3800 = vsel %vm294, %v3781, 0
        %v3803 = vsel %vm294, %v3782, 0
        %v3806 = vsel %vm294, %v3783, 0
        %v3809 = vsel %vm294, %v3784, 0
        %v3812 = vsel %vm294, %v3785, 0
        %v3815 = vsel %vm294, %v3786, 0
        %v3818 = vsel %vm294, %v3787, 0
        %v3821 = vsel %vm294, %v3788, 0
        %v3824 = vsel %vm294, %v3789, 0
        %v3827 = vsel %vm294, %v3790, 0
        %v3830 = vsel %vm294, %v3791, 0
        %v3833 = vsel %vm294, %v3792, 0
        %v3836 = vsel %vm294, %v3793, 0
        %v3839 = vsel %vm294, %v3794, 0
        %v3842 = vsel %vm294, %v3795, 0
        %v3845 = vsel %vm343, %v3715, 0
        %3847 = vmatprep.subr.bf16.mxu0 0
        %3848 = vmatpush1.bf16.msra.mxu0 %v3845
        %3849 = vmatprep.subr.bf16.mxu0 0
        %3850 = vmatpush1.bf16.msra.mxu0 0
        %3851 = vmatprep.subr.bf16.mxu0 0
        %3852 = vmatpush1.bf16.msra.mxu0 0
        %3853 = vmatprep.subr.bf16.mxu0 0
        %3854 = vmatpush1.bf16.msra.mxu0 0
        %3855 = vmatprep.subr.bf16.mxu0 0
        %3856 = vmatpush1.bf16.msra.mxu0 0
        %3857 = vmatprep.subr.bf16.mxu0 0
        %3858 = vmatpush1.bf16.msra.mxu0 0
        %3859 = vmatprep.subr.bf16.mxu0 0
        %3860 = vmatpush1.bf16.msra.mxu0 0
        %3861 = vmatprep.subr.bf16.mxu0 0
        %3862 = vmatpush1.bf16.msra.mxu0 0
        %3863 = vmatprep.subr.bf16.mxu0 0
        %3864 = vmatpush1.bf16.msra.mxu0 0
        %3865 = vmatprep.subr.bf16.mxu0 0
        %3866 = vmatpush1.bf16.msra.mxu0 0
        %3867 = vmatprep.subr.bf16.mxu0 0
        %3868 = vmatpush1.bf16.msra.mxu0 0
        %3869 = vmatprep.subr.bf16.mxu0 0
        %3870 = vmatpush1.bf16.msra.mxu0 0
        %3871 = vmatprep.subr.bf16.mxu0 0
        %3872 = vmatpush1.bf16.msra.mxu0 0
        %3873 = vmatprep.subr.bf16.mxu0 0
        %3874 = vmatpush1.bf16.msra.mxu0 0
        %3875 = vmatprep.subr.bf16.mxu0 0
        %3876 = vmatpush1.bf16.msra.mxu0 0
        %3877 = vmatprep.subr.bf16.mxu0 0
        %3878 = vmatpush1.bf16.msra.mxu0 0
        %3879 = vmatprep.mubr.bf16.mxu0 0
        %3880 = vmatmul.mubr.bf16.gmra.mrb[0].mxu0 %v3797
        %v3881 = vpop.f32.mrb[0].mxu0
        %v3882 = vadd.f32 0.0, %v3881
        %v3883 = vpop.f32.mrb[0].mxu0
        %v3884 = vpop.f32.mrb[0].mxu0
        %v3885 = vadd.f32 0.0, %v3884
        %v3886 = vpop.f32.mrb[0].mxu0
        %3887 = vmatprep.mubr.bf16.mxu0 0
        %3888 = vmatmul.mubr.bf16.gmra.mrb[0].mxu0 %v3800
        %v3889 = vpop.f32.mrb[0].mxu0
        %v3890 = vadd.f32 0.0, %v3889
        %v3891 = vpop.f32.mrb[0].mxu0
        %v3892 = vpop.f32.mrb[0].mxu0
        %v3893 = vadd.f32 0.0, %v3892
        %v3894 = vpop.f32.mrb[0].mxu0
        %3895 = vmatprep.mubr.bf16.mxu0 0
        %3896 = vmatmul.mubr.bf16.gmra.mrb[0].mxu0 %v3803
        %v3897 = vpop.f32.mrb[0].mxu0
        %v3898 = vadd.f32 0.0, %v3897
        %v3899 = vpop.f32.mrb[0].mxu0
        %v3900 = vpop.f32.mrb[0].mxu0
        %v3901 = vadd.f32 0.0, %v3900
        %v3902 = vpop.f32.mrb[0].mxu0
        %3903 = vmatprep.mubr.bf16.mxu0 0
        %3904 = vmatmul.mubr.bf16.gmra.mrb[0].mxu0 %v3806
        %v3905 = vpop.f32.mrb[0].mxu0
        %v3906 = vadd.f32 0.0, %v3905
        %v3907 = vpop.f32.mrb[0].mxu0
        %v3908 = vpop.f32.mrb[0].mxu0
        %v3909 = vadd.f32 0.0, %v3908
        %v3910 = vpop.f32.mrb[0].mxu0
        %3911 = vmatprep.mubr.bf16.mxu0 0
        %3912 = vmatmul.mubr.bf16.gmra.mrb[0].mxu0 %v3809
        %v3913 = vpop.f32.mrb[0].mxu0
        %v3914 = vadd.f32 0.0, %v3913
        %v3915 = vpop.f32.mrb[0].mxu0
        %v3916 = vpop.f32.mrb[0].mxu0
        %v3917 = vadd.f32 0.0, %v3916
        %v3918 = vpop.f32.mrb[0].mxu0
        %3919 = vmatprep.mubr.bf16.mxu0 0
        %3920 = vmatmul.mubr.bf16.gmra.mrb[0].mxu0 %v3812
        %v3921 = vpop.f32.mrb[0].mxu0
        %v3922 = vadd.f32 0.0, %v3921
        %v3923 = vpop.f32.mrb[0].mxu0
        %v3924 = vpop.f32.mrb[0].mxu0
        %v3925 = vadd.f32 0.0, %v3924
        %v3926 = vpop.f32.mrb[0].mxu0
        %3927 = vmatprep.mubr.bf16.mxu0 0
        %3928 = vmatmul.mubr.bf16.gmra.mrb[0].mxu0 %v3815
        %v3929 = vpop.f32.mrb[0].mxu0
        %v3930 = vadd.f32 0.0, %v3929
        %v3931 = vpop.f32.mrb[0].mxu0
        %v3932 = vpop.f32.mrb[0].mxu0
        %v3933 = vadd.f32 0.0, %v3932
        %v3934 = vpop.f32.mrb[0].mxu0
        %3935 = vmatprep.mubr.bf16.mxu0 0
        %3936 = vmatmul.mubr.bf16.gmra.mrb[0].mxu0 %v3818
        %v3937 = vpop.f32.mrb[0].mxu0
        %v3938 = vadd.f32 0.0, %v3937
        %v3939 = vpop.f32.mrb[0].mxu0
        %v3940 = vpop.f32.mrb[0].mxu0
        %v3941 = vadd.f32 0.0, %v3940
        %v3942 = vpop.f32.mrb[0].mxu0
        %3943 = vmatprep.mubr.bf16.mxu0 0
        %3944 = vmatmul.mubr.bf16.gmra.mrb[0].mxu0 %v3821
        %v3945 = vpop.f32.mrb[0].mxu0
        %v3946 = vadd.f32 0.0, %v3945
        %v3947 = vpop.f32.mrb[0].mxu0
        %v3948 = vpop.f32.mrb[0].mxu0
        %v3949 = vadd.f32 0.0, %v3948
        %v3950 = vpop.f32.mrb[0].mxu0
        %3951 = vmatprep.mubr.bf16.mxu0 0
        %3952 = vmatmul.mubr.bf16.gmra.mrb[0].mxu0 %v3824
        %v3953 = vpop.f32.mrb[0].mxu0
        %v3954 = vadd.f32 0.0, %v3953
        %v3955 = vpop.f32.mrb[0].mxu0
        %v3956 = vpop.f32.mrb[0].mxu0
        %v3957 = vadd.f32 0.0, %v3956
        %v3958 = vpop.f32.mrb[0].mxu0
        %3959 = vmatprep.mubr.bf16.mxu0 0
        %3960 = vmatmul.mubr.bf16.gmra.mrb[0].mxu0 %v3827
        %v3961 = vpop.f32.mrb[0].mxu0
        %v3962 = vadd.f32 0.0, %v3961
        %v3963 = vpop.f32.mrb[0].mxu0
        %v3964 = vpop.f32.mrb[0].mxu0
        %v3965 = vadd.f32 0.0, %v3964
        %v3966 = vpop.f32.mrb[0].mxu0
        %3967 = vmatprep.mubr.bf16.mxu0 0
        %3968 = vmatmul.mubr.bf16.gmra.mrb[0].mxu0 %v3830
        %v3969 = vpop.f32.mrb[0].mxu0
        %v3970 = vadd.f32 0.0, %v3969
        %v3971 = vpop.f32.mrb[0].mxu0
        %v3972 = vpop.f32.mrb[0].mxu0
        %v3973 = vadd.f32 0.0, %v3972
        %v3974 = vpop.f32.mrb[0].mxu0
        %3975 = vmatprep.mubr.bf16.mxu0 0
        %3976 = vmatmul.mubr.bf16.gmra.mrb[0].mxu0 %v3833
        %v3977 = vpop.f32.mrb[0].mxu0
        %v3978 = vadd.f32 0.0, %v3977
        %v3979 = vpop.f32.mrb[0].mxu0
        %v3980 = vpop.f32.mrb[0].mxu0
        %v3981 = vadd.f32 0.0, %v3980
        %v3982 = vpop.f32.mrb[0].mxu0
        %3983 = vmatprep.mubr.bf16.mxu0 0
        %3984 = vmatmul.mubr.bf16.gmra.mrb[0].mxu0 %v3836
        %v3985 = vpop.f32.mrb[0].mxu0
        %v3986 = vadd.f32 0.0, %v3985
        %v3987 = vpop.f32.mrb[0].mxu0
        %v3988 = vpop.f32.mrb[0].mxu0
        %v3989 = vadd.f32 0.0, %v3988
        %v3990 = vpop.f32.mrb[0].mxu0
        %3991 = vmatprep.mubr.bf16.mxu0 0
        %3992 = vmatmul.mubr.bf16.gmra.mrb[0].mxu0 %v3839
        %v3993 = vpop.f32.mrb[0].mxu0
        %v3994 = vadd.f32 0.0, %v3993
        %v3995 = vpop.f32.mrb[0].mxu0
        %v3996 = vpop.f32.mrb[0].mxu0
        %v3997 = vadd.f32 0.0, %v3996
        %v3998 = vpop.f32.mrb[0].mxu0
        %3999 = vmatprep.mubr.bf16.mxu0 0
        %4000 = vmatmul.mubr.bf16.gmra.mrb[0].mxu0 %v3842
        %v4001 = vpop.f32.mrb[0].mxu0
        %v4002 = vadd.f32 0.0, %v4001
        %v4003 = vpop.f32.mrb[0].mxu0
        %v4004 = vpop.f32.mrb[0].mxu0
        %v4005 = vadd.f32 0.0, %v4004
        %v4006 = vpop.f32.mrb[0].mxu0
        %4007 = vdwg.mxu0
        %v4008 = vld [vmem:[#allocation2] sm:$0xff]
        %v4009 = vld [vmem:[#allocation2 + $0x8] sm:$0xff]
        %v4010 = vld [vmem:[#allocation2 + $0x10] sm:$0xff]
        %v4011 = vld [vmem:[#allocation2 + $0x18] sm:$0xff]
        %v4012 = vld [vmem:[#allocation2 + $0x20] sm:$0xff]
        %v4013 = vld [vmem:[#allocation2 + $0x28] sm:$0xff]
        %v4014 = vld [vmem:[#allocation2 + $0x30] sm:$0xff]
        %v4015 = vld [vmem:[#allocation2 + $0x38] sm:$0xff]
        %v4016 = vld [vmem:[#allocation2 + $0x40] sm:$0xff]
        %v4017 = vld [vmem:[#allocation2 + $0x48] sm:$0xff]
        %v4018 = vld [vmem:[#allocation2 + $0x50] sm:$0xff]
        %v4019 = vld [vmem:[#allocation2 + $0x58] sm:$0xff]
        %v4020 = vld [vmem:[#allocation2 + $0x60] sm:$0xff]
        %v4021 = vld [vmem:[#allocation2 + $0x68] sm:$0xff]
        %v4022 = vld [vmem:[#allocation2 + $0x70] sm:$0xff]
        %v4023 = vld [vmem:[#allocation2 + $0x78] sm:$0xff]
        %v4024 = vld [vmem:[#allocation2 + $0x80] sm:$0xff]
        %v4025 = vld [vmem:[#allocation2 + $0x88] sm:$0xff]
        %v4026 = vld [vmem:[#allocation2 + $0x90] sm:$0xff]
        %v4027 = vld [vmem:[#allocation2 + $0x98] sm:$0xff]
        %v4028 = vld [vmem:[#allocation2 + $0xa0] sm:$0xff]
        %v4029 = vld [vmem:[#allocation2 + $0xa8] sm:$0xff]
        %v4030 = vld [vmem:[#allocation2 + $0xb0] sm:$0xff]
        %v4031 = vld [vmem:[#allocation2 + $0xb8] sm:$0xff]
        %v4032 = vld [vmem:[#allocation2 + $0xc0] sm:$0xff]
        %v4033 = vld [vmem:[#allocation2 + $0xc8] sm:$0xff]
        %v4034 = vld [vmem:[#allocation2 + $0xd0] sm:$0xff]
        %v4035 = vld [vmem:[#allocation2 + $0xd8] sm:$0xff]
        %v4036 = vld [vmem:[#allocation2 + $0xe0] sm:$0xff]
        %v4037 = vld [vmem:[#allocation2 + $0xe8] sm:$0xff]
        %v4038 = vld [vmem:[#allocation2 + $0xf0] sm:$0xff]
        %v4039 = vld [vmem:[#allocation2 + $0xf8] sm:$0xff]
        %v4040 = vadd.f32 %v4008, %v3882
        %v4041 = vadd.f32 %v4009, %v3885
        %v4042 = vadd.f32 %v4010, %v3890
        %v4043 = vadd.f32 %v4011, %v3893
        %v4044 = vadd.f32 %v4012, %v3898
        %v4045 = vadd.f32 %v4013, %v3901
        %v4046 = vadd.f32 %v4014, %v3906
        %v4047 = vadd.f32 %v4015, %v3909
        %v4048 = vadd.f32 %v4016, %v3914
        %v4049 = vadd.f32 %v4017, %v3917
        %v4050 = vadd.f32 %v4018, %v3922
        %v4051 = vadd.f32 %v4019, %v3925
        %v4052 = vadd.f32 %v4020, %v3930
        %v4053 = vadd.f32 %v4021, %v3933
        %v4054 = vadd.f32 %v4022, %v3938
        %v4055 = vadd.f32 %v4023, %v3941
        %v4056 = vadd.f32 %v4024, %v3946
        %v4057 = vadd.f32 %v4025, %v3949
        %v4058 = vadd.f32 %v4026, %v3954
        %v4059 = vadd.f32 %v4027, %v3957
        %v4060 = vadd.f32 %v4028, %v3962
        %v4061 = vadd.f32 %v4029, %v3965
        %v4062 = vadd.f32 %v4030, %v3970
        %v4063 = vadd.f32 %v4031, %v3973
        %v4064 = vadd.f32 %v4032, %v3978
        %v4065 = vadd.f32 %v4033, %v3981
        %v4066 = vadd.f32 %v4034, %v3986
        %v4067 = vadd.f32 %v4035, %v3989
        %v4068 = vadd.f32 %v4036, %v3994
        %v4069 = vadd.f32 %v4037, %v3997
        %v4070 = vadd.f32 %v4038, %v4002
        %v4071 = vadd.f32 %v4039, %v4005
        %4072 = vst [vmem:[#allocation2] sm:$0xff] %v4040
        %4073 = vst [vmem:[#allocation2 + $0x8] sm:$0xff] %v4041
        %4074 = vst [vmem:[#allocation2 + $0x10] sm:$0xff] %v4042
        %4075 = vst [vmem:[#allocation2 + $0x18] sm:$0xff] %v4043
        %4076 = vst [vmem:[#allocation2 + $0x20] sm:$0xff] %v4044
        %4077 = vst [vmem:[#allocation2 + $0x28] sm:$0xff] %v4045
        %4078 = vst [vmem:[#allocation2 + $0x30] sm:$0xff] %v4046
        %4079 = vst [vmem:[#allocation2 + $0x38] sm:$0xff] %v4047
        %4080 = vst [vmem:[#allocation2 + $0x40] sm:$0xff] %v4048
        %4081 = vst [vmem:[#allocation2 + $0x48] sm:$0xff] %v4049
        %4082 = vst [vmem:[#allocation2 + $0x50] sm:$0xff] %v4050
        %4083 = vst [vmem:[#allocation2 + $0x58] sm:$0xff] %v4051
        %4084 = vst [vmem:[#allocation2 + $0x60] sm:$0xff] %v4052
        %4085 = vst [vmem:[#allocation2 + $0x68] sm:$0xff] %v4053
        %4086 = vst [vmem:[#allocation2 + $0x70] sm:$0xff] %v4054
        %4087 = vst [vmem:[#allocation2 + $0x78] sm:$0xff] %v4055
        %4088 = vst [vmem:[#allocation2 + $0x80] sm:$0xff] %v4056
        %4089 = vst [vmem:[#allocation2 + $0x88] sm:$0xff] %v4057
        %4090 = vst [vmem:[#allocation2 + $0x90] sm:$0xff] %v4058
        %4091 = vst [vmem:[#allocation2 + $0x98] sm:$0xff] %v4059
        %4092 = vst [vmem:[#allocation2 + $0xa0] sm:$0xff] %v4060
        %4093 = vst [vmem:[#allocation2 + $0xa8] sm:$0xff] %v4061
        %4094 = vst [vmem:[#allocation2 + $0xb0] sm:$0xff] %v4062
        %4095 = vst [vmem:[#allocation2 + $0xb8] sm:$0xff] %v4063
        %4096 = vst [vmem:[#allocation2 + $0xc0] sm:$0xff] %v4064
        %4097 = vst [vmem:[#allocation2 + $0xc8] sm:$0xff] %v4065
        %4098 = vst [vmem:[#allocation2 + $0xd0] sm:$0xff] %v4066
        %4099 = vst [vmem:[#allocation2 + $0xd8] sm:$0xff] %v4067
        %4100 = vst [vmem:[#allocation2 + $0xe0] sm:$0xff] %v4068
        %4101 = vst [vmem:[#allocation2 + $0xe8] sm:$0xff] %v4069
        %4102 = vst [vmem:[#allocation2 + $0xf0] sm:$0xff] %v4070
        %4103 = vst [vmem:[#allocation2 + $0xf8] sm:$0xff] %v4071
        %v4104 = vld [vmem:[%s3681] sm:$0xf]
        %v4105 = vld [vmem:[%s3681 + $0x4] sm:$0xf]
        %v4106 = vld [vmem:[%s3681 + $0x8] sm:$0x1]
        %v4107 = vld [vmem:[%s3681 + $0xc] sm:$0xf]
        %v4108 = vld [vmem:[%s3681 + $0x10] sm:$0xf]
        %v4109 = vld [vmem:[%s3681 + $0x14] sm:$0x1]
        %v4110 = vld [vmem:[%s3681 + $0x18] sm:$0xf]
        %v4111 = vld [vmem:[%s3681 + $0x1c] sm:$0xf]
        %v4112 = vld [vmem:[%s3681 + $0x20] sm:$0x1]
        %v4113 = vld [vmem:[%s3681 + $0x24] sm:$0xf]
        %v4114 = vld [vmem:[%s3681 + $0x28] sm:$0xf]
        %v4115 = vld [vmem:[%s3681 + $0x2c] sm:$0x1]
        %v4116 = vld [vmem:[%s3681 + $0x30] sm:$0xf]
        %v4117 = vld [vmem:[%s3681 + $0x34] sm:$0xf]
        %v4118 = vld [vmem:[%s3681 + $0x38] sm:$0x1]
        %v4119 = vld [vmem:[%s3681 + $0x3c] sm:$0xf]
        %v4120 = vld [vmem:[%s3681 + $0x40] sm:$0xf]
        %v4121 = vld [vmem:[%s3681 + $0x44] sm:$0x1]
        %v4122 = vld [vmem:[%s3681 + $0x48] sm:$0xf]
        %v4123 = vld [vmem:[%s3681 + $0x4c] sm:$0xf]
        %v4124 = vld [vmem:[%s3681 + $0x50] sm:$0x1]
        %v4125 = vld [vmem:[%s3681 + $0x54] sm:$0xf]
        %v4126 = vld [vmem:[%s3681 + $0x58] sm:$0xf]
        %v4127 = vld [vmem:[%s3681 + $0x5c] sm:$0x1]
        %v4128 = vld [vmem:[%s3681 + $0x60] sm:$0xf]
        %v4129 = vld [vmem:[%s3681 + $0x64] sm:$0xf]
        %v4130 = vld [vmem:[%s3681 + $0x68] sm:$0x1]
        %v4131 = vld [vmem:[%s3681 + $0x6c] sm:$0xf]
        %v4132 = vld [vmem:[%s3681 + $0x70] sm:$0xf]
        %v4133 = vld [vmem:[%s3681 + $0x74] sm:$0x1]
        %v4134 = vld [vmem:[%s3681 + $0x78] sm:$0xf]
        %v4135 = vld [vmem:[%s3681 + $0x7c] sm:$0xf]
        %v4136 = vld [vmem:[%s3681 + $0x80] sm:$0x1]
        %v4137 = vld [vmem:[%s3681 + $0x84] sm:$0xf]
        %v4138 = vld [vmem:[%s3681 + $0x88] sm:$0xf]
        %v4139 = vld [vmem:[%s3681 + $0x8c] sm:$0x1]
        %v4140 = vld [vmem:[%s3681 + $0x90] sm:$0xf]
        %v4141 = vld [vmem:[%s3681 + $0x94] sm:$0xf]
        %v4142 = vld [vmem:[%s3681 + $0x98] sm:$0x1]
        %v4143 = vld [vmem:[%s3681 + $0x9c] sm:$0xf]
        %v4144 = vld [vmem:[%s3681 + $0xa0] sm:$0xf]
        %v4145 = vld [vmem:[%s3681 + $0xa4] sm:$0x1]
        %v4146 = vld [vmem:[%s3681 + $0xa8] sm:$0xf]
        %v4147 = vld [vmem:[%s3681 + $0xac] sm:$0xf]
        %v4148 = vld [vmem:[%s3681 + $0xb0] sm:$0x1]
        %v4149 = vld [vmem:[%s3681 + $0xb4] sm:$0xf]
        %v4150 = vld [vmem:[%s3681 + $0xb8] sm:$0xf]
        %v4151 = vld [vmem:[%s3681 + $0xbc] sm:$0x1]
        %v4153 = vshrl.u32 %v4104, 16
        %v4155 = vrot.slane %v4153, 4
        %v4156 = vshll.u32 %v4104, 16
        %v4158 = vrot.slane %v4156, 5
        %v4159 = vor.u32 %v4155, %v4158
        %v4160 = vrot.slane %v4159, 4
        %v4162 = vshll.u32 %v4105, 16
        %v4164 = vrot.slane %v4162, 5
        %v4165 = vsel %vm590, %v4160, %v4164
        %v4166 = vshrl.u32 %v4105, 16
        %v4168 = vrot.slane %v4166, 4
        %v4169 = vor.u32 %v4168, %v4164
        %v4170 = vrot.slane %v4169, 4
        %v4172 = vshll.u32 %v4106, 16
        %v4174 = vrot.slane %v4172, 5
        %v4175 = vsel %vm590, %v4170, %v4174
        %v4177 = vshrl.u32 %v4107, 16
        %v4179 = vrot.slane %v4177, 4
        %v4180 = vshll.u32 %v4107, 16
        %v4182 = vrot.slane %v4180, 5
        %v4183 = vor.u32 %v4179, %v4182
        %v4184 = vrot.slane %v4183, 4
        %v4186 = vshll.u32 %v4108, 16
        %v4188 = vrot.slane %v4186, 5
        %v4189 = vsel %vm590, %v4184, %v4188
        %v4190 = vshrl.u32 %v4108, 16
        %v4192 = vrot.slane %v4190, 4
        %v4193 = vor.u32 %v4192, %v4188
        %v4194 = vrot.slane %v4193, 4
        %v4196 = vshll.u32 %v4109, 16
        %v4198 = vrot.slane %v4196, 5
        %v4199 = vsel %vm590, %v4194, %v4198
        %v4201 = vshrl.u32 %v4110, 16
        %v4203 = vrot.slane %v4201, 4
        %v4204 = vshll.u32 %v4110, 16
        %v4206 = vrot.slane %v4204, 5
        %v4207 = vor.u32 %v4203, %v4206
        %v4208 = vrot.slane %v4207, 4
        %v4210 = vshll.u32 %v4111, 16
        %v4212 = vrot.slane %v4210, 5
        %v4213 = vsel %vm590, %v4208, %v4212
        %v4214 = vshrl.u32 %v4111, 16
        %v4216 = vrot.slane %v4214, 4
        %v4217 = vor.u32 %v4216, %v4212
        %v4218 = vrot.slane %v4217, 4
        %v4220 = vshll.u32 %v4112, 16
        %v4222 = vrot.slane %v4220, 5
        %v4223 = vsel %vm590, %v4218, %v4222
        %v4225 = vshrl.u32 %v4113, 16
        %v4227 = vrot.slane %v4225, 4
        %v4228 = vshll.u32 %v4113, 16
        %v4230 = vrot.slane %v4228, 5
        %v4231 = vor.u32 %v4227, %v4230
        %v4232 = vrot.slane %v4231, 4
        %v4234 = vshll.u32 %v4114, 16
        %v4236 = vrot.slane %v4234, 5
        %v4237 = vsel %vm590, %v4232, %v4236
        %v4238 = vshrl.u32 %v4114, 16
        %v4240 = vrot.slane %v4238, 4
        %v4241 = vor.u32 %v4240, %v4236
        %v4242 = vrot.slane %v4241, 4
        %v4244 = vshll.u32 %v4115, 16
        %v4246 = vrot.slane %v4244, 5
        %v4247 = vsel %vm590, %v4242, %v4246
        %v4249 = vshrl.u32 %v4116, 16
        %v4251 = vrot.slane %v4249, 4
        %v4252 = vshll.u32 %v4116, 16
        %v4254 = vrot.slane %v4252, 5
        %v4255 = vor.u32 %v4251, %v4254
        %v4256 = vrot.slane %v4255, 4
        %v4258 = vshll.u32 %v4117, 16
        %v4260 = vrot.slane %v4258, 5
        %v4261 = vsel %vm590, %v4256, %v4260
        %v4262 = vshrl.u32 %v4117, 16
        %v4264 = vrot.slane %v4262, 4
        %v4265 = vor.u32 %v4264, %v4260
        %v4266 = vrot.slane %v4265, 4
        %v4268 = vshll.u32 %v4118, 16
        %v4270 = vrot.slane %v4268, 5
        %v4271 = vsel %vm590, %v4266, %v4270
        %v4273 = vshrl.u32 %v4119, 16
        %v4275 = vrot.slane %v4273, 4
        %v4276 = vshll.u32 %v4119, 16
        %v4278 = vrot.slane %v4276, 5
        %v4279 = vor.u32 %v4275, %v4278
        %v4280 = vrot.slane %v4279, 4
        %v4282 = vshll.u32 %v4120, 16
        %v4284 = vrot.slane %v4282, 5
        %v4285 = vsel %vm590, %v4280, %v4284
        %v4286 = vshrl.u32 %v4120, 16
        %v4288 = vrot.slane %v4286, 4
        %v4289 = vor.u32 %v4288, %v4284
        %v4290 = vrot.slane %v4289, 4
        %v4292 = vshll.u32 %v4121, 16
        %v4294 = vrot.slane %v4292, 5
        %v4295 = vsel %vm590, %v4290, %v4294
        %v4297 = vshrl.u32 %v4122, 16
        %v4299 = vrot.slane %v4297, 4
        %v4300 = vshll.u32 %v4122, 16
        %v4302 = vrot.slane %v4300, 5
        %v4303 = vor.u32 %v4299, %v4302
        %v4304 = vrot.slane %v4303, 4
        %v4306 = vshll.u32 %v4123, 16
        %v4308 = vrot.slane %v4306, 5
        %v4309 = vsel %vm590, %v4304, %v4308
        %v4310 = vshrl.u32 %v4123, 16
        %v4312 = vrot.slane %v4310, 4
        %v4313 = vor.u32 %v4312, %v4308
        %v4314 = vrot.slane %v4313, 4
        %v4316 = vshll.u32 %v4124, 16
        %v4318 = vrot.slane %v4316, 5
        %v4319 = vsel %vm590, %v4314, %v4318
        %v4321 = vshrl.u32 %v4125, 16
        %v4323 = vrot.slane %v4321, 4
        %v4324 = vshll.u32 %v4125, 16
        %v4326 = vrot.slane %v4324, 5
        %v4327 = vor.u32 %v4323, %v4326
        %v4328 = vrot.slane %v4327, 4
        %v4330 = vshll.u32 %v4126, 16
        %v4332 = vrot.slane %v4330, 5
        %v4333 = vsel %vm590, %v4328, %v4332
        %v4334 = vshrl.u32 %v4126, 16
        %v4336 = vrot.slane %v4334, 4
        %v4337 = vor.u32 %v4336, %v4332
        %v4338 = vrot.slane %v4337, 4
        %v4340 = vshll.u32 %v4127, 16
        %v4342 = vrot.slane %v4340, 5
        %v4343 = vsel %vm590, %v4338, %v4342
        %v4345 = vshrl.u32 %v4128, 16
        %v4347 = vrot.slane %v4345, 4
        %v4348 = vshll.u32 %v4128, 16
        %v4350 = vrot.slane %v4348, 5
        %v4351 = vor.u32 %v4347, %v4350
        %v4352 = vrot.slane %v4351, 4
        %v4354 = vshll.u32 %v4129, 16
        %v4356 = vrot.slane %v4354, 5
        %v4357 = vsel %vm590, %v4352, %v4356
        %v4358 = vshrl.u32 %v4129, 16
        %v4360 = vrot.slane %v4358, 4
        %v4361 = vor.u32 %v4360, %v4356
        %v4362 = vrot.slane %v4361, 4
        %v4364 = vshll.u32 %v4130, 16
        %v4366 = vrot.slane %v4364, 5
        %v4367 = vsel %vm590, %v4362, %v4366
        %v4369 = vshrl.u32 %v4131, 16
        %v4371 = vrot.slane %v4369, 4
        %v4372 = vshll.u32 %v4131, 16
        %v4374 = vrot.slane %v4372, 5
        %v4375 = vor.u32 %v4371, %v4374
        %v4376 = vrot.slane %v4375, 4
        %v4378 = vshll.u32 %v4132, 16
        %v4380 = vrot.slane %v4378, 5
        %v4381 = vsel %vm590, %v4376, %v4380
        %v4382 = vshrl.u32 %v4132, 16
        %v4384 = vrot.slane %v4382, 4
        %v4385 = vor.u32 %v4384, %v4380
        %v4386 = vrot.slane %v4385, 4
        %v4388 = vshll.u32 %v4133, 16
        %v4390 = vrot.slane %v4388, 5
        %v4391 = vsel %vm590, %v4386, %v4390
        %v4393 = vshrl.u32 %v4134, 16
        %v4395 = vrot.slane %v4393, 4
        %v4396 = vshll.u32 %v4134, 16
        %v4398 = vrot.slane %v4396, 5
        %v4399 = vor.u32 %v4395, %v4398
        %v4400 = vrot.slane %v4399, 4
        %v4402 = vshll.u32 %v4135, 16
        %v4404 = vrot.slane %v4402, 5
        %v4405 = vsel %vm590, %v4400, %v4404
        %v4406 = vshrl.u32 %v4135, 16
        %v4408 = vrot.slane %v4406, 4
        %v4409 = vor.u32 %v4408, %v4404
        %v4410 = vrot.slane %v4409, 4
        %v4412 = vshll.u32 %v4136, 16
        %v4414 = vrot.slane %v4412, 5
        %v4415 = vsel %vm590, %v4410, %v4414
        %v4417 = vshrl.u32 %v4137, 16
        %v4419 = vrot.slane %v4417, 4
        %v4420 = vshll.u32 %v4137, 16
        %v4422 = vrot.slane %v4420, 5
        %v4423 = vor.u32 %v4419, %v4422
        %v4424 = vrot.slane %v4423, 4
        %v4426 = vshll.u32 %v4138, 16
        %v4428 = vrot.slane %v4426, 5
        %v4429 = vsel %vm590, %v4424, %v4428
        %v4430 = vshrl.u32 %v4138, 16
        %v4432 = vrot.slane %v4430, 4
        %v4433 = vor.u32 %v4432, %v4428
        %v4434 = vrot.slane %v4433, 4
        %v4436 = vshll.u32 %v4139, 16
        %v4438 = vrot.slane %v4436, 5
        %v4439 = vsel %vm590, %v4434, %v4438
        %v4441 = vshrl.u32 %v4140, 16
        %v4443 = vrot.slane %v4441, 4
        %v4444 = vshll.u32 %v4140, 16
        %v4446 = vrot.slane %v4444, 5
        %v4447 = vor.u32 %v4443, %v4446
        %v4448 = vrot.slane %v4447, 4
        %v4450 = vshll.u32 %v4141, 16
        %v4452 = vrot.slane %v4450, 5
        %v4453 = vsel %vm590, %v4448, %v4452
        %v4454 = vshrl.u32 %v4141, 16
        %v4456 = vrot.slane %v4454, 4
        %v4457 = vor.u32 %v4456, %v4452
        %v4458 = vrot.slane %v4457, 4
        %v4460 = vshll.u32 %v4142, 16
        %v4462 = vrot.slane %v4460, 5
        %v4463 = vsel %vm590, %v4458, %v4462
        %v4465 = vshrl.u32 %v4143, 16
        %v4467 = vrot.slane %v4465, 4
        %v4468 = vshll.u32 %v4143, 16
        %v4470 = vrot.slane %v4468, 5
        %v4471 = vor.u32 %v4467, %v4470
        %v4472 = vrot.slane %v4471, 4
        %v4474 = vshll.u32 %v4144, 16
        %v4476 = vrot.slane %v4474, 5
        %v4477 = vsel %vm590, %v4472, %v4476
        %v4478 = vshrl.u32 %v4144, 16
        %v4480 = vrot.slane %v4478, 4
        %v4481 = vor.u32 %v4480, %v4476
        %v4482 = vrot.slane %v4481, 4
        %v4484 = vshll.u32 %v4145, 16
        %v4486 = vrot.slane %v4484, 5
        %v4487 = vsel %vm590, %v4482, %v4486
        %v4489 = vshrl.u32 %v4146, 16
        %v4491 = vrot.slane %v4489, 4
        %v4492 = vshll.u32 %v4146, 16
        %v4494 = vrot.slane %v4492, 5
        %v4495 = vor.u32 %v4491, %v4494
        %v4496 = vrot.slane %v4495, 4
        %v4498 = vshll.u32 %v4147, 16
        %v4500 = vrot.slane %v4498, 5
        %v4501 = vsel %vm590, %v4496, %v4500
        %v4502 = vshrl.u32 %v4147, 16
        %v4504 = vrot.slane %v4502, 4
        %v4505 = vor.u32 %v4504, %v4500
        %v4506 = vrot.slane %v4505, 4
        %v4508 = vshll.u32 %v4148, 16
        %v4510 = vrot.slane %v4508, 5
        %v4511 = vsel %vm590, %v4506, %v4510
        %v4513 = vshrl.u32 %v4149, 16
        %v4515 = vrot.slane %v4513, 4
        %v4516 = vshll.u32 %v4149, 16
        %v4518 = vrot.slane %v4516, 5
        %v4519 = vor.u32 %v4515, %v4518
        %v4520 = vrot.slane %v4519, 4
        %v4522 = vshll.u32 %v4150, 16
        %v4524 = vrot.slane %v4522, 5
        %v4525 = vsel %vm590, %v4520, %v4524
        %v4526 = vshrl.u32 %v4150, 16
        %v4528 = vrot.slane %v4526, 4
        %v4529 = vor.u32 %v4528, %v4524
        %v4530 = vrot.slane %v4529, 4
        %v4532 = vshll.u32 %v4151, 16
        %v4534 = vrot.slane %v4532, 5
        %v4535 = vsel %vm590, %v4530, %v4534
        %s4536 = scalar_lea.vmem %s1, 28
        %v4537 = vld [vmem:[%s4536] sm:$0xf]
        %v4538 = vunpack.c.l.b16 %v4165
        %v4539 = vunpack.c.l.b16 %v4175
        %v4540 = vunpack.c.l.b16 %v4189
        %v4541 = vunpack.c.l.b16 %v4199
        %v4542 = vunpack.c.l.b16 %v4213
        %v4543 = vunpack.c.l.b16 %v4223
        %v4544 = vunpack.c.l.b16 %v4237
        %v4545 = vunpack.c.l.b16 %v4247
        %v4546 = vunpack.c.l.b16 %v4261
        %v4547 = vunpack.c.l.b16 %v4271
        %v4548 = vunpack.c.l.b16 %v4285
        %v4549 = vunpack.c.l.b16 %v4295
        %v4550 = vunpack.c.l.b16 %v4309
        %v4551 = vunpack.c.l.b16 %v4319
        %v4552 = vunpack.c.l.b16 %v4333
        %v4553 = vunpack.c.l.b16 %v4343
        %v4554 = vunpack.c.l.b16 %v4357
        %v4555 = vunpack.c.l.b16 %v4367
        %v4556 = vunpack.c.l.b16 %v4381
        %v4557 = vunpack.c.l.b16 %v4391
        %v4558 = vunpack.c.l.b16 %v4405
        %v4559 = vunpack.c.l.b16 %v4415
        %v4560 = vunpack.c.l.b16 %v4429
        %v4561 = vunpack.c.l.b16 %v4439
        %v4562 = vunpack.c.l.b16 %v4453
        %v4563 = vunpack.c.l.b16 %v4463
        %v4564 = vunpack.c.l.b16 %v4477
        %v4565 = vunpack.c.l.b16 %v4487
        %v4566 = vunpack.c.l.b16 %v4501
        %v4567 = vunpack.c.l.b16 %v4511
        %v4568 = vunpack.c.l.b16 %v4525
        %v4569 = vunpack.c.l.b16 %v4535
        %v4570 = vpack.c.b16 %v4539, %v4538
        %v4571 = vpack.c.b16 %v4541, %v4540
        %v4572 = vpack.c.b16 %v4543, %v4542
        %v4573 = vpack.c.b16 %v4545, %v4544
        %v4574 = vpack.c.b16 %v4547, %v4546
        %v4575 = vpack.c.b16 %v4549, %v4548
        %v4576 = vpack.c.b16 %v4551, %v4550
        %v4577 = vpack.c.b16 %v4553, %v4552
        %v4578 = vpack.c.b16 %v4555, %v4554
        %v4579 = vpack.c.b16 %v4557, %v4556
        %v4580 = vpack.c.b16 %v4559, %v4558
        %v4581 = vpack.c.b16 %v4561, %v4560
        %v4582 = vpack.c.b16 %v4563, %v4562
        %v4583 = vpack.c.b16 %v4565, %v4564
        %v4584 = vpack.c.b16 %v4567, %v4566
        %v4585 = vpack.c.b16 %v4569, %v4568
        %v4587 = vsel %vm294, %v4570, 0
        %v4590 = vsel %vm294, %v4571, 0
        %v4593 = vsel %vm294, %v4572, 0
        %v4596 = vsel %vm294, %v4573, 0
        %v4599 = vsel %vm294, %v4574, 0
        %v4602 = vsel %vm294, %v4575, 0
        %v4605 = vsel %vm294, %v4576, 0
        %v4608 = vsel %vm294, %v4577, 0
        %v4611 = vsel %vm294, %v4578, 0
        %v4614 = vsel %vm294, %v4579, 0
        %v4617 = vsel %vm294, %v4580, 0
        %v4620 = vsel %vm294, %v4581, 0
        %v4623 = vsel %vm294, %v4582, 0
        %v4626 = vsel %vm294, %v4583, 0
        %v4629 = vsel %vm294, %v4584, 0
        %v4632 = vsel %vm294, %v4585, 0
        %v4635 = vsel %vm343, %v4537, 0
        %4637 = vmatprep.subr.bf16.mxu0 0
        %4638 = vmatpush1.bf16.msra.mxu0 %v4635
        %4639 = vmatprep.subr.bf16.mxu0 0
        %4640 = vmatpush1.bf16.msra.mxu0 0
        %4641 = vmatprep.subr.bf16.mxu0 0
        %4642 = vmatpush1.bf16.msra.mxu0 0
        %4643 = vmatprep.subr.bf16.mxu0 0
        %4644 = vmatpush1.bf16.msra.mxu0 0
        %4645 = vmatprep.subr.bf16.mxu0 0
        %4646 = vmatpush1.bf16.msra.mxu0 0
        %4647 = vmatprep.subr.bf16.mxu0 0
        %4648 = vmatpush1.bf16.msra.mxu0 0
        %4649 = vmatprep.subr.bf16.mxu0 0
        %4650 = vmatpush1.bf16.msra.mxu0 0
        %4651 = vmatprep.subr.bf16.mxu0 0
        %4652 = vmatpush1.bf16.msra.mxu0 0
        %4653 = vmatprep.subr.bf16.mxu0 0
        %4654 = vmatpush1.bf16.msra.mxu0 0
        %4655 = vmatprep.subr.bf16.mxu0 0
        %4656 = vmatpush1.bf16.msra.mxu0 0
        %4657 = vmatprep.subr.bf16.mxu0 0
        %4658 = vmatpush1.bf16.msra.mxu0 0
        %4659 = vmatprep.subr.bf16.mxu0 0
        %4660 = vmatpush1.bf16.msra.mxu0 0
        %4661 = vmatprep.subr.bf16.mxu0 0
        %4662 = vmatpush1.bf16.msra.mxu0 0
        %4663 = vmatprep.subr.bf16.mxu0 0
        %4664 = vmatpush1.bf16.msra.mxu0 0
        %4665 = vmatprep.subr.bf16.mxu0 0
        %4666 = vmatpush1.bf16.msra.mxu0 0
        %4667 = vmatprep.subr.bf16.mxu0 0
        %4668 = vmatpush1.bf16.msra.mxu0 0
        %4669 = vmatprep.mubr.bf16.mxu0 0
        %4670 = vmatmul.mubr.bf16.gmra.mrb[0].mxu0 %v4587
        %v4671 = vpop.f32.mrb[0].mxu0
        %v4672 = vadd.f32 0.0, %v4671
        %v4673 = vpop.f32.mrb[0].mxu0
        %v4674 = vpop.f32.mrb[0].mxu0
        %v4675 = vadd.f32 0.0, %v4674
        %v4676 = vpop.f32.mrb[0].mxu0
        %4677 = vmatprep.mubr.bf16.mxu0 0
        %4678 = vmatmul.mubr.bf16.gmra.mrb[0].mxu0 %v4590
        %v4679 = vpop.f32.mrb[0].mxu0
        %v4680 = vadd.f32 0.0, %v4679
        %v4681 = vpop.f32.mrb[0].mxu0
        %v4682 = vpop.f32.mrb[0].mxu0
        %v4683 = vadd.f32 0.0, %v4682
        %v4684 = vpop.f32.mrb[0].mxu0
        %4685 = vmatprep.mubr.bf16.mxu0 0
        %4686 = vmatmul.mubr.bf16.gmra.mrb[0].mxu0 %v4593
        %v4687 = vpop.f32.mrb[0].mxu0
        %v4688 = vadd.f32 0.0, %v4687
        %v4689 = vpop.f32.mrb[0].mxu0
        %v4690 = vpop.f32.mrb[0].mxu0
        %v4691 = vadd.f32 0.0, %v4690
        %v4692 = vpop.f32.mrb[0].mxu0
        %4693 = vmatprep.mubr.bf16.mxu0 0
        %4694 = vmatmul.mubr.bf16.gmra.mrb[0].mxu0 %v4596
        %v4695 = vpop.f32.mrb[0].mxu0
        %v4696 = vadd.f32 0.0, %v4695
        %v4697 = vpop.f32.mrb[0].mxu0
        %v4698 = vpop.f32.mrb[0].mxu0
        %v4699 = vadd.f32 0.0, %v4698
        %v4700 = vpop.f32.mrb[0].mxu0
        %4701 = vmatprep.mubr.bf16.mxu0 0
        %4702 = vmatmul.mubr.bf16.gmra.mrb[0].mxu0 %v4599
        %v4703 = vpop.f32.mrb[0].mxu0
        %v4704 = vadd.f32 0.0, %v4703
        %v4705 = vpop.f32.mrb[0].mxu0
        %v4706 = vpop.f32.mrb[0].mxu0
        %v4707 = vadd.f32 0.0, %v4706
        %v4708 = vpop.f32.mrb[0].mxu0
        %4709 = vmatprep.mubr.bf16.mxu0 0
        %4710 = vmatmul.mubr.bf16.gmra.mrb[0].mxu0 %v4602
        %v4711 = vpop.f32.mrb[0].mxu0
        %v4712 = vadd.f32 0.0, %v4711
        %v4713 = vpop.f32.mrb[0].mxu0
        %v4714 = vpop.f32.mrb[0].mxu0
        %v4715 = vadd.f32 0.0, %v4714
        %v4716 = vpop.f32.mrb[0].mxu0
        %4717 = vmatprep.mubr.bf16.mxu0 0
        %4718 = vmatmul.mubr.bf16.gmra.mrb[0].mxu0 %v4605
        %v4719 = vpop.f32.mrb[0].mxu0
        %v4720 = vadd.f32 0.0, %v4719
        %v4721 = vpop.f32.mrb[0].mxu0
        %v4722 = vpop.f32.mrb[0].mxu0
        %v4723 = vadd.f32 0.0, %v4722
        %v4724 = vpop.f32.mrb[0].mxu0
        %4725 = vmatprep.mubr.bf16.mxu0 0
        %4726 = vmatmul.mubr.bf16.gmra.mrb[0].mxu0 %v4608
        %v4727 = vpop.f32.mrb[0].mxu0
        %v4728 = vadd.f32 0.0, %v4727
        %v4729 = vpop.f32.mrb[0].mxu0
        %v4730 = vpop.f32.mrb[0].mxu0
        %v4731 = vadd.f32 0.0, %v4730
        %v4732 = vpop.f32.mrb[0].mxu0
        %4733 = vmatprep.mubr.bf16.mxu0 0
        %4734 = vmatmul.mubr.bf16.gmra.mrb[0].mxu0 %v4611
        %v4735 = vpop.f32.mrb[0].mxu0
        %v4736 = vadd.f32 0.0, %v4735
        %v4737 = vpop.f32.mrb[0].mxu0
        %v4738 = vpop.f32.mrb[0].mxu0
        %v4739 = vadd.f32 0.0, %v4738
        %v4740 = vpop.f32.mrb[0].mxu0
        %4741 = vmatprep.mubr.bf16.mxu0 0
        %4742 = vmatmul.mubr.bf16.gmra.mrb[0].mxu0 %v4614
        %v4743 = vpop.f32.mrb[0].mxu0
        %v4744 = vadd.f32 0.0, %v4743
        %v4745 = vpop.f32.mrb[0].mxu0
        %v4746 = vpop.f32.mrb[0].mxu0
        %v4747 = vadd.f32 0.0, %v4746
        %v4748 = vpop.f32.mrb[0].mxu0
        %4749 = vmatprep.mubr.bf16.mxu0 0
        %4750 = vmatmul.mubr.bf16.gmra.mrb[0].mxu0 %v4617
        %v4751 = vpop.f32.mrb[0].mxu0
        %v4752 = vadd.f32 0.0, %v4751
        %v4753 = vpop.f32.mrb[0].mxu0
        %v4754 = vpop.f32.mrb[0].mxu0
        %v4755 = vadd.f32 0.0, %v4754
        %v4756 = vpop.f32.mrb[0].mxu0
        %4757 = vmatprep.mubr.bf16.mxu0 0
        %4758 = vmatmul.mubr.bf16.gmra.mrb[0].mxu0 %v4620
        %v4759 = vpop.f32.mrb[0].mxu0
        %v4760 = vadd.f32 0.0, %v4759
        %v4761 = vpop.f32.mrb[0].mxu0
        %v4762 = vpop.f32.mrb[0].mxu0
        %v4763 = vadd.f32 0.0, %v4762
        %v4764 = vpop.f32.mrb[0].mxu0
        %4765 = vmatprep.mubr.bf16.mxu0 0
        %4766 = vmatmul.mubr.bf16.gmra.mrb[0].mxu0 %v4623
        %v4767 = vpop.f32.mrb[0].mxu0
        %v4768 = vadd.f32 0.0, %v4767
        %v4769 = vpop.f32.mrb[0].mxu0
        %v4770 = vpop.f32.mrb[0].mxu0
        %v4771 = vadd.f32 0.0, %v4770
        %v4772 = vpop.f32.mrb[0].mxu0
        %4773 = vmatprep.mubr.bf16.mxu0 0
        %4774 = vmatmul.mubr.bf16.gmra.mrb[0].mxu0 %v4626
        %v4775 = vpop.f32.mrb[0].mxu0
        %v4776 = vadd.f32 0.0, %v4775
        %v4777 = vpop.f32.mrb[0].mxu0
        %v4778 = vpop.f32.mrb[0].mxu0
        %v4779 = vadd.f32 0.0, %v4778
        %v4780 = vpop.f32.mrb[0].mxu0
        %4781 = vmatprep.mubr.bf16.mxu0 0
        %4782 = vmatmul.mubr.bf16.gmra.mrb[0].mxu0 %v4629
        %v4783 = vpop.f32.mrb[0].mxu0
        %v4784 = vadd.f32 0.0, %v4783
        %v4785 = vpop.f32.mrb[0].mxu0
        %v4786 = vpop.f32.mrb[0].mxu0
        %v4787 = vadd.f32 0.0, %v4786
        %v4788 = vpop.f32.mrb[0].mxu0
        %4789 = vmatprep.mubr.bf16.mxu0 0
        %4790 = vmatmul.mubr.bf16.gmra.mrb[0].mxu0 %v4632
        %v4791 = vpop.f32.mrb[0].mxu0
        %v4792 = vadd.f32 0.0, %v4791
        %v4793 = vpop.f32.mrb[0].mxu0
        %v4794 = vpop.f32.mrb[0].mxu0
        %v4795 = vadd.f32 0.0, %v4794
        %v4796 = vpop.f32.mrb[0].mxu0
        %4797 = vdwg.mxu0
        %v4798 = vld [vmem:[#allocation2] sm:$0xff]
        %v4799 = vld [vmem:[#allocation2 + $0x8] sm:$0xff]
        %v4800 = vld [vmem:[#allocation2 + $0x10] sm:$0xff]
        %v4801 = vld [vmem:[#allocation2 + $0x18] sm:$0xff]
        %v4802 = vld [vmem:[#allocation2 + $0x20] sm:$0xff]
        %v4803 = vld [vmem:[#allocation2 + $0x28] sm:$0xff]
        %v4804 = vld [vmem:[#allocation2 + $0x30] sm:$0xff]
        %v4805 = vld [vmem:[#allocation2 + $0x38] sm:$0xff]
        %v4806 = vld [vmem:[#allocation2 + $0x40] sm:$0xff]
        %v4807 = vld [vmem:[#allocation2 + $0x48] sm:$0xff]
        %v4808 = vld [vmem:[#allocation2 + $0x50] sm:$0xff]
        %v4809 = vld [vmem:[#allocation2 + $0x58] sm:$0xff]
        %v4810 = vld [vmem:[#allocation2 + $0x60] sm:$0xff]
        %v4811 = vld [vmem:[#allocation2 + $0x68] sm:$0xff]
        %v4812 = vld [vmem:[#allocation2 + $0x70] sm:$0xff]
        %v4813 = vld [vmem:[#allocation2 + $0x78] sm:$0xff]
        %v4814 = vld [vmem:[#allocation2 + $0x80] sm:$0xff]
        %v4815 = vld [vmem:[#allocation2 + $0x88] sm:$0xff]
        %v4816 = vld [vmem:[#allocation2 + $0x90] sm:$0xff]
        %v4817 = vld [vmem:[#allocation2 + $0x98] sm:$0xff]
        %v4818 = vld [vmem:[#allocation2 + $0xa0] sm:$0xff]
        %v4819 = vld [vmem:[#allocation2 + $0xa8] sm:$0xff]
        %v4820 = vld [vmem:[#allocation2 + $0xb0] sm:$0xff]
        %v4821 = vld [vmem:[#allocation2 + $0xb8] sm:$0xff]
        %v4822 = vld [vmem:[#allocation2 + $0xc0] sm:$0xff]
        %v4823 = vld [vmem:[#allocation2 + $0xc8] sm:$0xff]
        %v4824 = vld [vmem:[#allocation2 + $0xd0] sm:$0xff]
        %v4825 = vld [vmem:[#allocation2 + $0xd8] sm:$0xff]
        %v4826 = vld [vmem:[#allocation2 + $0xe0] sm:$0xff]
        %v4827 = vld [vmem:[#allocation2 + $0xe8] sm:$0xff]
        %v4828 = vld [vmem:[#allocation2 + $0xf0] sm:$0xff]
        %v4829 = vld [vmem:[#allocation2 + $0xf8] sm:$0xff]
        %v4830 = vadd.f32 %v4798, %v4672
        %v4831 = vadd.f32 %v4799, %v4675
        %v4832 = vadd.f32 %v4800, %v4680
        %v4833 = vadd.f32 %v4801, %v4683
        %v4834 = vadd.f32 %v4802, %v4688
        %v4835 = vadd.f32 %v4803, %v4691
        %v4836 = vadd.f32 %v4804, %v4696
        %v4837 = vadd.f32 %v4805, %v4699
        %v4838 = vadd.f32 %v4806, %v4704
        %v4839 = vadd.f32 %v4807, %v4707
        %v4840 = vadd.f32 %v4808, %v4712
        %v4841 = vadd.f32 %v4809, %v4715
        %v4842 = vadd.f32 %v4810, %v4720
        %v4843 = vadd.f32 %v4811, %v4723
        %v4844 = vadd.f32 %v4812, %v4728
        %v4845 = vadd.f32 %v4813, %v4731
        %v4846 = vadd.f32 %v4814, %v4736
        %v4847 = vadd.f32 %v4815, %v4739
        %v4848 = vadd.f32 %v4816, %v4744
        %v4849 = vadd.f32 %v4817, %v4747
        %v4850 = vadd.f32 %v4818, %v4752
        %v4851 = vadd.f32 %v4819, %v4755
        %v4852 = vadd.f32 %v4820, %v4760
        %v4853 = vadd.f32 %v4821, %v4763
        %v4854 = vadd.f32 %v4822, %v4768
        %v4855 = vadd.f32 %v4823, %v4771
        %v4856 = vadd.f32 %v4824, %v4776
        %v4857 = vadd.f32 %v4825, %v4779
        %v4858 = vadd.f32 %v4826, %v4784
        %v4859 = vadd.f32 %v4827, %v4787
        %v4860 = vadd.f32 %v4828, %v4792
        %v4861 = vadd.f32 %v4829, %v4795
        %4862 = vst [vmem:[#allocation2] sm:$0xff] %v4830
        %4863 = vst [vmem:[#allocation2 + $0x8] sm:$0xff] %v4831
        %4864 = vst [vmem:[#allocation2 + $0x10] sm:$0xff] %v4832
        %4865 = vst [vmem:[#allocation2 + $0x18] sm:$0xff] %v4833
        %4866 = vst [vmem:[#allocation2 + $0x20] sm:$0xff] %v4834
        %4867 = vst [vmem:[#allocation2 + $0x28] sm:$0xff] %v4835
        %4868 = vst [vmem:[#allocation2 + $0x30] sm:$0xff] %v4836
        %4869 = vst [vmem:[#allocation2 + $0x38] sm:$0xff] %v4837
        %4870 = vst [vmem:[#allocation2 + $0x40] sm:$0xff] %v4838
        %4871 = vst [vmem:[#allocation2 + $0x48] sm:$0xff] %v4839
        %4872 = vst [vmem:[#allocation2 + $0x50] sm:$0xff] %v4840
        %4873 = vst [vmem:[#allocation2 + $0x58] sm:$0xff] %v4841
        %4874 = vst [vmem:[#allocation2 + $0x60] sm:$0xff] %v4842
        %4875 = vst [vmem:[#allocation2 + $0x68] sm:$0xff] %v4843
        %4876 = vst [vmem:[#allocation2 + $0x70] sm:$0xff] %v4844
        %4877 = vst [vmem:[#allocation2 + $0x78] sm:$0xff] %v4845
        %4878 = vst [vmem:[#allocation2 + $0x80] sm:$0xff] %v4846
        %4879 = vst [vmem:[#allocation2 + $0x88] sm:$0xff] %v4847
        %4880 = vst [vmem:[#allocation2 + $0x90] sm:$0xff] %v4848
        %4881 = vst [vmem:[#allocation2 + $0x98] sm:$0xff] %v4849
        %4882 = vst [vmem:[#allocation2 + $0xa0] sm:$0xff] %v4850
        %4883 = vst [vmem:[#allocation2 + $0xa8] sm:$0xff] %v4851
        %4884 = vst [vmem:[#allocation2 + $0xb0] sm:$0xff] %v4852
        %4885 = vst [vmem:[#allocation2 + $0xb8] sm:$0xff] %v4853
        %4886 = vst [vmem:[#allocation2 + $0xc0] sm:$0xff] %v4854
        %4887 = vst [vmem:[#allocation2 + $0xc8] sm:$0xff] %v4855
        %4888 = vst [vmem:[#allocation2 + $0xd0] sm:$0xff] %v4856
        %4889 = vst [vmem:[#allocation2 + $0xd8] sm:$0xff] %v4857
        %4890 = vst [vmem:[#allocation2 + $0xe0] sm:$0xff] %v4858
        %4891 = vst [vmem:[#allocation2 + $0xe8] sm:$0xff] %v4859
        %4892 = vst [vmem:[#allocation2 + $0xf0] sm:$0xff] %v4860
        %4893 = vst [vmem:[#allocation2 + $0xf8] sm:$0xff] %v4861
        %v4894 = vld [vmem:[%s3681] sm:$0xe]
        %v4895 = vld [vmem:[%s3681 + $0x4] sm:$0xf]
        %v4896 = vld [vmem:[%s3681 + $0x8] sm:$0x1]
        %v4897 = vld [vmem:[%s3681 + $0xc] sm:$0xe]
        %v4898 = vld [vmem:[%s3681 + $0x10] sm:$0xf]
        %v4899 = vld [vmem:[%s3681 + $0x14] sm:$0x1]
        %v4900 = vld [vmem:[%s3681 + $0x18] sm:$0xe]
        %v4901 = vld [vmem:[%s3681 + $0x1c] sm:$0xf]
        %v4902 = vld [vmem:[%s3681 + $0x20] sm:$0x1]
        %v4903 = vld [vmem:[%s3681 + $0x24] sm:$0xe]
        %v4904 = vld [vmem:[%s3681 + $0x28] sm:$0xf]
        %v4905 = vld [vmem:[%s3681 + $0x2c] sm:$0x1]
        %v4906 = vld [vmem:[%s3681 + $0x30] sm:$0xe]
        %v4907 = vld [vmem:[%s3681 + $0x34] sm:$0xf]
        %v4908 = vld [vmem:[%s3681 + $0x38] sm:$0x1]
        %v4909 = vld [vmem:[%s3681 + $0x3c] sm:$0xe]
        %v4910 = vld [vmem:[%s3681 + $0x40] sm:$0xf]
        %v4911 = vld [vmem:[%s3681 + $0x44] sm:$0x1]
        %v4912 = vld [vmem:[%s3681 + $0x48] sm:$0xe]
        %v4913 = vld [vmem:[%s3681 + $0x4c] sm:$0xf]
        %v4914 = vld [vmem:[%s3681 + $0x50] sm:$0x1]
        %v4915 = vld [vmem:[%s3681 + $0x54] sm:$0xe]
        %v4916 = vld [vmem:[%s3681 + $0x58] sm:$0xf]
        %v4917 = vld [vmem:[%s3681 + $0x5c] sm:$0x1]
        %v4918 = vld [vmem:[%s3681 + $0x60] sm:$0xe]
        %v4919 = vld [vmem:[%s3681 + $0x64] sm:$0xf]
        %v4920 = vld [vmem:[%s3681 + $0x68] sm:$0x1]
        %v4921 = vld [vmem:[%s3681 + $0x6c] sm:$0xe]
        %v4922 = vld [vmem:[%s3681 + $0x70] sm:$0xf]
        %v4923 = vld [vmem:[%s3681 + $0x74] sm:$0x1]
        %v4924 = vld [vmem:[%s3681 + $0x78] sm:$0xe]
        %v4925 = vld [vmem:[%s3681 + $0x7c] sm:$0xf]
        %v4926 = vld [vmem:[%s3681 + $0x80] sm:$0x1]
        %v4927 = vld [vmem:[%s3681 + $0x84] sm:$0xe]
        %v4928 = vld [vmem:[%s3681 + $0x88] sm:$0xf]
        %v4929 = vld [vmem:[%s3681 + $0x8c] sm:$0x1]
        %v4930 = vld [vmem:[%s3681 + $0x90] sm:$0xe]
        %v4931 = vld [vmem:[%s3681 + $0x94] sm:$0xf]
        %v4932 = vld [vmem:[%s3681 + $0x98] sm:$0x1]
        %v4933 = vld [vmem:[%s3681 + $0x9c] sm:$0xe]
        %v4934 = vld [vmem:[%s3681 + $0xa0] sm:$0xf]
        %v4935 = vld [vmem:[%s3681 + $0xa4] sm:$0x1]
        %v4936 = vld [vmem:[%s3681 + $0xa8] sm:$0xe]
        %v4937 = vld [vmem:[%s3681 + $0xac] sm:$0xf]
        %v4938 = vld [vmem:[%s3681 + $0xb0] sm:$0x1]
        %v4939 = vld [vmem:[%s3681 + $0xb4] sm:$0xe]
        %v4940 = vld [vmem:[%s3681 + $0xb8] sm:$0xf]
        %v4941 = vld [vmem:[%s3681 + $0xbc] sm:$0x1]
        %v4990 = vrot.slane %v4894, 5
        %v4991 = vrot.slane %v4990, 4
        %v4992 = vrot.slane %v4895, 5
        %v4993 = vsel %vm1431, %v4991, %v4992
        %v4994 = vrot.slane %v4992, 4
        %v4995 = vrot.slane %v4896, 5
        %v4996 = vsel %vm1431, %v4994, %v4995
        %v4997 = vrot.slane %v4897, 5
        %v4998 = vrot.slane %v4997, 4
        %v4999 = vrot.slane %v4898, 5
        %v5000 = vsel %vm1431, %v4998, %v4999
        %v5001 = vrot.slane %v4999, 4
        %v5002 = vrot.slane %v4899, 5
        %v5003 = vsel %vm1431, %v5001, %v5002
        %v5004 = vrot.slane %v4900, 5
        %v5005 = vrot.slane %v5004, 4
        %v5006 = vrot.slane %v4901, 5
        %v5007 = vsel %vm1431, %v5005, %v5006
        %v5008 = vrot.slane %v5006, 4
        %v5009 = vrot.slane %v4902, 5
        %v5010 = vsel %vm1431, %v5008, %v5009
        %v5011 = vrot.slane %v4903, 5
        %v5012 = vrot.slane %v5011, 4
        %v5013 = vrot.slane %v4904, 5
        %v5014 = vsel %vm1431, %v5012, %v5013
        %v5015 = vrot.slane %v5013, 4
        %v5016 = vrot.slane %v4905, 5
        %v5017 = vsel %vm1431, %v5015, %v5016
        %v5018 = vrot.slane %v4906, 5
        %v5019 = vrot.slane %v5018, 4
        %v5020 = vrot.slane %v4907, 5
        %v5021 = vsel %vm1431, %v5019, %v5020
        %v5022 = vrot.slane %v5020, 4
        %v5023 = vrot.slane %v4908, 5
        %v5024 = vsel %vm1431, %v5022, %v5023
        %v5025 = vrot.slane %v4909, 5
        %v5026 = vrot.slane %v5025, 4
        %v5027 = vrot.slane %v4910, 5
        %v5028 = vsel %vm1431, %v5026, %v5027
        %v5029 = vrot.slane %v5027, 4
        %v5030 = vrot.slane %v4911, 5
        %v5031 = vsel %vm1431, %v5029, %v5030
        %v5032 = vrot.slane %v4912, 5
        %v5033 = vrot.slane %v5032, 4
        %v5034 = vrot.slane %v4913, 5
        %v5035 = vsel %vm1431, %v5033, %v5034
        %v5036 = vrot.slane %v5034, 4
        %v5037 = vrot.slane %v4914, 5
        %v5038 = vsel %vm1431, %v5036, %v5037
        %v5039 = vrot.slane %v4915, 5
        %v5040 = vrot.slane %v5039, 4
        %v5041 = vrot.slane %v4916, 5
        %v5042 = vsel %vm1431, %v5040, %v5041
        %v5043 = vrot.slane %v5041, 4
        %v5044 = vrot.slane %v4917, 5
        %v5045 = vsel %vm1431, %v5043, %v5044
        %v5046 = vrot.slane %v4918, 5
        %v5047 = vrot.slane %v5046, 4
        %v5048 = vrot.slane %v4919, 5
        %v5049 = vsel %vm1431, %v5047, %v5048
        %v5050 = vrot.slane %v5048, 4
        %v5051 = vrot.slane %v4920, 5
        %v5052 = vsel %vm1431, %v5050, %v5051
        %v5053 = vrot.slane %v4921, 5
        %v5054 = vrot.slane %v5053, 4
        %v5055 = vrot.slane %v4922, 5
        %v5056 = vsel %vm1431, %v5054, %v5055
        %v5057 = vrot.slane %v5055, 4
        %v5058 = vrot.slane %v4923, 5
        %v5059 = vsel %vm1431, %v5057, %v5058
        %v5060 = vrot.slane %v4924, 5
        %v5061 = vrot.slane %v5060, 4
        %v5062 = vrot.slane %v4925, 5
        %v5063 = vsel %vm1431, %v5061, %v5062
        %v5064 = vrot.slane %v5062, 4
        %v5065 = vrot.slane %v4926, 5
        %v5066 = vsel %vm1431, %v5064, %v5065
        %v5067 = vrot.slane %v4927, 5
        %v5068 = vrot.slane %v5067, 4
        %v5069 = vrot.slane %v4928, 5
        %v5070 = vsel %vm1431, %v5068, %v5069
        %v5071 = vrot.slane %v5069, 4
        %v5072 = vrot.slane %v4929, 5
        %v5073 = vsel %vm1431, %v5071, %v5072
        %v5074 = vrot.slane %v4930, 5
        %v5075 = vrot.slane %v5074, 4
        %v5076 = vrot.slane %v4931, 5
        %v5077 = vsel %vm1431, %v5075, %v5076
        %v5078 = vrot.slane %v5076, 4
        %v5079 = vrot.slane %v4932, 5
        %v5080 = vsel %vm1431, %v5078, %v5079
        %v5081 = vrot.slane %v4933, 5
        %v5082 = vrot.slane %v5081, 4
        %v5083 = vrot.slane %v4934, 5
        %v5084 = vsel %vm1431, %v5082, %v5083
        %v5085 = vrot.slane %v5083, 4
        %v5086 = vrot.slane %v4935, 5
        %v5087 = vsel %vm1431, %v5085, %v5086
        %v5088 = vrot.slane %v4936, 5
        %v5089 = vrot.slane %v5088, 4
        %v5090 = vrot.slane %v4937, 5
        %v5091 = vsel %vm1431, %v5089, %v5090
        %v5092 = vrot.slane %v5090, 4
        %v5093 = vrot.slane %v4938, 5
        %v5094 = vsel %vm1431, %v5092, %v5093
        %v5095 = vrot.slane %v4939, 5
        %v5096 = vrot.slane %v5095, 4
        %v5097 = vrot.slane %v4940, 5
        %v5098 = vsel %vm1431, %v5096, %v5097
        %v5099 = vrot.slane %v5097, 4
        %v5100 = vrot.slane %v4941, 5
        %v5101 = vsel %vm1431, %v5099, %v5100
        %s5102 = scalar_lea.vmem %s1, 32
        %v5103 = vld [vmem:[%s5102] sm:$0xf]
        %v5104 = vunpack.c.l.b16 %v4993
        %v5105 = vunpack.c.l.b16 %v4996
        %v5106 = vunpack.c.l.b16 %v5000
        %v5107 = vunpack.c.l.b16 %v5003
        %v5108 = vunpack.c.l.b16 %v5007
        %v5109 = vunpack.c.l.b16 %v5010
        %v5110 = vunpack.c.l.b16 %v5014
        %v5111 = vunpack.c.l.b16 %v5017
        %v5112 = vunpack.c.l.b16 %v5021
        %v5113 = vunpack.c.l.b16 %v5024
        %v5114 = vunpack.c.l.b16 %v5028
        %v5115 = vunpack.c.l.b16 %v5031
        %v5116 = vunpack.c.l.b16 %v5035
        %v5117 = vunpack.c.l.b16 %v5038
        %v5118 = vunpack.c.l.b16 %v5042
        %v5119 = vunpack.c.l.b16 %v5045
        %v5120 = vunpack.c.l.b16 %v5049
        %v5121 = vunpack.c.l.b16 %v5052
        %v5122 = vunpack.c.l.b16 %v5056
        %v5123 = vunpack.c.l.b16 %v5059
        %v5124 = vunpack.c.l.b16 %v5063
        %v5125 = vunpack.c.l.b16 %v5066
        %v5126 = vunpack.c.l.b16 %v5070
        %v5127 = vunpack.c.l.b16 %v5073
        %v5128 = vunpack.c.l.b16 %v5077
        %v5129 = vunpack.c.l.b16 %v5080
        %v5130 = vunpack.c.l.b16 %v5084
        %v5131 = vunpack.c.l.b16 %v5087
        %v5132 = vunpack.c.l.b16 %v5091
        %v5133 = vunpack.c.l.b16 %v5094
        %v5134 = vunpack.c.l.b16 %v5098
        %v5135 = vunpack.c.l.b16 %v5101
        %v5136 = vpack.c.b16 %v5105, %v5104
        %v5137 = vpack.c.b16 %v5107, %v5106
        %v5138 = vpack.c.b16 %v5109, %v5108
        %v5139 = vpack.c.b16 %v5111, %v5110
        %v5140 = vpack.c.b16 %v5113, %v5112
        %v5141 = vpack.c.b16 %v5115, %v5114
        %v5142 = vpack.c.b16 %v5117, %v5116
        %v5143 = vpack.c.b16 %v5119, %v5118
        %v5144 = vpack.c.b16 %v5121, %v5120
        %v5145 = vpack.c.b16 %v5123, %v5122
        %v5146 = vpack.c.b16 %v5125, %v5124
        %v5147 = vpack.c.b16 %v5127, %v5126
        %v5148 = vpack.c.b16 %v5129, %v5128
        %v5149 = vpack.c.b16 %v5131, %v5130
        %v5150 = vpack.c.b16 %v5133, %v5132
        %v5151 = vpack.c.b16 %v5135, %v5134
        %v5153 = vsel %vm294, %v5136, 0
        %v5156 = vsel %vm294, %v5137, 0
        %v5159 = vsel %vm294, %v5138, 0
        %v5162 = vsel %vm294, %v5139, 0
        %v5165 = vsel %vm294, %v5140, 0
        %v5168 = vsel %vm294, %v5141, 0
        %v5171 = vsel %vm294, %v5142, 0
        %v5174 = vsel %vm294, %v5143, 0
        %v5177 = vsel %vm294, %v5144, 0
        %v5180 = vsel %vm294, %v5145, 0
        %v5183 = vsel %vm294, %v5146, 0
        %v5186 = vsel %vm294, %v5147, 0
        %v5189 = vsel %vm294, %v5148, 0
        %v5192 = vsel %vm294, %v5149, 0
        %v5195 = vsel %vm294, %v5150, 0
        %v5198 = vsel %vm294, %v5151, 0
        %v5201 = vsel %vm343, %v5103, 0
        %5203 = vmatprep.subr.bf16.mxu0 0
        %5204 = vmatpush1.bf16.msra.mxu0 %v5201
        %5205 = vmatprep.subr.bf16.mxu0 0
        %5206 = vmatpush1.bf16.msra.mxu0 0
        %5207 = vmatprep.subr.bf16.mxu0 0
        %5208 = vmatpush1.bf16.msra.mxu0 0
        %5209 = vmatprep.subr.bf16.mxu0 0
        %5210 = vmatpush1.bf16.msra.mxu0 0
        %5211 = vmatprep.subr.bf16.mxu0 0
        %5212 = vmatpush1.bf16.msra.mxu0 0
        %5213 = vmatprep.subr.bf16.mxu0 0
        %5214 = vmatpush1.bf16.msra.mxu0 0
        %5215 = vmatprep.subr.bf16.mxu0 0
        %5216 = vmatpush1.bf16.msra.mxu0 0
        %5217 = vmatprep.subr.bf16.mxu0 0
        %5218 = vmatpush1.bf16.msra.mxu0 0
        %5219 = vmatprep.subr.bf16.mxu0 0
        %5220 = vmatpush1.bf16.msra.mxu0 0
        %5221 = vmatprep.subr.bf16.mxu0 0
        %5222 = vmatpush1.bf16.msra.mxu0 0
        %5223 = vmatprep.subr.bf16.mxu0 0
        %5224 = vmatpush1.bf16.msra.mxu0 0
        %5225 = vmatprep.subr.bf16.mxu0 0
        %5226 = vmatpush1.bf16.msra.mxu0 0
        %5227 = vmatprep.subr.bf16.mxu0 0
        %5228 = vmatpush1.bf16.msra.mxu0 0
        %5229 = vmatprep.subr.bf16.mxu0 0
        %5230 = vmatpush1.bf16.msra.mxu0 0
        %5231 = vmatprep.subr.bf16.mxu0 0
        %5232 = vmatpush1.bf16.msra.mxu0 0
        %5233 = vmatprep.subr.bf16.mxu0 0
        %5234 = vmatpush1.bf16.msra.mxu0 0
        %5235 = vmatprep.mubr.bf16.mxu0 0
        %5236 = vmatmul.mubr.bf16.gmra.mrb[0].mxu0 %v5153
        %v5237 = vpop.f32.mrb[0].mxu0
        %v5238 = vadd.f32 0.0, %v5237
        %v5239 = vpop.f32.mrb[0].mxu0
        %v5240 = vpop.f32.mrb[0].mxu0
        %v5241 = vadd.f32 0.0, %v5240
        %v5242 = vpop.f32.mrb[0].mxu0
        %5243 = vmatprep.mubr.bf16.mxu0 0
        %5244 = vmatmul.mubr.bf16.gmra.mrb[0].mxu0 %v5156
        %v5245 = vpop.f32.mrb[0].mxu0
        %v5246 = vadd.f32 0.0, %v5245
        %v5247 = vpop.f32.mrb[0].mxu0
        %v5248 = vpop.f32.mrb[0].mxu0
        %v5249 = vadd.f32 0.0, %v5248
        %v5250 = vpop.f32.mrb[0].mxu0
        %5251 = vmatprep.mubr.bf16.mxu0 0
        %5252 = vmatmul.mubr.bf16.gmra.mrb[0].mxu0 %v5159
        %v5253 = vpop.f32.mrb[0].mxu0
        %v5254 = vadd.f32 0.0, %v5253
        %v5255 = vpop.f32.mrb[0].mxu0
        %v5256 = vpop.f32.mrb[0].mxu0
        %v5257 = vadd.f32 0.0, %v5256
        %v5258 = vpop.f32.mrb[0].mxu0
        %5259 = vmatprep.mubr.bf16.mxu0 0
        %5260 = vmatmul.mubr.bf16.gmra.mrb[0].mxu0 %v5162
        %v5261 = vpop.f32.mrb[0].mxu0
        %v5262 = vadd.f32 0.0, %v5261
        %v5263 = vpop.f32.mrb[0].mxu0
        %v5264 = vpop.f32.mrb[0].mxu0
        %v5265 = vadd.f32 0.0, %v5264
        %v5266 = vpop.f32.mrb[0].mxu0
        %5267 = vmatprep.mubr.bf16.mxu0 0
        %5268 = vmatmul.mubr.bf16.gmra.mrb[0].mxu0 %v5165
        %v5269 = vpop.f32.mrb[0].mxu0
        %v5270 = vadd.f32 0.0, %v5269
        %v5271 = vpop.f32.mrb[0].mxu0
        %v5272 = vpop.f32.mrb[0].mxu0
        %v5273 = vadd.f32 0.0, %v5272
        %v5274 = vpop.f32.mrb[0].mxu0
        %5275 = vmatprep.mubr.bf16.mxu0 0
        %5276 = vmatmul.mubr.bf16.gmra.mrb[0].mxu0 %v5168
        %v5277 = vpop.f32.mrb[0].mxu0
        %v5278 = vadd.f32 0.0, %v5277
        %v5279 = vpop.f32.mrb[0].mxu0
        %v5280 = vpop.f32.mrb[0].mxu0
        %v5281 = vadd.f32 0.0, %v5280
        %v5282 = vpop.f32.mrb[0].mxu0
        %5283 = vmatprep.mubr.bf16.mxu0 0
        %5284 = vmatmul.mubr.bf16.gmra.mrb[0].mxu0 %v5171
        %v5285 = vpop.f32.mrb[0].mxu0
        %v5286 = vadd.f32 0.0, %v5285
        %v5287 = vpop.f32.mrb[0].mxu0
        %v5288 = vpop.f32.mrb[0].mxu0
        %v5289 = vadd.f32 0.0, %v5288
        %v5290 = vpop.f32.mrb[0].mxu0
        %5291 = vmatprep.mubr.bf16.mxu0 0
        %5292 = vmatmul.mubr.bf16.gmra.mrb[0].mxu0 %v5174
        %v5293 = vpop.f32.mrb[0].mxu0
        %v5294 = vadd.f32 0.0, %v5293
        %v5295 = vpop.f32.mrb[0].mxu0
        %v5296 = vpop.f32.mrb[0].mxu0
        %v5297 = vadd.f32 0.0, %v5296
        %v5298 = vpop.f32.mrb[0].mxu0
        %5299 = vmatprep.mubr.bf16.mxu0 0
        %5300 = vmatmul.mubr.bf16.gmra.mrb[0].mxu0 %v5177
        %v5301 = vpop.f32.mrb[0].mxu0
        %v5302 = vadd.f32 0.0, %v5301
        %v5303 = vpop.f32.mrb[0].mxu0
        %v5304 = vpop.f32.mrb[0].mxu0
        %v5305 = vadd.f32 0.0, %v5304
        %v5306 = vpop.f32.mrb[0].mxu0
        %5307 = vmatprep.mubr.bf16.mxu0 0
        %5308 = vmatmul.mubr.bf16.gmra.mrb[0].mxu0 %v5180
        %v5309 = vpop.f32.mrb[0].mxu0
        %v5310 = vadd.f32 0.0, %v5309
        %v5311 = vpop.f32.mrb[0].mxu0
        %v5312 = vpop.f32.mrb[0].mxu0
        %v5313 = vadd.f32 0.0, %v5312
        %v5314 = vpop.f32.mrb[0].mxu0
        %5315 = vmatprep.mubr.bf16.mxu0 0
        %5316 = vmatmul.mubr.bf16.gmra.mrb[0].mxu0 %v5183
        %v5317 = vpop.f32.mrb[0].mxu0
        %v5318 = vadd.f32 0.0, %v5317
        %v5319 = vpop.f32.mrb[0].mxu0
        %v5320 = vpop.f32.mrb[0].mxu0
        %v5321 = vadd.f32 0.0, %v5320
        %v5322 = vpop.f32.mrb[0].mxu0
        %5323 = vmatprep.mubr.bf16.mxu0 0
        %5324 = vmatmul.mubr.bf16.gmra.mrb[0].mxu0 %v5186
        %v5325 = vpop.f32.mrb[0].mxu0
        %v5326 = vadd.f32 0.0, %v5325
        %v5327 = vpop.f32.mrb[0].mxu0
        %v5328 = vpop.f32.mrb[0].mxu0
        %v5329 = vadd.f32 0.0, %v5328
        %v5330 = vpop.f32.mrb[0].mxu0
        %5331 = vmatprep.mubr.bf16.mxu0 0
        %5332 = vmatmul.mubr.bf16.gmra.mrb[0].mxu0 %v5189
        %v5333 = vpop.f32.mrb[0].mxu0
        %v5334 = vadd.f32 0.0, %v5333
        %v5335 = vpop.f32.mrb[0].mxu0
        %v5336 = vpop.f32.mrb[0].mxu0
        %v5337 = vadd.f32 0.0, %v5336
        %v5338 = vpop.f32.mrb[0].mxu0
        %5339 = vmatprep.mubr.bf16.mxu0 0
        %5340 = vmatmul.mubr.bf16.gmra.mrb[0].mxu0 %v5192
        %v5341 = vpop.f32.mrb[0].mxu0
        %v5342 = vadd.f32 0.0, %v5341
        %v5343 = vpop.f32.mrb[0].mxu0
        %v5344 = vpop.f32.mrb[0].mxu0
        %v5345 = vadd.f32 0.0, %v5344
        %v5346 = vpop.f32.mrb[0].mxu0
        %5347 = vmatprep.mubr.bf16.mxu0 0
        %5348 = vmatmul.mubr.bf16.gmra.mrb[0].mxu0 %v5195
        %v5349 = vpop.f32.mrb[0].mxu0
        %v5350 = vadd.f32 0.0, %v5349
        %v5351 = vpop.f32.mrb[0].mxu0
        %v5352 = vpop.f32.mrb[0].mxu0
        %v5353 = vadd.f32 0.0, %v5352
        %v5354 = vpop.f32.mrb[0].mxu0
        %5355 = vmatprep.mubr.bf16.mxu0 0
        %5356 = vmatmul.mubr.bf16.gmra.mrb[0].mxu0 %v5198
        %v5357 = vpop.f32.mrb[0].mxu0
        %v5358 = vadd.f32 0.0, %v5357
        %v5359 = vpop.f32.mrb[0].mxu0
        %v5360 = vpop.f32.mrb[0].mxu0
        %v5361 = vadd.f32 0.0, %v5360
        %v5362 = vpop.f32.mrb[0].mxu0
        %5363 = vdwg.mxu0
        %v5364 = vld [vmem:[#allocation2] sm:$0xff]
        %v5365 = vld [vmem:[#allocation2 + $0x8] sm:$0xff]
        %v5366 = vld [vmem:[#allocation2 + $0x10] sm:$0xff]
        %v5367 = vld [vmem:[#allocation2 + $0x18] sm:$0xff]
        %v5368 = vld [vmem:[#allocation2 + $0x20] sm:$0xff]
        %v5369 = vld [vmem:[#allocation2 + $0x28] sm:$0xff]
        %v5370 = vld [vmem:[#allocation2 + $0x30] sm:$0xff]
        %v5371 = vld [vmem:[#allocation2 + $0x38] sm:$0xff]
        %v5372 = vld [vmem:[#allocation2 + $0x40] sm:$0xff]
        %v5373 = vld [vmem:[#allocation2 + $0x48] sm:$0xff]
        %v5374 = vld [vmem:[#allocation2 + $0x50] sm:$0xff]
        %v5375 = vld [vmem:[#allocation2 + $0x58] sm:$0xff]
        %v5376 = vld [vmem:[#allocation2 + $0x60] sm:$0xff]
        %v5377 = vld [vmem:[#allocation2 + $0x68] sm:$0xff]
        %v5378 = vld [vmem:[#allocation2 + $0x70] sm:$0xff]
        %v5379 = vld [vmem:[#allocation2 + $0x78] sm:$0xff]
        %v5380 = vld [vmem:[#allocation2 + $0x80] sm:$0xff]
        %v5381 = vld [vmem:[#allocation2 + $0x88] sm:$0xff]
        %v5382 = vld [vmem:[#allocation2 + $0x90] sm:$0xff]
        %v5383 = vld [vmem:[#allocation2 + $0x98] sm:$0xff]
        %v5384 = vld [vmem:[#allocation2 + $0xa0] sm:$0xff]
        %v5385 = vld [vmem:[#allocation2 + $0xa8] sm:$0xff]
        %v5386 = vld [vmem:[#allocation2 + $0xb0] sm:$0xff]
        %v5387 = vld [vmem:[#allocation2 + $0xb8] sm:$0xff]
        %v5388 = vld [vmem:[#allocation2 + $0xc0] sm:$0xff]
        %v5389 = vld [vmem:[#allocation2 + $0xc8] sm:$0xff]
        %v5390 = vld [vmem:[#allocation2 + $0xd0] sm:$0xff]
        %v5391 = vld [vmem:[#allocation2 + $0xd8] sm:$0xff]
        %v5392 = vld [vmem:[#allocation2 + $0xe0] sm:$0xff]
        %v5393 = vld [vmem:[#allocation2 + $0xe8] sm:$0xff]
        %v5394 = vld [vmem:[#allocation2 + $0xf0] sm:$0xff]
        %v5395 = vld [vmem:[#allocation2 + $0xf8] sm:$0xff]
        %v5396 = vadd.f32 %v5364, %v5238
        %v5397 = vadd.f32 %v5365, %v5241
        %v5398 = vadd.f32 %v5366, %v5246
        %v5399 = vadd.f32 %v5367, %v5249
        %v5400 = vadd.f32 %v5368, %v5254
        %v5401 = vadd.f32 %v5369, %v5257
        %v5402 = vadd.f32 %v5370, %v5262
        %v5403 = vadd.f32 %v5371, %v5265
        %v5404 = vadd.f32 %v5372, %v5270
        %v5405 = vadd.f32 %v5373, %v5273
        %v5406 = vadd.f32 %v5374, %v5278
        %v5407 = vadd.f32 %v5375, %v5281
        %v5408 = vadd.f32 %v5376, %v5286
        %v5409 = vadd.f32 %v5377, %v5289
        %v5410 = vadd.f32 %v5378, %v5294
        %v5411 = vadd.f32 %v5379, %v5297
        %v5412 = vadd.f32 %v5380, %v5302
        %v5413 = vadd.f32 %v5381, %v5305
        %v5414 = vadd.f32 %v5382, %v5310
        %v5415 = vadd.f32 %v5383, %v5313
        %v5416 = vadd.f32 %v5384, %v5318
        %v5417 = vadd.f32 %v5385, %v5321
        %v5418 = vadd.f32 %v5386, %v5326
        %v5419 = vadd.f32 %v5387, %v5329
        %v5420 = vadd.f32 %v5388, %v5334
        %v5421 = vadd.f32 %v5389, %v5337
        %v5422 = vadd.f32 %v5390, %v5342
        %v5423 = vadd.f32 %v5391, %v5345
        %v5424 = vadd.f32 %v5392, %v5350
        %v5425 = vadd.f32 %v5393, %v5353
        %v5426 = vadd.f32 %v5394, %v5358
        %v5427 = vadd.f32 %v5395, %v5361
        %5428 = vst [vmem:[#allocation2] sm:$0xff] %v5396
        %5429 = vst [vmem:[#allocation2 + $0x8] sm:$0xff] %v5397
        %5430 = vst [vmem:[#allocation2 + $0x10] sm:$0xff] %v5398
        %5431 = vst [vmem:[#allocation2 + $0x18] sm:$0xff] %v5399
        %5432 = vst [vmem:[#allocation2 + $0x20] sm:$0xff] %v5400
        %5433 = vst [vmem:[#allocation2 + $0x28] sm:$0xff] %v5401
        %5434 = vst [vmem:[#allocation2 + $0x30] sm:$0xff] %v5402
        %5435 = vst [vmem:[#allocation2 + $0x38] sm:$0xff] %v5403
        %5436 = vst [vmem:[#allocation2 + $0x40] sm:$0xff] %v5404
        %5437 = vst [vmem:[#allocation2 + $0x48] sm:$0xff] %v5405
        %5438 = vst [vmem:[#allocation2 + $0x50] sm:$0xff] %v5406
        %5439 = vst [vmem:[#allocation2 + $0x58] sm:$0xff] %v5407
        %5440 = vst [vmem:[#allocation2 + $0x60] sm:$0xff] %v5408
        %5441 = vst [vmem:[#allocation2 + $0x68] sm:$0xff] %v5409
        %5442 = vst [vmem:[#allocation2 + $0x70] sm:$0xff] %v5410
        %5443 = vst [vmem:[#allocation2 + $0x78] sm:$0xff] %v5411
        %5444 = vst [vmem:[#allocation2 + $0x80] sm:$0xff] %v5412
        %5445 = vst [vmem:[#allocation2 + $0x88] sm:$0xff] %v5413
        %5446 = vst [vmem:[#allocation2 + $0x90] sm:$0xff] %v5414
        %5447 = vst [vmem:[#allocation2 + $0x98] sm:$0xff] %v5415
        %5448 = vst [vmem:[#allocation2 + $0xa0] sm:$0xff] %v5416
        %5449 = vst [vmem:[#allocation2 + $0xa8] sm:$0xff] %v5417
        %5450 = vst [vmem:[#allocation2 + $0xb0] sm:$0xff] %v5418
        %5451 = vst [vmem:[#allocation2 + $0xb8] sm:$0xff] %v5419
        %5452 = vst [vmem:[#allocation2 + $0xc0] sm:$0xff] %v5420
        %5453 = vst [vmem:[#allocation2 + $0xc8] sm:$0xff] %v5421
        %5454 = vst [vmem:[#allocation2 + $0xd0] sm:$0xff] %v5422
        %5455 = vst [vmem:[#allocation2 + $0xd8] sm:$0xff] %v5423
        %5456 = vst [vmem:[#allocation2 + $0xe0] sm:$0xff] %v5424
        %5457 = vst [vmem:[#allocation2 + $0xe8] sm:$0xff] %v5425
        %5458 = vst [vmem:[#allocation2 + $0xf0] sm:$0xff] %v5426
        %5459 = vst [vmem:[#allocation2 + $0xf8] sm:$0xff] %v5427
        %v5460 = vld [vmem:[#allocation2] sm:$0xff]
        %v5461 = vld [vmem:[#allocation2 + $0x8] sm:$0xff]
        %v5462 = vld [vmem:[#allocation2 + $0x10] sm:$0xff]
        %v5463 = vld [vmem:[#allocation2 + $0x18] sm:$0xff]
        %v5464 = vld [vmem:[#allocation2 + $0x20] sm:$0xff]
        %v5465 = vld [vmem:[#allocation2 + $0x28] sm:$0xff]
        %v5466 = vld [vmem:[#allocation2 + $0x30] sm:$0xff]
        %v5467 = vld [vmem:[#allocation2 + $0x38] sm:$0xff]
        %v5468 = vld [vmem:[#allocation2 + $0x40] sm:$0xff]
        %v5469 = vld [vmem:[#allocation2 + $0x48] sm:$0xff]
        %v5470 = vld [vmem:[#allocation2 + $0x50] sm:$0xff]
        %v5471 = vld [vmem:[#allocation2 + $0x58] sm:$0xff]
        %v5472 = vld [vmem:[#allocation2 + $0x60] sm:$0xff]
        %v5473 = vld [vmem:[#allocation2 + $0x68] sm:$0xff]
        %v5474 = vld [vmem:[#allocation2 + $0x70] sm:$0xff]
        %v5475 = vld [vmem:[#allocation2 + $0x78] sm:$0xff]
        %v5476 = vld [vmem:[#allocation2 + $0x80] sm:$0xff]
        %v5477 = vld [vmem:[#allocation2 + $0x88] sm:$0xff]
        %v5478 = vld [vmem:[#allocation2 + $0x90] sm:$0xff]
        %v5479 = vld [vmem:[#allocation2 + $0x98] sm:$0xff]
        %v5480 = vld [vmem:[#allocation2 + $0xa0] sm:$0xff]
        %v5481 = vld [vmem:[#allocation2 + $0xa8] sm:$0xff]
        %v5482 = vld [vmem:[#allocation2 + $0xb0] sm:$0xff]
        %v5483 = vld [vmem:[#allocation2 + $0xb8] sm:$0xff]
        %v5484 = vld [vmem:[#allocation2 + $0xc0] sm:$0xff]
        %v5485 = vld [vmem:[#allocation2 + $0xc8] sm:$0xff]
        %v5486 = vld [vmem:[#allocation2 + $0xd0] sm:$0xff]
        %v5487 = vld [vmem:[#allocation2 + $0xd8] sm:$0xff]
        %v5488 = vld [vmem:[#allocation2 + $0xe0] sm:$0xff]
        %v5489 = vld [vmem:[#allocation2 + $0xe8] sm:$0xff]
        %v5490 = vld [vmem:[#allocation2 + $0xf0] sm:$0xff]
        %v5491 = vld [vmem:[#allocation2 + $0xf8] sm:$0xff]
        %v5492 = vpack.c.bf16 %v5461, %v5460
        %v5493 = vpack.c.bf16 %v5463, %v5462
        %v5494 = vpack.c.bf16 %v5465, %v5464
        %v5495 = vpack.c.bf16 %v5467, %v5466
        %v5496 = vpack.c.bf16 %v5469, %v5468
        %v5497 = vpack.c.bf16 %v5471, %v5470
        %v5498 = vpack.c.bf16 %v5473, %v5472
        %v5499 = vpack.c.bf16 %v5475, %v5474
        %v5500 = vpack.c.bf16 %v5477, %v5476
        %v5501 = vpack.c.bf16 %v5479, %v5478
        %v5502 = vpack.c.bf16 %v5481, %v5480
        %v5503 = vpack.c.bf16 %v5483, %v5482
        %v5504 = vpack.c.bf16 %v5485, %v5484
        %v5505 = vpack.c.bf16 %v5487, %v5486
        %v5506 = vpack.c.bf16 %v5489, %v5488
        %v5507 = vpack.c.bf16 %v5491, %v5490
        %v5524 = vunpack.c.l.b16 %v5492
        %v5525 = vunpack.c.h.b16 %v5492
        %v5526 = vunpack.c.l.b16 %v5493
        %v5527 = vunpack.c.h.b16 %v5493
        %v5528 = vunpack.c.l.b16 %v5494
        %v5529 = vunpack.c.h.b16 %v5494
        %v5530 = vunpack.c.l.b16 %v5495
        %v5531 = vunpack.c.h.b16 %v5495
        %v5532 = vunpack.c.l.b16 %v5496
        %v5533 = vunpack.c.h.b16 %v5496
        %v5534 = vunpack.c.l.b16 %v5497
        %v5535 = vunpack.c.h.b16 %v5497
        %v5536 = vunpack.c.l.b16 %v5498
        %v5537 = vunpack.c.h.b16 %v5498
        %v5538 = vunpack.c.l.b16 %v5499
        %v5539 = vunpack.c.h.b16 %v5499
        %v5540 = vunpack.c.l.b16 %v5500
        %v5541 = vunpack.c.h.b16 %v5500
        %v5542 = vunpack.c.l.b16 %v5501
        %v5543 = vunpack.c.h.b16 %v5501
        %v5544 = vunpack.c.l.b16 %v5502
        %v5545 = vunpack.c.h.b16 %v5502
        %v5546 = vunpack.c.l.b16 %v5503
        %v5547 = vunpack.c.h.b16 %v5503
        %v5548 = vunpack.c.l.b16 %v5504
        %v5549 = vunpack.c.h.b16 %v5504
        %v5550 = vunpack.c.l.b16 %v5505
        %v5551 = vunpack.c.h.b16 %v5505
        %v5552 = vunpack.c.l.b16 %v5506
        %v5553 = vunpack.c.h.b16 %v5506
        %v5554 = vunpack.c.l.b16 %v5507
        %v5555 = vunpack.c.h.b16 %v5507
        %v5556 = vpack.c.b16 %v5524, %v5524
        %v5557 = vpack.c.b16 %v5525, %v5525
        %v5558 = vpack.c.b16 %v5526, %v5526
        %v5559 = vpack.c.b16 %v5527, %v5527
        %v5560 = vpack.c.b16 %v5528, %v5528
        %v5561 = vpack.c.b16 %v5529, %v5529
        %v5562 = vpack.c.b16 %v5530, %v5530
        %v5563 = vpack.c.b16 %v5531, %v5531
        %v5564 = vpack.c.b16 %v5532, %v5532
        %v5565 = vpack.c.b16 %v5533, %v5533
        %v5566 = vpack.c.b16 %v5534, %v5534
        %v5567 = vpack.c.b16 %v5535, %v5535
        %v5568 = vpack.c.b16 %v5536, %v5536
        %v5569 = vpack.c.b16 %v5537, %v5537
        %v5570 = vpack.c.b16 %v5538, %v5538
        %v5571 = vpack.c.b16 %v5539, %v5539
        %v5572 = vpack.c.b16 %v5540, %v5540
        %v5573 = vpack.c.b16 %v5541, %v5541
        %v5574 = vpack.c.b16 %v5542, %v5542
        %v5575 = vpack.c.b16 %v5543, %v5543
        %v5576 = vpack.c.b16 %v5544, %v5544
        %v5577 = vpack.c.b16 %v5545, %v5545
        %v5578 = vpack.c.b16 %v5546, %v5546
        %v5579 = vpack.c.b16 %v5547, %v5547
        %v5580 = vpack.c.b16 %v5548, %v5548
        %v5581 = vpack.c.b16 %v5549, %v5549
        %v5582 = vpack.c.b16 %v5550, %v5550
        %v5583 = vpack.c.b16 %v5551, %v5551
        %v5584 = vpack.c.b16 %v5552, %v5552
        %v5585 = vpack.c.b16 %v5553, %v5553
        %v5586 = vpack.c.b16 %v5554, %v5554
        %v5587 = vpack.c.b16 %v5555, %v5555
        %5620 = vst [vmem:[%s167] sm:$0xf] %v5556
        %5621 = vst [vmem:[%s167 + $0x4] sm:$0xf] %v5557
        %5622 = vst [vmem:[%s167 + $0x8] sm:$0xf] %v5558
        %5623 = vst [vmem:[%s167 + $0xc] sm:$0xf] %v5559
        %5624 = vst [vmem:[%s167 + $0x10] sm:$0xf] %v5560
        %5625 = vst [vmem:[%s167 + $0x14] sm:$0xf] %v5561
        %5626 = vst [vmem:[%s167 + $0x18] sm:$0xf] %v5562
        %5627 = vst [vmem:[%s167 + $0x1c] sm:$0xf] %v5563
        %5628 = vst [vmem:[%s167 + $0x20] sm:$0xf] %v5564
        %5629 = vst [vmem:[%s167 + $0x24] sm:$0xf] %v5565
        %5630 = vst [vmem:[%s167 + $0x28] sm:$0xf] %v5566
        %5631 = vst [vmem:[%s167 + $0x2c] sm:$0xf] %v5567
        %5632 = vst [vmem:[%s167 + $0x30] sm:$0xf] %v5568
        %5633 = vst [vmem:[%s167 + $0x34] sm:$0xf] %v5569
        %5634 = vst [vmem:[%s167 + $0x38] sm:$0xf] %v5570
        %5635 = vst [vmem:[%s167 + $0x3c] sm:$0xf] %v5571
        %5636 = vst [vmem:[%s167 + $0x40] sm:$0xf] %v5572
        %5637 = vst [vmem:[%s167 + $0x44] sm:$0xf] %v5573
        %5638 = vst [vmem:[%s167 + $0x48] sm:$0xf] %v5574
        %5639 = vst [vmem:[%s167 + $0x4c] sm:$0xf] %v5575
        %5640 = vst [vmem:[%s167 + $0x50] sm:$0xf] %v5576
        %5641 = vst [vmem:[%s167 + $0x54] sm:$0xf] %v5577
        %5642 = vst [vmem:[%s167 + $0x58] sm:$0xf] %v5578
        %5643 = vst [vmem:[%s167 + $0x5c] sm:$0xf] %v5579
        %5644 = vst [vmem:[%s167 + $0x60] sm:$0xf] %v5580
        %5645 = vst [vmem:[%s167 + $0x64] sm:$0xf] %v5581
        %5646 = vst [vmem:[%s167 + $0x68] sm:$0xf] %v5582
        %5647 = vst [vmem:[%s167 + $0x6c] sm:$0xf] %v5583
        %5648 = vst [vmem:[%s167 + $0x70] sm:$0xf] %v5584
        %5649 = vst [vmem:[%s167 + $0x74] sm:$0xf] %v5585
        %5650 = vst [vmem:[%s167 + $0x78] sm:$0xf] %v5586
        %5651 = vst [vmem:[%s167 + $0x7c] sm:$0xf] %v5587
        %v5652 = vadd.f32 %v5460, %v5461
        %v5653 = vadd.f32 %v5652, %v5462
        %v5654 = vadd.f32 %v5653, %v5463
        %v5655 = vadd.f32 %v5654, %v5464
        %v5656 = vadd.f32 %v5655, %v5465
        %v5657 = vadd.f32 %v5656, %v5466
        %v5658 = vadd.f32 %v5657, %v5467
        %v5659 = vadd.f32 %v5658, %v5468
        %v5660 = vadd.f32 %v5659, %v5469
        %v5661 = vadd.f32 %v5660, %v5470
        %v5662 = vadd.f32 %v5661, %v5471
        %v5663 = vadd.f32 %v5662, %v5472
        %v5664 = vadd.f32 %v5663, %v5473
        %v5665 = vadd.f32 %v5664, %v5474
        %v5666 = vadd.f32 %v5665, %v5475
        %v5667 = vadd.f32 %v5666, %v5476
        %v5668 = vadd.f32 %v5667, %v5477
        %v5669 = vadd.f32 %v5668, %v5478
        %v5670 = vadd.f32 %v5669, %v5479
        %v5671 = vadd.f32 %v5670, %v5480
        %v5672 = vadd.f32 %v5671, %v5481
        %v5673 = vadd.f32 %v5672, %v5482
        %v5674 = vadd.f32 %v5673, %v5483
        %v5675 = vadd.f32 %v5674, %v5484
        %v5676 = vadd.f32 %v5675, %v5485
        %v5677 = vadd.f32 %v5676, %v5486
        %v5678 = vadd.f32 %v5677, %v5487
        %v5679 = vadd.f32 %v5678, %v5488
        %v5680 = vadd.f32 %v5679, %v5489
        %v5681 = vadd.f32 %v5680, %v5490
        %v5682 = vadd.f32 %v5681, %v5491
        %v5683 = vrot.slane %v5682, 4
        %v5684 = vadd.f32 %v5682, %v5683
        %v5685 = vrot.slane %v5684, 2
        %v5686 = vadd.f32 %v5684, %v5685
        %v5687 = vrot.slane %v5686, 1
        %v5688 = vadd.f32 %v5686, %v5687
        %5689 = vst [vmem:[%s174] sm:$0x1] %v5688
        %v5690 = vmul.f32 %v5460, %v5460
        %v5691 = vmul.f32 %v5461, %v5461
        %v5692 = vmul.f32 %v5462, %v5462
        %v5693 = vmul.f32 %v5463, %v5463
        %v5694 = vmul.f32 %v5464, %v5464
        %v5695 = vmul.f32 %v5465, %v5465
        %v5696 = vmul.f32 %v5466, %v5466
        %v5697 = vmul.f32 %v5467, %v5467
        %v5698 = vmul.f32 %v5468, %v5468
        %v5699 = vmul.f32 %v5469, %v5469
        %v5700 = vmul.f32 %v5470, %v5470
        %v5701 = vmul.f32 %v5471, %v5471
        %v5702 = vmul.f32 %v5472, %v5472
        %v5703 = vmul.f32 %v5473, %v5473
        %v5704 = vmul.f32 %v5474, %v5474
        %v5705 = vmul.f32 %v5475, %v5475
        %v5706 = vmul.f32 %v5476, %v5476
        %v5707 = vmul.f32 %v5477, %v5477
        %v5708 = vmul.f32 %v5478, %v5478
        %v5709 = vmul.f32 %v5479, %v5479
        %v5710 = vmul.f32 %v5480, %v5480
        %v5711 = vmul.f32 %v5481, %v5481
        %v5712 = vmul.f32 %v5482, %v5482
        %v5713 = vmul.f32 %v5483, %v5483
        %v5714 = vmul.f32 %v5484, %v5484
        %v5715 = vmul.f32 %v5485, %v5485
        %v5716 = vmul.f32 %v5486, %v5486
        %v5717 = vmul.f32 %v5487, %v5487
        %v5718 = vmul.f32 %v5488, %v5488
        %v5719 = vmul.f32 %v5489, %v5489
        %v5720 = vmul.f32 %v5490, %v5490
        %v5721 = vmul.f32 %v5491, %v5491
        %v5722 = vadd.f32 %v5690, %v5691
        %v5723 = vadd.f32 %v5722, %v5692
        %v5724 = vadd.f32 %v5723, %v5693
        %v5725 = vadd.f32 %v5724, %v5694
        %v5726 = vadd.f32 %v5725, %v5695
        %v5727 = vadd.f32 %v5726, %v5696
        %v5728 = vadd.f32 %v5727, %v5697
        %v5729 = vadd.f32 %v5728, %v5698
        %v5730 = vadd.f32 %v5729, %v5699
        %v5731 = vadd.f32 %v5730, %v5700
        %v5732 = vadd.f32 %v5731, %v5701
        %v5733 = vadd.f32 %v5732, %v5702
        %v5734 = vadd.f32 %v5733, %v5703
        %v5735 = vadd.f32 %v5734, %v5704
        %v5736 = vadd.f32 %v5735, %v5705
        %v5737 = vadd.f32 %v5736, %v5706
        %v5738 = vadd.f32 %v5737, %v5707
        %v5739 = vadd.f32 %v5738, %v5708
        %v5740 = vadd.f32 %v5739, %v5709
        %v5741 = vadd.f32 %v5740, %v5710
        %v5742 = vadd.f32 %v5741, %v5711
        %v5743 = vadd.f32 %v5742, %v5712
        %v5744 = vadd.f32 %v5743, %v5713
        %v5745 = vadd.f32 %v5744, %v5714
        %v5746 = vadd.f32 %v5745, %v5715
        %v5747 = vadd.f32 %v5746, %v5716
        %v5748 = vadd.f32 %v5747, %v5717
        %v5749 = vadd.f32 %v5748, %v5718
        %v5750 = vadd.f32 %v5749, %v5719
        %v5751 = vadd.f32 %v5750, %v5720
        %v5752 = vadd.f32 %v5751, %v5721
        %v5753 = vrot.slane %v5752, 4
        %v5754 = vadd.f32 %v5752, %v5753
        %v5755 = vrot.slane %v5754, 2
        %v5756 = vadd.f32 %v5754, %v5755
        %v5757 = vrot.slane %v5756, 1
        %v5758 = vadd.f32 %v5756, %v5757
        %5759 = vst [vmem:[%s174 + $0x1] sm:$0x1] %v5758
        %s5760 = sand.u32 %s76, 1
        %s5761 = scalar_lea.sflag [#allocation4], %s5760
        %s5762 = sand.u32 %s76, 1
        %s5763 = smul.addr %s5762, 128
        %s5764 = scalar_lea.vmem [#allocation3], %s5763
        %s5765 = sand.u32 %s102, 1
        %s5766 = scalar_lea.sflag [#allocation6], %s5765
        %s5767 = sand.u32 %s102, 1
        %s5768 = smul.addr %s5767, 8
        %s5769 = scalar_lea.vmem [#allocation5], %s5768
        // Predicated region
        $region29: #{tpu_custom_call.1} parent=27 // pred_check
          %p5770 = pneg %p86
        $region30: #{tpu_custom_call.1} parent=27 // pred_check_branch
          %5772 = sbr.rel (%p5770) target = $region32
        $region31: #{tpu_custom_call.1} parent=27 // pred_region
          %s5774 = ssub.s32 2048, 2048
          %5775 = vsyncadd %s5761, %s5774
          %s5776 = smul.addr %s21, 32
          %s5777 = smul.addr %s5776, 64
          %s5778 = scalar_lea.hbm %s2, %s5777
          %s5779 = sshll.u32 %s5764, 4
          %s5780 = int_to_ptr.vmem [resolvable:$true] %s5779
          %5785 = dma.vmem_to_hbm [thread:$0]  %s5780, 2048, %s5778, %s5761, 64, 64, 4
        $region32: #{tpu_custom_call.1} parent=27 // pred_fallthru
          _
        // Predicated region
        $region33: #{tpu_custom_call.1} parent=27 // pred_check
          %p5786 = pneg %p112
        $region34: #{tpu_custom_call.1} parent=27 // pred_check_branch
          %5788 = sbr.rel (%p5786) target = $region36
        $region35: #{tpu_custom_call.1} parent=27 // pred_region
          %s5790 = ssub.s32 128, 128
          %5791 = vsyncadd %s5766, %s5790
          %s5792 = smul.addr %s21, 128
          %s5793 = scalar_lea.hbm %s3, %s5792
          %s5795 = sshll.u32 %s5769, 4
          %s5796 = int_to_ptr.vmem [resolvable:$true] %s5795
          %5798 = dma.vmem_to_hbm [thread:$0]  %s5796, 128, %s5793, %s5766
        $region36: #{tpu_custom_call.1} parent=27 // pred_fallthru
          _
      $region28: #{tpu_custom_call.1} parent=5 // pred_fallthru
        _
      %p5799 = scmp.le.s32.totalorder 2, %s16
      // Predicated region
      $region37: #{tpu_custom_call.1} parent=5 // pred_check
        %p5800 = pneg %p5799
      $region38: #{tpu_custom_call.1} parent=5 // pred_check_branch
        %5802 = sbr.rel (%p5800) target = $region40
      $region39: #{tpu_custom_call.1} parent=5 // pred_region
        %s5803 = ssub.s32 %s16, 2
        // Predicated region
        $region41: #{tpu_custom_call.1} parent=39 // pred_check
          %p5804 = pneg %p92
        $region42: #{tpu_custom_call.1} parent=39 // pred_check_branch
          %5806 = sbr.rel (%p5804) target = $region44
        $region43: #{tpu_custom_call.1} parent=39 // pred_region
          %s5807 = sand.u32 %s77, 1
          %s5808 = scalar_lea.sflag [#allocation4], %s5807
          %s5809 = sand.u32 %s77, 1
          %s5810 = smul.addr %s5809, 128
          %s5811 = scalar_lea.vmem [#allocation3], %s5810
          %5812 = dma.done %s5808, 2048
        $region44: #{tpu_custom_call.1} parent=39 // pred_fallthru
          _
        // Predicated region
        $region45: #{tpu_custom_call.1} parent=39 // pred_check
          %p5813 = pneg %p118
        $region46: #{tpu_custom_call.1} parent=39 // pred_check_branch
          %5815 = sbr.rel (%p5813) target = $region48
        $region47: #{tpu_custom_call.1} parent=39 // pred_region
          %s5816 = sand.u32 %s103, 1
          %s5817 = scalar_lea.sflag [#allocation6], %s5816
          %s5818 = sand.u32 %s103, 1
          %s5819 = smul.addr %s5818, 8
          %s5820 = scalar_lea.vmem [#allocation5], %s5819
          %5821 = dma.done %s5817, 128
        $region48: #{tpu_custom_call.1} parent=39 // pred_fallthru
          _
      $region40: #{tpu_custom_call.1} parent=5 // pred_fallthru
        _
    $region6: #{tpu_custom_call.1} parent=1 // loop_footer
      %s20 = sadd.s32 1, %s16
    $region7: #{tpu_custom_call.1} parent=1 // loop_footer_branch
      %15 = sbr.rel target = $region3
    $region8: #{tpu_custom_call.1} parent=1 // loop_exit
      _
    %5822 = vsyncpa [#allocation4], 1
    %s5823 = scalar_lea.sflag [#allocation4], 1
    %5824 = vsyncpa %s5823, 1
    %5825 = vsyncpa [#allocation6], 1
    %s5826 = scalar_lea.sflag [#allocation6], 1
    %5827 = vsyncpa %s5826, 1

</llo_original>
